<compile_context>
chip_gen: v7x
topology: tpu7x:2x2x1
jax: 0.10.0
libtpu: 0.0.40
codegen_flags: <defaults>
</compile_context>

<pallas_src>
import functools
import math

import jax
import jax.numpy as jnp
from jax import lax
from jax.experimental import pallas as pl
from jax.experimental.pallas import tpu as pltpu


_MXU_DTYPE = jnp.bfloat16    # MXU operand dtype; accumulation stays float32.


# ----------------------------- Pallas kernel --------------------------------

def _fused_matmul_kernel(*refs, pre_affine, pre_relu, post_affine, post_relu,
                         has_bias):
    """y = postact( (preact(x*s1+t1)) @ W + b ) * s2 + t2; stages optional."""
    idx = 0
    x_ref = refs[idx]; idx += 1
    if pre_affine:
        s1_ref, t1_ref = refs[idx], refs[idx + 1]; idx += 2
    w_ref = refs[idx]; idx += 1
    if has_bias:
        b_ref = refs[idx]; idx += 1
    if post_affine:
        s2_ref, t2_ref = refs[idx], refs[idx + 1]; idx += 2
    o_ref = refs[idx]

    h = x_ref[...]
    if pre_affine:                       # folded BatchNorm (inference)
        h = h * s1_ref[...] + t1_ref[...]
    if pre_relu:
        h = jnp.maximum(h, 0.0)
    y = jnp.dot(h.astype(_MXU_DTYPE), w_ref[...].astype(_MXU_DTYPE),
                preferred_element_type=jnp.float32)
    if has_bias:
        y = y + b_ref[...]
    if post_affine:
        y = y * s2_ref[...] + t2_ref[...]
    if post_relu:
        y = jnp.maximum(y, 0.0)
    o_ref[...] = y.astype(o_ref.dtype)


# ----------------------------- kernel wrapper --------------------------------

def _round_up(x, m):
    return ((x + m - 1) // m) * m


def fused_matmul(x2d, w, *, b=None, pre=None, post=None,
                 pre_relu=False, post_relu=False):
    """Single pallas_call: optional BN-affine/ReLU -> matmul (+bias) ->
    optional BN-affine/ReLU epilogue."""
    m, k = x2d.shape
    n = w.shape[1]

    # 8-aligned row tiles, <=256 rows: the 512-row stem gets 2 parallel
    # blocks; everything fits comfortably in VMEM (no vmem_limit override).
    tm = min(256, _round_up(m, 8))
    mp = _round_up(m, tm)
    if mp != m:
        x2d = jnp.pad(x2d, ((0, mp - m), (0, 0)))

    inputs = [x2d]
    in_specs = [pl.BlockSpec((tm, k), lambda i: (i, 0))]
    if pre is not None:
        inputs += [pre[0].reshape(1, k), pre[1].reshape(1, k)]
        in_specs += [pl.BlockSpec((1, k), lambda i: (0, 0)),
                     pl.BlockSpec((1, k), lambda i: (0, 0))]
    inputs.append(w)
    in_specs.append(pl.BlockSpec((k, n), lambda i: (0, 0)))
    if b is not None:
        inputs.append(b.reshape(1, n))
        in_specs.append(pl.BlockSpec((1, n), lambda i: (0, 0)))
    if post is not None:
        inputs += [post[0].reshape(1, n), post[1].reshape(1, n)]
        in_specs += [pl.BlockSpec((1, n), lambda i: (0, 0)),
                     pl.BlockSpec((1, n), lambda i: (0, 0))]

    kernel = functools.partial(
        _fused_matmul_kernel,
        pre_affine=pre is not None, pre_relu=pre_relu,
        post_affine=post is not None, post_relu=post_relu,
        has_bias=b is not None)

    out = pl.pallas_call(
        kernel,
        out_shape=jax.ShapeDtypeStruct((mp, n), jnp.float32),
        grid_spec=pltpu.PrefetchScalarGridSpec(
            num_scalar_prefetch=0,
            grid=(mp // tm,),
            in_specs=in_specs,
            out_specs=pl.BlockSpec((tm, n), lambda i: (i, 0)),
        ),
        compiler_params=pltpu.CompilerParams(
            dimension_semantics=("parallel",)),
    )(*inputs)
    return out[:m]


# ------------------------------ conv / pooling glue -------------------------

def _im2col(x_nhwc, k, dilation, stride, pad):
    """Gather the k*k dilated taps into one (M, T_kept*Cin) matrix.

    Taps that read only zero padding are statically dropped (their
    contribution to the convolution is exactly zero)."""
    n, h, w, cin = x_nhwc.shape
    ho = (h + 2 * pad - dilation * (k - 1) - 1) // stride + 1
    wo = (w + 2 * pad - dilation * (k - 1) - 1) // stride + 1
    xp = jnp.pad(x_nhwc, ((0, 0), (pad, pad), (pad, pad), (0, 0)))
    cols, kept = [], []
    for kh in range(k):
        r0 = kh * dilation - pad                    # first original row read
        r1 = r0 + stride * (ho - 1)                 # last original row read
        if r1 < 0 or r0 > h - 1:
            continue                                # all rows in padding
        for kw in range(k):
            c0 = kw * dilation - pad
            c1 = c0 + stride * (wo - 1)
            if c1 < 0 or c0 > w - 1:
                continue                            # all cols in padding
            sh, sw = kh * dilation, kw * dilation
            tap = xp[:, sh:sh + stride * (ho - 1) + 1:stride,
                        sw:sw + stride * (wo - 1) + 1:stride, :]
            cols.append(tap.reshape(n * ho * wo, cin))
            kept.append(kh * k + kw)
    return jnp.concatenate(cols, axis=-1), kept, ho, wo


def conv_kxk(x_nhwc, w_taps, b, k, dilation, stride, pad, *,
             post=None, post_relu=False):
    """kxk conv (PyTorch cross-correlation) as ONE fused im2col matmul."""
    n, _, _, cin = x_nhwc.shape
    patches, kept, ho, wo = _im2col(x_nhwc, k, dilation, stride, pad)
    cout = w_taps.shape[-1]
    w2d = w_taps[jnp.asarray(kept)].reshape(len(kept) * cin, cout)
    out = fused_matmul(patches, w2d, b=b, post=post, post_relu=post_relu)
    return out.reshape(n, ho, wo, cout)


def max_pool_3x3_s2_p1(x):
    return lax.reduce_window(x, -jnp.inf, lax.max,
                             (1, 3, 3, 1), (1, 2, 2, 1),
                             [(0, 0), (1, 1), (1, 1), (0, 0)])


def avg_pool_2x2(x):
    s = lax.reduce_window(x, 0.0, lax.add,
                          (1, 2, 2, 1), (1, 2, 2, 1), 'VALID')
    return s / 4.0


# ------------------------------ parameters ----------------------------------

def _bn_affine(c, eps=1e-5):
    gamma = jnp.ones((c,), jnp.float32)
    beta = jnp.zeros((c,), jnp.float32)
    mean = jnp.zeros((c,), jnp.float32)
    var = jnp.ones((c,), jnp.float32)
    scale = gamma / jnp.sqrt(var + eps)
    shift = beta - mean * scale
    return scale, shift


def _conv1x1(key, cin, cout, bias):
    kw, kb = jax.random.split(key)
    bound = math.sqrt(6.0 / cin)                      # kaiming_uniform
    w = jax.random.uniform(kw, (cin, cout), jnp.float32, -bound, bound)
    if bias:
        bb = 1.0 / math.sqrt(cin)
        b = jax.random.uniform(kb, (cout,), jnp.float32, -bb, bb)
    else:
        b = jnp.zeros((cout,), jnp.float32)
    return w, b


def _conv_kxk_taps(key, cin, cout, k, bias):
    kw, kb = jax.random.split(key)
    fan_in = cin * k * k
    bound = math.sqrt(6.0 / fan_in)                   # kaiming_uniform
    w4 = jax.random.uniform(kw, (cout, cin, k, k), jnp.float32, -bound, bound)
    w_taps = jnp.transpose(w4, (2, 3, 1, 0)).reshape(k * k, cin, cout)
    if bias:
        bb = 1.0 / math.sqrt(fan_in)
        b = jax.random.uniform(kb, (cout,), jnp.float32, -bb, bb)
    else:
        b = jnp.zeros((cout,), jnp.float32)
    return w_taps, b


def init_params(key, cfg, n_class):
    bn_size = cfg['bn_size']
    growth = cfg['growth_rate']
    num_init = cfg['num_init_features']
    block_config = cfg['block_config']
    d0 = cfg['d_feature0']
    d1 = cfg['d_feature1']

    keys = iter(jax.random.split(key, 128))
    p = {}
    p['conv0'] = _conv_kxk_taps(next(keys), 3, num_init, 7, bias=False)
    p['norm0'] = _bn_affine(num_init)

    def dense_block(num_layers, cin):
        layers = []
        for i in range(num_layers):
            c = cin + i * growth
            layers.append(dict(
                bn1=_bn_affine(c),
                conv1=_conv1x1(next(keys), c, bn_size * growth, bias=False),
                bn2=_bn_affine(bn_size * growth),
                conv2=_conv_kxk_taps(next(keys), bn_size * growth, growth, 3,
                                     bias=False),
            ))
        return layers

    num_features = num_init
    for bi in range(4):
        p['block%d' % (bi + 1)] = dense_block(block_config[bi], num_features)
        num_features += block_config[bi] * growth
        p['trans%d' % (bi + 1)] = dict(
            bn=_bn_affine(num_features),
            conv=_conv1x1(next(keys), num_features, num_features // 2,
                          bias=False))
        num_features //= 2
    p['norm5'] = _bn_affine(num_features)

    aspp_in = num_features
    for name in ('aspp3', 'aspp6', 'aspp12', 'aspp18', 'aspp24'):
        p[name] = dict(
            bn1=_bn_affine(aspp_in),
            conv1=_conv1x1(next(keys), aspp_in, d0, bias=True),
            bn2=_bn_affine(d0),
            conv2=_conv_kxk_taps(next(keys), d0, d1, 3, bias=True),
        )
        aspp_in += d1

    p['cls'] = _conv1x1(next(keys), num_features + 5 * d1, n_class, bias=True)
    return p


# ------------------------------ forward pass --------------------------------

def forward(params, x_nchw):
    """DenseASPP forward (output_stride=8, inference mode). NCHW in/out."""
    x = jnp.transpose(x_nchw.astype(jnp.float32), (0, 2, 3, 1))   # -> NHWC

    # stem: conv0 7x7 s2 p3 (+ fused norm0 + relu0) -> maxpool 3x3 s2 p1
    w0, _ = params['conv0']
    x = conv_kxk(x, w0, None, k=7, dilation=1, stride=2, pad=3,
                 post=params['norm0'], post_relu=True)
    x = max_pool_3x3_s2_p1(x)

    def dense_layer(x, lp, dil):
        nb, hh, ww, cin = x.shape
        s1, t1 = lp['bn1']
        w1, _ = lp['conv1']
        s2, t2 = lp['bn2']
        # bn1 -> relu -> 1x1 conv -> bn2 -> relu : one fused kernel
        h = fused_matmul(x.reshape(-1, cin), w1,
                         pre=(s1, t1), pre_relu=True,
                         post=(s2, t2), post_relu=True)
        h = h.reshape(nb, hh, ww, w1.shape[1])
        w2, _ = lp['conv2']
        new = conv_kxk(h, w2, None, k=3, dilation=dil, stride=1, pad=dil)
        return jnp.concatenate([x, new], axis=-1)

    def transition(x, tp, pool, post=None):
        nb, hh, ww, cin = x.shape
        st, tt = tp['bn']
        wt, _ = tp['conv']
        h = fused_matmul(x.reshape(-1, cin), wt,
                         pre=(st, tt), pre_relu=True,
                         post=post, post_relu=False)
        h = h.reshape(nb, hh, ww, wt.shape[1])
        if pool:
            h = avg_pool_2x2(h)
        return h

    # output_stride=8 -> feature_size=1: block dilations (1,1,2,4),
    # only transition1 pools.
    for lp in params['block1']:
        x = dense_layer(x, lp, 1)
    x = transition(x, params['trans1'], pool=True)
    for lp in params['block2']:
        x = dense_layer(x, lp, 1)
    x = transition(x, params['trans2'], pool=False)
    for lp in params['block3']:
        x = dense_layer(x, lp, 2)
    x = transition(x, params['trans3'], pool=False)
    for lp in params['block4']:
        x = dense_layer(x, lp, 4)
    # transition4 with norm5 folded into its epilogue (no ReLU after norm5)
    feature = transition(x, params['trans4'], pool=False,
                         post=params['norm5'])

    def aspp_block(feature, ap, dil, bn_start):
        nb, hh, ww, cin = feature.shape
        w1, b1 = ap['conv1']
        s2, t2 = ap['bn2']
        pre = ap['bn1'] if bn_start else None
        # (bn1) -> relu -> 1x1 conv (+bias) -> bn2 -> relu : one fused kernel
        h = fused_matmul(feature.reshape(-1, cin), w1, b=b1,
                         pre=pre, pre_relu=True,
                         post=(s2, t2), post_relu=True)
        h = h.reshape(nb, hh, ww, w1.shape[1])
        w2, b2 = ap['conv2']
        # F.dropout2d(p=dropout0) is identity in inference / p=0
        return conv_kxk(h, w2, b2, k=3, dilation=dil, stride=1, pad=dil)

    for name, bn_start, dil in (('aspp3', False, 3), ('aspp6', True, 6),
                                ('aspp12', True, 12), ('aspp18', True, 18),
                                ('aspp24', True, 24)):
        out = aspp_block(feature, params[name], dil, bn_start)
        feature = jnp.concatenate([out, feature], axis=-1)

    nb, hh, ww, cin = feature.shape
    wc, bc = params['cls']
    # classifier: no-affine path (Dropout2d identity, 1x1 conv + bias)
    cls = fused_matmul(feature.reshape(-1, cin), wc, b=bc)
    cls = cls.reshape(nb, hh, ww, wc.shape[1])
    # nn.Upsample(scale_factor=8, mode='bilinear') (align_corners=False)
    cls = jax.image.resize(cls, (nb, hh * 8, ww * 8, wc.shape[1]),
                           method='bilinear')
    return jnp.transpose(cls, (0, 3, 1, 2))                       # -> NCHW


# ---------------------------------- main -------------------------------------

if __name__ == "__main__":
    model_cfg = dict(bn_size=2, drop_rate=0.0, growth_rate=4,
                     num_init_features=8, block_config=(2, 2, 2, 2),
                     dropout0=0.0, dropout1=0.0,
                     d_feature0=16, d_feature1=8)
    n_class = 8

    key = jax.random.PRNGKey(0)
    pkey, xkey = jax.random.split(key)
    params = init_params(pkey, model_cfg, n_class)

    x = jax.random.normal(xkey, (2, 3, 32, 32), jnp.float32)   # NCHW input

    fwd = jax.jit(forward)
    out = fwd(params, x)
    out = jax.block_until_ready(out)

    assert out.shape == (2, n_class, 32, 32), out.shape
    assert bool(jnp.all(jnp.isfinite(out)))
    print("KERNEL_OK")
</pallas_src>

<mosaic_0001>
module attributes {stable_mosaic.version = 11 : i64} {
  func.func @_fused_matmul_kernel(%arg0: i32, %arg1: memref<256x147xf32, #tpu.memory_space<vmem>>, %arg2: memref<147x8xf32, #tpu.memory_space<vmem>>, %arg3: memref<1x8xf32, #tpu.memory_space<vmem>>, %arg4: memref<1x8xf32, #tpu.memory_space<vmem>>, %arg5: memref<256x8xf32, #tpu.memory_space<vmem>>) attributes {dimension_semantics = [#tpu.dimension_semantics<parallel>], iteration_bounds = array<i64: 2>, scalar_prefetch = 0 : i64, scratch_operands = 0 : i64, tpu.core_type = #tpu.core_type<tc>, window_params = [{transform_indices = @transform_0, window_bounds = array<i64: 256, 147>}, {pipeline_mode = #tpu.pipeline_mode<synchronous>, transform_indices = @transform_1, window_bounds = array<i64: 147, 8>}, {pipeline_mode = #tpu.pipeline_mode<synchronous>, transform_indices = @transform_2, window_bounds = array<i64: 1, 8>}, {pipeline_mode = #tpu.pipeline_mode<synchronous>, transform_indices = @transform_3, window_bounds = array<i64: 1, 8>}, {transform_indices = @transform_4, window_bounds = array<i64: 256, 8>}]} {
    %c0 = arith.constant 0 : index
    %c0_0 = arith.constant 0 : index
    %0 = vector.load %arg1[%c0, %c0_0] : memref<256x147xf32, #tpu.memory_space<vmem>>, vector<256x147xf32>
    %1 = arith.truncf %0 : vector<256x147xf32> to vector<256x147xbf16>
    %c0_1 = arith.constant 0 : index
    %c0_2 = arith.constant 0 : index
    %2 = vector.load %arg2[%c0_1, %c0_2] : memref<147x8xf32, #tpu.memory_space<vmem>>, vector<147x8xf32>
    %3 = arith.truncf %2 : vector<147x8xf32> to vector<147x8xbf16>
    %cst = arith.constant dense<0.000000e+00> : vector<256x8xf32>
    %4 = tpu.matmul %1, %3, %cst {dimension_numbers = #tpu.dot_dimension_numbers<[1], [0], [0], [1], [0, 0, 1, 1], [], []>} : vector<256x147xbf16>, vector<147x8xbf16>, vector<256x8xf32> -> vector<256x8xf32>
    %c0_3 = arith.constant 0 : index
    %c0_4 = arith.constant 0 : index
    %5 = vector.load %arg3[%c0_3, %c0_4] : memref<1x8xf32, #tpu.memory_space<vmem>>, vector<1x8xf32>
    %6 = vector.broadcast %5 : vector<1x8xf32> to vector<256x8xf32>
    %7 = arith.mulf %4, %6 : vector<256x8xf32>
    %c0_5 = arith.constant 0 : index
    %c0_6 = arith.constant 0 : index
    %8 = vector.load %arg4[%c0_5, %c0_6] : memref<1x8xf32, #tpu.memory_space<vmem>>, vector<1x8xf32>
    %9 = vector.broadcast %8 : vector<1x8xf32> to vector<256x8xf32>
    %10 = arith.addf %7, %9 : vector<256x8xf32>
    %cst_7 = arith.constant 0.000000e+00 : f32
    %11 = vector.broadcast %cst_7 : f32 to vector<256x8xf32>
    %12 = arith.maximumf %10, %11 : vector<256x8xf32>
    %c0_8 = arith.constant 0 : index
    %c0_9 = arith.constant 0 : index
    %13 = vector.load %arg5[%c0_8, %c0_9] : memref<256x8xf32, #tpu.memory_space<vmem>>, vector<256x8xf32>
    tpu.vector_store %arg5[%c0_8, %c0_9], %12 {strides = array<i32>} : memref<256x8xf32, #tpu.memory_space<vmem>>, vector<256x8xf32>,
    return
  }
  func.func @transform_0(%arg0: i32) -> (i32, i32) {
    %c0_i32 = arith.constant 0 : i32
    %c0_i32_0 = arith.constant 0 : i32
    return %arg0, %c0_i32 : i32, i32
  }
  func.func @transform_1(%arg0: i32) -> (i32, i32) {
    %c0_i32 = arith.constant 0 : i32
    %c0_i32_0 = arith.constant 0 : i32
    %c0_i32_1 = arith.constant 0 : i32
    return %c0_i32, %c0_i32_0 : i32, i32
  }
  func.func @transform_2(%arg0: i32) -> (i32, i32) {
    %c0_i32 = arith.constant 0 : i32
    %c0_i32_0 = arith.constant 0 : i32
    %c0_i32_1 = arith.constant 0 : i32
    return %c0_i32, %c0_i32_0 : i32, i32
  }
  func.func @transform_3(%arg0: i32) -> (i32, i32) {
    %c0_i32 = arith.constant 0 : i32
    %c0_i32_0 = arith.constant 0 : i32
    %c0_i32_1 = arith.constant 0 : i32
    return %c0_i32, %c0_i32_0 : i32, i32
  }
  func.func @transform_4(%arg0: i32) -> (i32, i32) {
    %c0_i32 = arith.constant 0 : i32
    %c0_i32_0 = arith.constant 0 : i32
    return %arg0, %c0_i32 : i32, i32
  }
}

module attributes {stable_mosaic.version = 11 : i64} {
  func.func @_fused_matmul_kernel(%arg0: i32, %arg1: memref<128x8xf32, #tpu.memory_space<vmem>>, %arg2: memref<1x8xf32, #tpu.memory_space<vmem>>, %arg3: memref<1x8xf32, #tpu.memory_space<vmem>>, %arg4: memref<8x8xf32, #tpu.memory_space<vmem>>, %arg5: memref<1x8xf32, #tpu.memory_space<vmem>>, %arg6: memref<1x8xf32, #tpu.memory_space<vmem>>, %arg7: memref<128x8xf32, #tpu.memory_space<vmem>>) attributes {dimension_semantics = [#tpu.dimension_semantics<parallel>], iteration_bounds = array<i64: 1>, scalar_prefetch = 0 : i64, scratch_operands = 0 : i64, tpu.core_type = #tpu.core_type<tc>, window_params = [{transform_indices = @transform_0, window_bounds = array<i64: 128, 8>}, {pipeline_mode = #tpu.pipeline_mode<synchronous>, transform_indices = @transform_1, window_bounds = array<i64: 1, 8>}, {pipeline_mode = #tpu.pipeline_mode<synchronous>, transform_indices = @transform_2, window_bounds = array<i64: 1, 8>}, {pipeline_mode = #tpu.pipeline_mode<synchronous>, transform_indices = @transform_3, window_bounds = array<i64: 8, 8>}, {pipeline_mode = #tpu.pipeline_mode<synchronous>, transform_indices = @transform_4, window_bounds = array<i64: 1, 8>}, {pipeline_mode = #tpu.pipeline_mode<synchronous>, transform_indices = @transform_5, window_bounds = array<i64: 1, 8>}, {transform_indices = @transform_6, window_bounds = array<i64: 128, 8>}]} {
    %c0 = arith.constant 0 : index
    %c0_0 = arith.constant 0 : index
    %0 = vector.load %arg1[%c0, %c0_0] : memref<128x8xf32, #tpu.memory_space<vmem>>, vector<128x8xf32>
    %c0_1 = arith.constant 0 : index
    %c0_2 = arith.constant 0 : index
    %1 = vector.load %arg2[%c0_1, %c0_2] : memref<1x8xf32, #tpu.memory_space<vmem>>, vector<1x8xf32>
    %2 = vector.broadcast %1 : vector<1x8xf32> to vector<128x8xf32>
    %3 = arith.mulf %0, %2 : vector<128x8xf32>
    %c0_3 = arith.constant 0 : index
    %c0_4 = arith.constant 0 : index
    %4 = vector.load %arg3[%c0_3, %c0_4] : memref<1x8xf32, #tpu.memory_space<vmem>>, vector<1x8xf32>
    %5 = vector.broadcast %4 : vector<1x8xf32> to vector<128x8xf32>
    %6 = arith.addf %3, %5 : vector<128x8xf32>
    %cst = arith.constant 0.000000e+00 : f32
    %7 = vector.broadcast %cst : f32 to vector<128x8xf32>
    %8 = arith.maximumf %6, %7 : vector<128x8xf32>
    %9 = arith.truncf %8 : vector<128x8xf32> to vector<128x8xbf16>
    %c0_5 = arith.constant 0 : index
    %c0_6 = arith.constant 0 : index
    %10 = vector.load %arg4[%c0_5, %c0_6] : memref<8x8xf32, #tpu.memory_space<vmem>>, vector<8x8xf32>
    %11 = arith.truncf %10 : vector<8x8xf32> to vector<8x8xbf16>
    %cst_7 = arith.constant dense<0.000000e+00> : vector<128x8xf32>
    %12 = tpu.matmul %9, %11, %cst_7 {dimension_numbers = #tpu.dot_dimension_numbers<[1], [0], [0], [1], [0, 0, 1, 1], [], []>} : vector<128x8xbf16>, vector<8x8xbf16>, vector<128x8xf32> -> vector<128x8xf32>
    %c0_8 = arith.constant 0 : index
    %c0_9 = arith.constant 0 : index
    %13 = vector.load %arg5[%c0_8, %c0_9] : memref<1x8xf32, #tpu.memory_space<vmem>>, vector<1x8xf32>
    %14 = vector.broadcast %13 : vector<1x8xf32> to vector<128x8xf32>
    %15 = arith.mulf %12, %14 : vector<128x8xf32>
    %c0_10 = arith.constant 0 : index
    %c0_11 = arith.constant 0 : index
    %16 = vector.load %arg6[%c0_10, %c0_11] : memref<1x8xf32, #tpu.memory_space<vmem>>, vector<1x8xf32>
    %17 = vector.broadcast %16 : vector<1x8xf32> to vector<128x8xf32>
    %18 = arith.addf %15, %17 : vector<128x8xf32>
    %cst_12 = arith.constant 0.000000e+00 : f32
    %19 = vector.broadcast %cst_12 : f32 to vector<128x8xf32>
    %20 = arith.maximumf %18, %19 : vector<128x8xf32>
    %c0_13 = arith.constant 0 : index
    %c0_14 = arith.constant 0 : index
    %21 = vector.load %arg7[%c0_13, %c0_14] : memref<128x8xf32, #tpu.memory_space<vmem>>, vector<128x8xf32>
    tpu.vector_store %arg7[%c0_13, %c0_14], %20 {strides = array<i32>} : memref<128x8xf32, #tpu.memory_space<vmem>>, vector<128x8xf32>,
    return
  }
  func.func @transform_0(%arg0: i32) -> (i32, i32) {
    %c0_i32 = arith.constant 0 : i32
    %c0_i32_0 = arith.constant 0 : i32
    return %arg0, %c0_i32 : i32, i32
  }
  func.func @transform_1(%arg0: i32) -> (i32, i32) {
    %c0_i32 = arith.constant 0 : i32
    %c0_i32_0 = arith.constant 0 : i32
    %c0_i32_1 = arith.constant 0 : i32
    return %c0_i32, %c0_i32_0 : i32, i32
  }
  func.func @transform_2(%arg0: i32) -> (i32, i32) {
    %c0_i32 = arith.constant 0 : i32
    %c0_i32_0 = arith.constant 0 : i32
    %c0_i32_1 = arith.constant 0 : i32
    return %c0_i32, %c0_i32_0 : i32, i32
  }
  func.func @transform_3(%arg0: i32) -> (i32, i32) {
    %c0_i32 = arith.constant 0 : i32
    %c0_i32_0 = arith.constant 0 : i32
    %c0_i32_1 = arith.constant 0 : i32
    return %c0_i32, %c0_i32_0 : i32, i32
  }
  func.func @transform_4(%arg0: i32) -> (i32, i32) {
    %c0_i32 = arith.constant 0 : i32
    %c0_i32_0 = arith.constant 0 : i32
    %c0_i32_1 = arith.constant 0 : i32
    return %c0_i32, %c0_i32_0 : i32, i32
  }
  func.func @transform_5(%arg0: i32) -> (i32, i32) {
    %c0_i32 = arith.constant 0 : i32
    %c0_i32_0 = arith.constant 0 : i32
    %c0_i32_1 = arith.constant 0 : i32
    return %c0_i32, %c0_i32_0 : i32, i32
  }
  func.func @transform_6(%arg0: i32) -> (i32, i32) {
    %c0_i32 = arith.constant 0 : i32
    %c0_i32_0 = arith.constant 0 : i32
    return %arg0, %c0_i32 : i32, i32
  }
}

module attributes {stable_mosaic.version = 11 : i64} {
  func.func @_fused_matmul_kernel(%arg0: i32, %arg1: memref<128x12xf32, #tpu.memory_space<vmem>>, %arg2: memref<1x12xf32, #tpu.memory_space<vmem>>, %arg3: memref<1x12xf32, #tpu.memory_space<vmem>>, %arg4: memref<12x8xf32, #tpu.memory_space<vmem>>, %arg5: memref<1x8xf32, #tpu.memory_space<vmem>>, %arg6: memref<1x8xf32, #tpu.memory_space<vmem>>, %arg7: memref<128x8xf32, #tpu.memory_space<vmem>>) attributes {dimension_semantics = [#tpu.dimension_semantics<parallel>], iteration_bounds = array<i64: 1>, scalar_prefetch = 0 : i64, scratch_operands = 0 : i64, tpu.core_type = #tpu.core_type<tc>, window_params = [{transform_indices = @transform_0, window_bounds = array<i64: 128, 12>}, {pipeline_mode = #tpu.pipeline_mode<synchronous>, transform_indices = @transform_1, window_bounds = array<i64: 1, 12>}, {pipeline_mode = #tpu.pipeline_mode<synchronous>, transform_indices = @transform_2, window_bounds = array<i64: 1, 12>}, {pipeline_mode = #tpu.pipeline_mode<synchronous>, transform_indices = @transform_3, window_bounds = array<i64: 12, 8>}, {pipeline_mode = #tpu.pipeline_mode<synchronous>, transform_indices = @transform_4, window_bounds = array<i64: 1, 8>}, {pipeline_mode = #tpu.pipeline_mode<synchronous>, transform_indices = @transform_5, window_bounds = array<i64: 1, 8>}, {transform_indices = @transform_6, window_bounds = array<i64: 128, 8>}]} {
    %c0 = arith.constant 0 : index
    %c0_0 = arith.constant 0 : index
    %0 = vector.load %arg1[%c0, %c0_0] : memref<128x12xf32, #tpu.memory_space<vmem>>, vector<128x12xf32>
    %c0_1 = arith.constant 0 : index
    %c0_2 = arith.constant 0 : index
    %1 = vector.load %arg2[%c0_1, %c0_2] : memref<1x12xf32, #tpu.memory_space<vmem>>, vector<1x12xf32>
    %2 = vector.broadcast %1 : vector<1x12xf32> to vector<128x12xf32>
    %3 = arith.mulf %0, %2 : vector<128x12xf32>
    %c0_3 = arith.constant 0 : index
    %c0_4 = arith.constant 0 : index
    %4 = vector.load %arg3[%c0_3, %c0_4] : memref<1x12xf32, #tpu.memory_space<vmem>>, vector<1x12xf32>
    %5 = vector.broadcast %4 : vector<1x12xf32> to vector<128x12xf32>
    %6 = arith.addf %3, %5 : vector<128x12xf32>
    %cst = arith.constant 0.000000e+00 : f32
    %7 = vector.broadcast %cst : f32 to vector<128x12xf32>
    %8 = arith.maximumf %6, %7 : vector<128x12xf32>
    %9 = arith.truncf %8 : vector<128x12xf32> to vector<128x12xbf16>
    %c0_5 = arith.constant 0 : index
    %c0_6 = arith.constant 0 : index
    %10 = vector.load %arg4[%c0_5, %c0_6] : memref<12x8xf32, #tpu.memory_space<vmem>>, vector<12x8xf32>
    %11 = arith.truncf %10 : vector<12x8xf32> to vector<12x8xbf16>
    %cst_7 = arith.constant dense<0.000000e+00> : vector<128x8xf32>
    %12 = tpu.matmul %9, %11, %cst_7 {dimension_numbers = #tpu.dot_dimension_numbers<[1], [0], [0], [1], [0, 0, 1, 1], [], []>} : vector<128x12xbf16>, vector<12x8xbf16>, vector<128x8xf32> -> vector<128x8xf32>
    %c0_8 = arith.constant 0 : index
    %c0_9 = arith.constant 0 : index
    %13 = vector.load %arg5[%c0_8, %c0_9] : memref<1x8xf32, #tpu.memory_space<vmem>>, vector<1x8xf32>
    %14 = vector.broadcast %13 : vector<1x8xf32> to vector<128x8xf32>
    %15 = arith.mulf %12, %14 : vector<128x8xf32>
    %c0_10 = arith.constant 0 : index
    %c0_11 = arith.constant 0 : index
    %16 = vector.load %arg6[%c0_10, %c0_11] : memref<1x8xf32, #tpu.memory_space<vmem>>, vector<1x8xf32>
    %17 = vector.broadcast %16 : vector<1x8xf32> to vector<128x8xf32>
    %18 = arith.addf %15, %17 : vector<128x8xf32>
    %cst_12 = arith.constant 0.000000e+00 : f32
    %19 = vector.broadcast %cst_12 : f32 to vector<128x8xf32>
    %20 = arith.maximumf %18, %19 : vector<128x8xf32>
    %c0_13 = arith.constant 0 : index
    %c0_14 = arith.constant 0 : index
    %21 = vector.load %arg7[%c0_13, %c0_14] : memref<128x8xf32, #tpu.memory_space<vmem>>, vector<128x8xf32>
    tpu.vector_store %arg7[%c0_13, %c0_14], %20 {strides = array<i32>} : memref<128x8xf32, #tpu.memory_space<vmem>>, vector<128x8xf32>,
    return
  }
  func.func @transform_0(%arg0: i32) -> (i32, i32) {
    %c0_i32 = arith.constant 0 : i32
    %c0_i32_0 = arith.constant 0 : i32
    return %arg0, %c0_i32 : i32, i32
  }
  func.func @transform_1(%arg0: i32) -> (i32, i32) {
    %c0_i32 = arith.constant 0 : i32
    %c0_i32_0 = arith.constant 0 : i32
    %c0_i32_1 = arith.constant 0 : i32
    return %c0_i32, %c0_i32_0 : i32, i32
  }
  func.func @transform_2(%arg0: i32) -> (i32, i32) {
    %c0_i32 = arith.constant 0 : i32
    %c0_i32_0 = arith.constant 0 : i32
    %c0_i32_1 = arith.constant 0 : i32
    return %c0_i32, %c0_i32_0 : i32, i32
  }
  func.func @transform_3(%arg0: i32) -> (i32, i32) {
    %c0_i32 = arith.constant 0 : i32
    %c0_i32_0 = arith.constant 0 : i32
    %c0_i32_1 = arith.constant 0 : i32
    return %c0_i32, %c0_i32_0 : i32, i32
  }
  func.func @transform_4(%arg0: i32) -> (i32, i32) {
    %c0_i32 = arith.constant 0 : i32
    %c0_i32_0 = arith.constant 0 : i32
    %c0_i32_1 = arith.constant 0 : i32
    return %c0_i32, %c0_i32_0 : i32, i32
  }
  func.func @transform_5(%arg0: i32) -> (i32, i32) {
    %c0_i32 = arith.constant 0 : i32
    %c0_i32_0 = arith.constant 0 : i32
    %c0_i32_1 = arith.constant 0 : i32
    return %c0_i32, %c0_i32_0 : i32, i32
  }
  func.func @transform_6(%arg0: i32) -> (i32, i32) {
    %c0_i32 = arith.constant 0 : i32
    %c0_i32_0 = arith.constant 0 : i32
    return %arg0, %c0_i32 : i32, i32
  }
}

module attributes {stable_mosaic.version = 11 : i64} {
  func.func @_fused_matmul_kernel(%arg0: i32, %arg1: memref<128x72xf32, #tpu.memory_space<vmem>>, %arg2: memref<72x4xf32, #tpu.memory_space<vmem>>, %arg3: memref<128x4xf32, #tpu.memory_space<vmem>>) attributes {dimension_semantics = [#tpu.dimension_semantics<parallel>], iteration_bounds = array<i64: 1>, scalar_prefetch = 0 : i64, scratch_operands = 0 : i64, tpu.core_type = #tpu.core_type<tc>, window_params = [{transform_indices = @transform_0, window_bounds = array<i64: 128, 72>}, {pipeline_mode = #tpu.pipeline_mode<synchronous>, transform_indices = @transform_1, window_bounds = array<i64: 72, 4>}, {transform_indices = @transform_2, window_bounds = array<i64: 128, 4>}]} {
    %c0 = arith.constant 0 : index
    %c0_0 = arith.constant 0 : index
    %0 = vector.load %arg1[%c0, %c0_0] : memref<128x72xf32, #tpu.memory_space<vmem>>, vector<128x72xf32>
    %1 = arith.truncf %0 : vector<128x72xf32> to vector<128x72xbf16>
    %c0_1 = arith.constant 0 : index
    %c0_2 = arith.constant 0 : index
    %2 = vector.load %arg2[%c0_1, %c0_2] : memref<72x4xf32, #tpu.memory_space<vmem>>, vector<72x4xf32>
    %3 = arith.truncf %2 : vector<72x4xf32> to vector<72x4xbf16>
    %cst = arith.constant dense<0.000000e+00> : vector<128x4xf32>
    %4 = tpu.matmul %1, %3, %cst {dimension_numbers = #tpu.dot_dimension_numbers<[1], [0], [0], [1], [0, 0, 1, 1], [], []>} : vector<128x72xbf16>, vector<72x4xbf16>, vector<128x4xf32> -> vector<128x4xf32>
    %c0_3 = arith.constant 0 : index
    %c0_4 = arith.constant 0 : index
    %5 = vector.load %arg3[%c0_3, %c0_4] : memref<128x4xf32, #tpu.memory_space<vmem>>, vector<128x4xf32>
    tpu.vector_store %arg3[%c0_3, %c0_4], %4 {strides = array<i32>} : memref<128x4xf32, #tpu.memory_space<vmem>>, vector<128x4xf32>,
    return
  }
  func.func @transform_0(%arg0: i32) -> (i32, i32) {
    %c0_i32 = arith.constant 0 : i32
    %c0_i32_0 = arith.constant 0 : i32
    return %arg0, %c0_i32 : i32, i32
  }
  func.func @transform_1(%arg0: i32) -> (i32, i32) {
    %c0_i32 = arith.constant 0 : i32
    %c0_i32_0 = arith.constant 0 : i32
    %c0_i32_1 = arith.constant 0 : i32
    return %c0_i32, %c0_i32_0 : i32, i32
  }
  func.func @transform_2(%arg0: i32) -> (i32, i32) {
    %c0_i32 = arith.constant 0 : i32
    %c0_i32_0 = arith.constant 0 : i32
    return %arg0, %c0_i32 : i32, i32
  }
}

module attributes {stable_mosaic.version = 11 : i64} {
  func.func @_fused_matmul_kernel(%arg0: i32, %arg1: memref<128x16xf32, #tpu.memory_space<vmem>>, %arg2: memref<1x16xf32, #tpu.memory_space<vmem>>, %arg3: memref<1x16xf32, #tpu.memory_space<vmem>>, %arg4: memref<16x8xf32, #tpu.memory_space<vmem>>, %arg5: memref<128x8xf32, #tpu.memory_space<vmem>>) attributes {dimension_semantics = [#tpu.dimension_semantics<parallel>], iteration_bounds = array<i64: 1>, scalar_prefetch = 0 : i64, scratch_operands = 0 : i64, tpu.core_type = #tpu.core_type<tc>, window_params = [{transform_indices = @transform_0, window_bounds = array<i64: 128, 16>}, {pipeline_mode = #tpu.pipeline_mode<synchronous>, transform_indices = @transform_1, window_bounds = array<i64: 1, 16>}, {pipeline_mode = #tpu.pipeline_mode<synchronous>, transform_indices = @transform_2, window_bounds = array<i64: 1, 16>}, {pipeline_mode = #tpu.pipeline_mode<synchronous>, transform_indices = @transform_3, window_bounds = array<i64: 16, 8>}, {transform_indices = @transform_4, window_bounds = array<i64: 128, 8>}]} {
    %c0 = arith.constant 0 : index
    %c0_0 = arith.constant 0 : index
    %0 = vector.load %arg1[%c0, %c0_0] : memref<128x16xf32, #tpu.memory_space<vmem>>, vector<128x16xf32>
    %c0_1 = arith.constant 0 : index
    %c0_2 = arith.constant 0 : index
    %1 = vector.load %arg2[%c0_1, %c0_2] : memref<1x16xf32, #tpu.memory_space<vmem>>, vector<1x16xf32>
    %2 = vector.broadcast %1 : vector<1x16xf32> to vector<128x16xf32>
    %3 = arith.mulf %0, %2 : vector<128x16xf32>
    %c0_3 = arith.constant 0 : index
    %c0_4 = arith.constant 0 : index
    %4 = vector.load %arg3[%c0_3, %c0_4] : memref<1x16xf32, #tpu.memory_space<vmem>>, vector<1x16xf32>
    %5 = vector.broadcast %4 : vector<1x16xf32> to vector<128x16xf32>
    %6 = arith.addf %3, %5 : vector<128x16xf32>
    %cst = arith.constant 0.000000e+00 : f32
    %7 = vector.broadcast %cst : f32 to vector<128x16xf32>
    %8 = arith.maximumf %6, %7 : vector<128x16xf32>
    %9 = arith.truncf %8 : vector<128x16xf32> to vector<128x16xbf16>
    %c0_5 = arith.constant 0 : index
    %c0_6 = arith.constant 0 : index
    %10 = vector.load %arg4[%c0_5, %c0_6] : memref<16x8xf32, #tpu.memory_space<vmem>>, vector<16x8xf32>
    %11 = arith.truncf %10 : vector<16x8xf32> to vector<16x8xbf16>
    %cst_7 = arith.constant dense<0.000000e+00> : vector<128x8xf32>
    %12 = tpu.matmul %9, %11, %cst_7 {dimension_numbers = #tpu.dot_dimension_numbers<[1], [0], [0], [1], [0, 0, 1, 1], [], []>} : vector<128x16xbf16>, vector<16x8xbf16>, vector<128x8xf32> -> vector<128x8xf32>
    %c0_8 = arith.constant 0 : index
    %c0_9 = arith.constant 0 : index
    %13 = vector.load %arg5[%c0_8, %c0_9] : memref<128x8xf32, #tpu.memory_space<vmem>>, vector<128x8xf32>
    tpu.vector_store %arg5[%c0_8, %c0_9], %12 {strides = array<i32>} : memref<128x8xf32, #tpu.memory_space<vmem>>, vector<128x8xf32>,
    return
  }
  func.func @transform_0(%arg0: i32) -> (i32, i32) {
    %c0_i32 = arith.constant 0 : i32
    %c0_i32_0 = arith.constant 0 : i32
    return %arg0, %c0_i32 : i32, i32
  }
  func.func @transform_1(%arg0: i32) -> (i32, i32) {
    %c0_i32 = arith.constant 0 : i32
    %c0_i32_0 = arith.constant 0 : i32
    %c0_i32_1 = arith.constant 0 : i32
    return %c0_i32, %c0_i32_0 : i32, i32
  }
  func.func @transform_2(%arg0: i32) -> (i32, i32) {
    %c0_i32 = arith.constant 0 : i32
    %c0_i32_0 = arith.constant 0 : i32
    %c0_i32_1 = arith.constant 0 : i32
    return %c0_i32, %c0_i32_0 : i32, i32
  }
  func.func @transform_3(%arg0: i32) -> (i32, i32) {
    %c0_i32 = arith.constant 0 : i32
    %c0_i32_0 = arith.constant 0 : i32
    %c0_i32_1 = arith.constant 0 : i32
    return %c0_i32, %c0_i32_0 : i32, i32
  }
  func.func @transform_4(%arg0: i32) -> (i32, i32) {
    %c0_i32 = arith.constant 0 : i32
    %c0_i32_0 = arith.constant 0 : i32
    return %arg0, %c0_i32 : i32, i32
  }
}

module attributes {stable_mosaic.version = 11 : i64} {
  func.func @_fused_matmul_kernel(%arg0: i32, %arg1: memref<32x8xf32, #tpu.memory_space<vmem>>, %arg2: memref<1x8xf32, #tpu.memory_space<vmem>>, %arg3: memref<1x8xf32, #tpu.memory_space<vmem>>, %arg4: memref<8x8xf32, #tpu.memory_space<vmem>>, %arg5: memref<1x8xf32, #tpu.memory_space<vmem>>, %arg6: memref<1x8xf32, #tpu.memory_space<vmem>>, %arg7: memref<32x8xf32, #tpu.memory_space<vmem>>) attributes {dimension_semantics = [#tpu.dimension_semantics<parallel>], iteration_bounds = array<i64: 1>, scalar_prefetch = 0 : i64, scratch_operands = 0 : i64, tpu.core_type = #tpu.core_type<tc>, window_params = [{transform_indices = @transform_0, window_bounds = array<i64: 32, 8>}, {pipeline_mode = #tpu.pipeline_mode<synchronous>, transform_indices = @transform_1, window_bounds = array<i64: 1, 8>}, {pipeline_mode = #tpu.pipeline_mode<synchronous>, transform_indices = @transform_2, window_bounds = array<i64: 1, 8>}, {pipeline_mode = #tpu.pipeline_mode<synchronous>, transform_indices = @transform_3, window_bounds = array<i64: 8, 8>}, {pipeline_mode = #tpu.pipeline_mode<synchronous>, transform_indices = @transform_4, window_bounds = array<i64: 1, 8>}, {pipeline_mode = #tpu.pipeline_mode<synchronous>, transform_indices = @transform_5, window_bounds = array<i64: 1, 8>}, {transform_indices = @transform_6, window_bounds = array<i64: 32, 8>}]} {
    %c0 = arith.constant 0 : index
    %c0_0 = arith.constant 0 : index
    %0 = vector.load %arg1[%c0, %c0_0] : memref<32x8xf32, #tpu.memory_space<vmem>>, vector<32x8xf32>
    %c0_1 = arith.constant 0 : index
    %c0_2 = arith.constant 0 : index
    %1 = vector.load %arg2[%c0_1, %c0_2] : memref<1x8xf32, #tpu.memory_space<vmem>>, vector<1x8xf32>
    %2 = vector.broadcast %1 : vector<1x8xf32> to vector<32x8xf32>
    %3 = arith.mulf %0, %2 : vector<32x8xf32>
    %c0_3 = arith.constant 0 : index
    %c0_4 = arith.constant 0 : index
    %4 = vector.load %arg3[%c0_3, %c0_4] : memref<1x8xf32, #tpu.memory_space<vmem>>, vector<1x8xf32>
    %5 = vector.broadcast %4 : vector<1x8xf32> to vector<32x8xf32>
    %6 = arith.addf %3, %5 : vector<32x8xf32>
    %cst = arith.constant 0.000000e+00 : f32
    %7 = vector.broadcast %cst : f32 to vector<32x8xf32>
    %8 = arith.maximumf %6, %7 : vector<32x8xf32>
    %9 = arith.truncf %8 : vector<32x8xf32> to vector<32x8xbf16>
    %c0_5 = arith.constant 0 : index
    %c0_6 = arith.constant 0 : index
    %10 = vector.load %arg4[%c0_5, %c0_6] : memref<8x8xf32, #tpu.memory_space<vmem>>, vector<8x8xf32>
    %11 = arith.truncf %10 : vector<8x8xf32> to vector<8x8xbf16>
    %cst_7 = arith.constant dense<0.000000e+00> : vector<32x8xf32>
    %12 = tpu.matmul %9, %11, %cst_7 {dimension_numbers = #tpu.dot_dimension_numbers<[1], [0], [0], [1], [0, 0, 1, 1], [], []>} : vector<32x8xbf16>, vector<8x8xbf16>, vector<32x8xf32> -> vector<32x8xf32>
    %c0_8 = arith.constant 0 : index
    %c0_9 = arith.constant 0 : index
    %13 = vector.load %arg5[%c0_8, %c0_9] : memref<1x8xf32, #tpu.memory_space<vmem>>, vector<1x8xf32>
    %14 = vector.broadcast %13 : vector<1x8xf32> to vector<32x8xf32>
    %15 = arith.mulf %12, %14 : vector<32x8xf32>
    %c0_10 = arith.constant 0 : index
    %c0_11 = arith.constant 0 : index
    %16 = vector.load %arg6[%c0_10, %c0_11] : memref<1x8xf32, #tpu.memory_space<vmem>>, vector<1x8xf32>
    %17 = vector.broadcast %16 : vector<1x8xf32> to vector<32x8xf32>
    %18 = arith.addf %15, %17 : vector<32x8xf32>
    %cst_12 = arith.constant 0.000000e+00 : f32
    %19 = vector.broadcast %cst_12 : f32 to vector<32x8xf32>
    %20 = arith.maximumf %18, %19 : vector<32x8xf32>
    %c0_13 = arith.constant 0 : index
    %c0_14 = arith.constant 0 : index
    %21 = vector.load %arg7[%c0_13, %c0_14] : memref<32x8xf32, #tpu.memory_space<vmem>>, vector<32x8xf32>
    tpu.vector_store %arg7[%c0_13, %c0_14], %20 {strides = array<i32>} : memref<32x8xf32, #tpu.memory_space<vmem>>, vector<32x8xf32>,
    return
  }
  func.func @transform_0(%arg0: i32) -> (i32, i32) {
    %c0_i32 = arith.constant 0 : i32
    %c0_i32_0 = arith.constant 0 : i32
    return %arg0, %c0_i32 : i32, i32
  }
  func.func @transform_1(%arg0: i32) -> (i32, i32) {
    %c0_i32 = arith.constant 0 : i32
    %c0_i32_0 = arith.constant 0 : i32
    %c0_i32_1 = arith.constant 0 : i32
    return %c0_i32, %c0_i32_0 : i32, i32
  }
  func.func @transform_2(%arg0: i32) -> (i32, i32) {
    %c0_i32 = arith.constant 0 : i32
    %c0_i32_0 = arith.constant 0 : i32
    %c0_i32_1 = arith.constant 0 : i32
    return %c0_i32, %c0_i32_0 : i32, i32
  }
  func.func @transform_3(%arg0: i32) -> (i32, i32) {
    %c0_i32 = arith.constant 0 : i32
    %c0_i32_0 = arith.constant 0 : i32
    %c0_i32_1 = arith.constant 0 : i32
    return %c0_i32, %c0_i32_0 : i32, i32
  }
  func.func @transform_4(%arg0: i32) -> (i32, i32) {
    %c0_i32 = arith.constant 0 : i32
    %c0_i32_0 = arith.constant 0 : i32
    %c0_i32_1 = arith.constant 0 : i32
    return %c0_i32, %c0_i32_0 : i32, i32
  }
  func.func @transform_5(%arg0: i32) -> (i32, i32) {
    %c0_i32 = arith.constant 0 : i32
    %c0_i32_0 = arith.constant 0 : i32
    %c0_i32_1 = arith.constant 0 : i32
    return %c0_i32, %c0_i32_0 : i32, i32
  }
  func.func @transform_6(%arg0: i32) -> (i32, i32) {
    %c0_i32 = arith.constant 0 : i32
    %c0_i32_0 = arith.constant 0 : i32
    return %arg0, %c0_i32 : i32, i32
  }
}

module attributes {stable_mosaic.version = 11 : i64} {
  func.func @_fused_matmul_kernel(%arg0: i32, %arg1: memref<32x72xf32, #tpu.memory_space<vmem>>, %arg2: memref<72x4xf32, #tpu.memory_space<vmem>>, %arg3: memref<32x4xf32, #tpu.memory_space<vmem>>) attributes {dimension_semantics = [#tpu.dimension_semantics<parallel>], iteration_bounds = array<i64: 1>, scalar_prefetch = 0 : i64, scratch_operands = 0 : i64, tpu.core_type = #tpu.core_type<tc>, window_params = [{transform_indices = @transform_0, window_bounds = array<i64: 32, 72>}, {pipeline_mode = #tpu.pipeline_mode<synchronous>, transform_indices = @transform_1, window_bounds = array<i64: 72, 4>}, {transform_indices = @transform_2, window_bounds = array<i64: 32, 4>}]} {
    %c0 = arith.constant 0 : index
    %c0_0 = arith.constant 0 : index
    %0 = vector.load %arg1[%c0, %c0_0] : memref<32x72xf32, #tpu.memory_space<vmem>>, vector<32x72xf32>
    %1 = arith.truncf %0 : vector<32x72xf32> to vector<32x72xbf16>
    %c0_1 = arith.constant 0 : index
    %c0_2 = arith.constant 0 : index
    %2 = vector.load %arg2[%c0_1, %c0_2] : memref<72x4xf32, #tpu.memory_space<vmem>>, vector<72x4xf32>
    %3 = arith.truncf %2 : vector<72x4xf32> to vector<72x4xbf16>
    %cst = arith.constant dense<0.000000e+00> : vector<32x4xf32>
    %4 = tpu.matmul %1, %3, %cst {dimension_numbers = #tpu.dot_dimension_numbers<[1], [0], [0], [1], [0, 0, 1, 1], [], []>} : vector<32x72xbf16>, vector<72x4xbf16>, vector<32x4xf32> -> vector<32x4xf32>
    %c0_3 = arith.constant 0 : index
    %c0_4 = arith.constant 0 : index
    %5 = vector.load %arg3[%c0_3, %c0_4] : memref<32x4xf32, #tpu.memory_space<vmem>>, vector<32x4xf32>
    tpu.vector_store %arg3[%c0_3, %c0_4], %4 {strides = array<i32>} : memref<32x4xf32, #tpu.memory_space<vmem>>, vector<32x4xf32>,
    return
  }
  func.func @transform_0(%arg0: i32) -> (i32, i32) {
    %c0_i32 = arith.constant 0 : i32
    %c0_i32_0 = arith.constant 0 : i32
    return %arg0, %c0_i32 : i32, i32
  }
  func.func @transform_1(%arg0: i32) -> (i32, i32) {
    %c0_i32 = arith.constant 0 : i32
    %c0_i32_0 = arith.constant 0 : i32
    %c0_i32_1 = arith.constant 0 : i32
    return %c0_i32, %c0_i32_0 : i32, i32
  }
  func.func @transform_2(%arg0: i32) -> (i32, i32) {
    %c0_i32 = arith.constant 0 : i32
    %c0_i32_0 = arith.constant 0 : i32
    return %arg0, %c0_i32 : i32, i32
  }
}

module attributes {stable_mosaic.version = 11 : i64} {
  func.func @_fused_matmul_kernel(%arg0: i32, %arg1: memref<32x16xf32, #tpu.memory_space<vmem>>, %arg2: memref<1x16xf32, #tpu.memory_space<vmem>>, %arg3: memref<1x16xf32, #tpu.memory_space<vmem>>, %arg4: memref<16x8xf32, #tpu.memory_space<vmem>>, %arg5: memref<32x8xf32, #tpu.memory_space<vmem>>) attributes {dimension_semantics = [#tpu.dimension_semantics<parallel>], iteration_bounds = array<i64: 1>, scalar_prefetch = 0 : i64, scratch_operands = 0 : i64, tpu.core_type = #tpu.core_type<tc>, window_params = [{transform_indices = @transform_0, window_bounds = array<i64: 32, 16>}, {pipeline_mode = #tpu.pipeline_mode<synchronous>, transform_indices = @transform_1, window_bounds = array<i64: 1, 16>}, {pipeline_mode = #tpu.pipeline_mode<synchronous>, transform_indices = @transform_2, window_bounds = array<i64: 1, 16>}, {pipeline_mode = #tpu.pipeline_mode<synchronous>, transform_indices = @transform_3, window_bounds = array<i64: 16, 8>}, {transform_indices = @transform_4, window_bounds = array<i64: 32, 8>}]} {
    %c0 = arith.constant 0 : index
    %c0_0 = arith.constant 0 : index
    %0 = vector.load %arg1[%c0, %c0_0] : memref<32x16xf32, #tpu.memory_space<vmem>>, vector<32x16xf32>
    %c0_1 = arith.constant 0 : index
    %c0_2 = arith.constant 0 : index
    %1 = vector.load %arg2[%c0_1, %c0_2] : memref<1x16xf32, #tpu.memory_space<vmem>>, vector<1x16xf32>
    %2 = vector.broadcast %1 : vector<1x16xf32> to vector<32x16xf32>
    %3 = arith.mulf %0, %2 : vector<32x16xf32>
    %c0_3 = arith.constant 0 : index
    %c0_4 = arith.constant 0 : index
    %4 = vector.load %arg3[%c0_3, %c0_4] : memref<1x16xf32, #tpu.memory_space<vmem>>, vector<1x16xf32>
    %5 = vector.broadcast %4 : vector<1x16xf32> to vector<32x16xf32>
    %6 = arith.addf %3, %5 : vector<32x16xf32>
    %cst = arith.constant 0.000000e+00 : f32
    %7 = vector.broadcast %cst : f32 to vector<32x16xf32>
    %8 = arith.maximumf %6, %7 : vector<32x16xf32>
    %9 = arith.truncf %8 : vector<32x16xf32> to vector<32x16xbf16>
    %c0_5 = arith.constant 0 : index
    %c0_6 = arith.constant 0 : index
    %10 = vector.load %arg4[%c0_5, %c0_6] : memref<16x8xf32, #tpu.memory_space<vmem>>, vector<16x8xf32>
    %11 = arith.truncf %10 : vector<16x8xf32> to vector<16x8xbf16>
    %cst_7 = arith.constant dense<0.000000e+00> : vector<32x8xf32>
    %12 = tpu.matmul %9, %11, %cst_7 {dimension_numbers = #tpu.dot_dimension_numbers<[1], [0], [0], [1], [0, 0, 1, 1], [], []>} : vector<32x16xbf16>, vector<16x8xbf16>, vector<32x8xf32> -> vector<32x8xf32>
    %c0_8 = arith.constant 0 : index
    %c0_9 = arith.constant 0 : index
    %13 = vector.load %arg5[%c0_8, %c0_9] : memref<32x8xf32, #tpu.memory_space<vmem>>, vector<32x8xf32>
    tpu.vector_store %arg5[%c0_8, %c0_9], %12 {strides = array<i32>} : memref<32x8xf32, #tpu.memory_space<vmem>>, vector<32x8xf32>,
    return
  }
  func.func @transform_0(%arg0: i32) -> (i32, i32) {
    %c0_i32 = arith.constant 0 : i32
    %c0_i32_0 = arith.constant 0 : i32
    return %arg0, %c0_i32 : i32, i32
  }
  func.func @transform_1(%arg0: i32) -> (i32, i32) {
    %c0_i32 = arith.constant 0 : i32
    %c0_i32_0 = arith.constant 0 : i32
    %c0_i32_1 = arith.constant 0 : i32
    return %c0_i32, %c0_i32_0 : i32, i32
  }
  func.func @transform_2(%arg0: i32) -> (i32, i32) {
    %c0_i32 = arith.constant 0 : i32
    %c0_i32_0 = arith.constant 0 : i32
    %c0_i32_1 = arith.constant 0 : i32
    return %c0_i32, %c0_i32_0 : i32, i32
  }
  func.func @transform_3(%arg0: i32) -> (i32, i32) {
    %c0_i32 = arith.constant 0 : i32
    %c0_i32_0 = arith.constant 0 : i32
    %c0_i32_1 = arith.constant 0 : i32
    return %c0_i32, %c0_i32_0 : i32, i32
  }
  func.func @transform_4(%arg0: i32) -> (i32, i32) {
    %c0_i32 = arith.constant 0 : i32
    %c0_i32_0 = arith.constant 0 : i32
    return %arg0, %c0_i32 : i32, i32
  }
}

module attributes {stable_mosaic.version = 11 : i64} {
  func.func @_fused_matmul_kernel(%arg0: i32, %arg1: memref<32x12xf32, #tpu.memory_space<vmem>>, %arg2: memref<1x12xf32, #tpu.memory_space<vmem>>, %arg3: memref<1x12xf32, #tpu.memory_space<vmem>>, %arg4: memref<12x8xf32, #tpu.memory_space<vmem>>, %arg5: memref<1x8xf32, #tpu.memory_space<vmem>>, %arg6: memref<1x8xf32, #tpu.memory_space<vmem>>, %arg7: memref<32x8xf32, #tpu.memory_space<vmem>>) attributes {dimension_semantics = [#tpu.dimension_semantics<parallel>], iteration_bounds = array<i64: 1>, scalar_prefetch = 0 : i64, scratch_operands = 0 : i64, tpu.core_type = #tpu.core_type<tc>, window_params = [{transform_indices = @transform_0, window_bounds = array<i64: 32, 12>}, {pipeline_mode = #tpu.pipeline_mode<synchronous>, transform_indices = @transform_1, window_bounds = array<i64: 1, 12>}, {pipeline_mode = #tpu.pipeline_mode<synchronous>, transform_indices = @transform_2, window_bounds = array<i64: 1, 12>}, {pipeline_mode = #tpu.pipeline_mode<synchronous>, transform_indices = @transform_3, window_bounds = array<i64: 12, 8>}, {pipeline_mode = #tpu.pipeline_mode<synchronous>, transform_indices = @transform_4, window_bounds = array<i64: 1, 8>}, {pipeline_mode = #tpu.pipeline_mode<synchronous>, transform_indices = @transform_5, window_bounds = array<i64: 1, 8>}, {transform_indices = @transform_6, window_bounds = array<i64: 32, 8>}]} {
    %c0 = arith.constant 0 : index
    %c0_0 = arith.constant 0 : index
    %0 = vector.load %arg1[%c0, %c0_0] : memref<32x12xf32, #tpu.memory_space<vmem>>, vector<32x12xf32>
    %c0_1 = arith.constant 0 : index
    %c0_2 = arith.constant 0 : index
    %1 = vector.load %arg2[%c0_1, %c0_2] : memref<1x12xf32, #tpu.memory_space<vmem>>, vector<1x12xf32>
    %2 = vector.broadcast %1 : vector<1x12xf32> to vector<32x12xf32>
    %3 = arith.mulf %0, %2 : vector<32x12xf32>
    %c0_3 = arith.constant 0 : index
    %c0_4 = arith.constant 0 : index
    %4 = vector.load %arg3[%c0_3, %c0_4] : memref<1x12xf32, #tpu.memory_space<vmem>>, vector<1x12xf32>
    %5 = vector.broadcast %4 : vector<1x12xf32> to vector<32x12xf32>
    %6 = arith.addf %3, %5 : vector<32x12xf32>
    %cst = arith.constant 0.000000e+00 : f32
    %7 = vector.broadcast %cst : f32 to vector<32x12xf32>
    %8 = arith.maximumf %6, %7 : vector<32x12xf32>
    %9 = arith.truncf %8 : vector<32x12xf32> to vector<32x12xbf16>
    %c0_5 = arith.constant 0 : index
    %c0_6 = arith.constant 0 : index
    %10 = vector.load %arg4[%c0_5, %c0_6] : memref<12x8xf32, #tpu.memory_space<vmem>>, vector<12x8xf32>
    %11 = arith.truncf %10 : vector<12x8xf32> to vector<12x8xbf16>
    %cst_7 = arith.constant dense<0.000000e+00> : vector<32x8xf32>
    %12 = tpu.matmul %9, %11, %cst_7 {dimension_numbers = #tpu.dot_dimension_numbers<[1], [0], [0], [1], [0, 0, 1, 1], [], []>} : vector<32x12xbf16>, vector<12x8xbf16>, vector<32x8xf32> -> vector<32x8xf32>
    %c0_8 = arith.constant 0 : index
    %c0_9 = arith.constant 0 : index
    %13 = vector.load %arg5[%c0_8, %c0_9] : memref<1x8xf32, #tpu.memory_space<vmem>>, vector<1x8xf32>
    %14 = vector.broadcast %13 : vector<1x8xf32> to vector<32x8xf32>
    %15 = arith.mulf %12, %14 : vector<32x8xf32>
    %c0_10 = arith.constant 0 : index
    %c0_11 = arith.constant 0 : index
    %16 = vector.load %arg6[%c0_10, %c0_11] : memref<1x8xf32, #tpu.memory_space<vmem>>, vector<1x8xf32>
    %17 = vector.broadcast %16 : vector<1x8xf32> to vector<32x8xf32>
    %18 = arith.addf %15, %17 : vector<32x8xf32>
    %cst_12 = arith.constant 0.000000e+00 : f32
    %19 = vector.broadcast %cst_12 : f32 to vector<32x8xf32>
    %20 = arith.maximumf %18, %19 : vector<32x8xf32>
    %c0_13 = arith.constant 0 : index
    %c0_14 = arith.constant 0 : index
    %21 = vector.load %arg7[%c0_13, %c0_14] : memref<32x8xf32, #tpu.memory_space<vmem>>, vector<32x8xf32>
    tpu.vector_store %arg7[%c0_13, %c0_14], %20 {strides = array<i32>} : memref<32x8xf32, #tpu.memory_space<vmem>>, vector<32x8xf32>,
    return
  }
  func.func @transform_0(%arg0: i32) -> (i32, i32) {
    %c0_i32 = arith.constant 0 : i32
    %c0_i32_0 = arith.constant 0 : i32
    return %arg0, %c0_i32 : i32, i32
  }
  func.func @transform_1(%arg0: i32) -> (i32, i32) {
    %c0_i32 = arith.constant 0 : i32
    %c0_i32_0 = arith.constant 0 : i32
    %c0_i32_1 = arith.constant 0 : i32
    return %c0_i32, %c0_i32_0 : i32, i32
  }
  func.func @transform_2(%arg0: i32) -> (i32, i32) {
    %c0_i32 = arith.constant 0 : i32
    %c0_i32_0 = arith.constant 0 : i32
    %c0_i32_1 = arith.constant 0 : i32
    return %c0_i32, %c0_i32_0 : i32, i32
  }
  func.func @transform_3(%arg0: i32) -> (i32, i32) {
    %c0_i32 = arith.constant 0 : i32
    %c0_i32_0 = arith.constant 0 : i32
    %c0_i32_1 = arith.constant 0 : i32
    return %c0_i32, %c0_i32_0 : i32, i32
  }
  func.func @transform_4(%arg0: i32) -> (i32, i32) {
    %c0_i32 = arith.constant 0 : i32
    %c0_i32_0 = arith.constant 0 : i32
    %c0_i32_1 = arith.constant 0 : i32
    return %c0_i32, %c0_i32_0 : i32, i32
  }
  func.func @transform_5(%arg0: i32) -> (i32, i32) {
    %c0_i32 = arith.constant 0 : i32
    %c0_i32_0 = arith.constant 0 : i32
    %c0_i32_1 = arith.constant 0 : i32
    return %c0_i32, %c0_i32_0 : i32, i32
  }
  func.func @transform_6(%arg0: i32) -> (i32, i32) {
    %c0_i32 = arith.constant 0 : i32
    %c0_i32_0 = arith.constant 0 : i32
    return %arg0, %c0_i32 : i32, i32
  }
}

module attributes {stable_mosaic.version = 11 : i64} {
  func.func @_fused_matmul_kernel(%arg0: i32, %arg1: memref<32x8xf32, #tpu.memory_space<vmem>>, %arg2: memref<8x4xf32, #tpu.memory_space<vmem>>, %arg3: memref<32x4xf32, #tpu.memory_space<vmem>>) attributes {dimension_semantics = [#tpu.dimension_semantics<parallel>], iteration_bounds = array<i64: 1>, scalar_prefetch = 0 : i64, scratch_operands = 0 : i64, tpu.core_type = #tpu.core_type<tc>, window_params = [{transform_indices = @transform_0, window_bounds = array<i64: 32, 8>}, {pipeline_mode = #tpu.pipeline_mode<synchronous>, transform_indices = @transform_1, window_bounds = array<i64: 8, 4>}, {transform_indices = @transform_2, window_bounds = array<i64: 32, 4>}]} {
    %c0 = arith.constant 0 : index
    %c0_0 = arith.constant 0 : index
    %0 = vector.load %arg1[%c0, %c0_0] : memref<32x8xf32, #tpu.memory_space<vmem>>, vector<32x8xf32>
    %1 = arith.truncf %0 : vector<32x8xf32> to vector<32x8xbf16>
    %c0_1 = arith.constant 0 : index
    %c0_2 = arith.constant 0 : index
    %2 = vector.load %arg2[%c0_1, %c0_2] : memref<8x4xf32, #tpu.memory_space<vmem>>, vector<8x4xf32>
    %3 = arith.truncf %2 : vector<8x4xf32> to vector<8x4xbf16>
    %cst = arith.constant dense<0.000000e+00> : vector<32x4xf32>
    %4 = tpu.matmul %1, %3, %cst {dimension_numbers = #tpu.dot_dimension_numbers<[1], [0], [0], [1], [0, 0, 1, 1], [], []>} : vector<32x8xbf16>, vector<8x4xbf16>, vector<32x4xf32> -> vector<32x4xf32>
    %c0_3 = arith.constant 0 : index
    %c0_4 = arith.constant 0 : index
    %5 = vector.load %arg3[%c0_3, %c0_4] : memref<32x4xf32, #tpu.memory_space<vmem>>, vector<32x4xf32>
    tpu.vector_store %arg3[%c0_3, %c0_4], %4 {strides = array<i32>} : memref<32x4xf32, #tpu.memory_space<vmem>>, vector<32x4xf32>,
    return
  }
  func.func @transform_0(%arg0: i32) -> (i32, i32) {
    %c0_i32 = arith.constant 0 : i32
    %c0_i32_0 = arith.constant 0 : i32
    return %arg0, %c0_i32 : i32, i32
  }
  func.func @transform_1(%arg0: i32) -> (i32, i32) {
    %c0_i32 = arith.constant 0 : i32
    %c0_i32_0 = arith.constant 0 : i32
    %c0_i32_1 = arith.constant 0 : i32
    return %c0_i32, %c0_i32_0 : i32, i32
  }
  func.func @transform_2(%arg0: i32) -> (i32, i32) {
    %c0_i32 = arith.constant 0 : i32
    %c0_i32_0 = arith.constant 0 : i32
    return %arg0, %c0_i32 : i32, i32
  }
}

module attributes {stable_mosaic.version = 11 : i64} {
  func.func @_fused_matmul_kernel(%arg0: i32, %arg1: memref<32x16xf32, #tpu.memory_space<vmem>>, %arg2: memref<1x16xf32, #tpu.memory_space<vmem>>, %arg3: memref<1x16xf32, #tpu.memory_space<vmem>>, %arg4: memref<16x8xf32, #tpu.memory_space<vmem>>, %arg5: memref<1x8xf32, #tpu.memory_space<vmem>>, %arg6: memref<1x8xf32, #tpu.memory_space<vmem>>, %arg7: memref<32x8xf32, #tpu.memory_space<vmem>>) attributes {dimension_semantics = [#tpu.dimension_semantics<parallel>], iteration_bounds = array<i64: 1>, scalar_prefetch = 0 : i64, scratch_operands = 0 : i64, tpu.core_type = #tpu.core_type<tc>, window_params = [{transform_indices = @transform_0, window_bounds = array<i64: 32, 16>}, {pipeline_mode = #tpu.pipeline_mode<synchronous>, transform_indices = @transform_1, window_bounds = array<i64: 1, 16>}, {pipeline_mode = #tpu.pipeline_mode<synchronous>, transform_indices = @transform_2, window_bounds = array<i64: 1, 16>}, {pipeline_mode = #tpu.pipeline_mode<synchronous>, transform_indices = @transform_3, window_bounds = array<i64: 16, 8>}, {pipeline_mode = #tpu.pipeline_mode<synchronous>, transform_indices = @transform_4, window_bounds = array<i64: 1, 8>}, {pipeline_mode = #tpu.pipeline_mode<synchronous>, transform_indices = @transform_5, window_bounds = array<i64: 1, 8>}, {transform_indices = @transform_6, window_bounds = array<i64: 32, 8>}]} {
    %c0 = arith.constant 0 : index
    %c0_0 = arith.constant 0 : index
    %0 = vector.load %arg1[%c0, %c0_0] : memref<32x16xf32, #tpu.memory_space<vmem>>, vector<32x16xf32>
    %c0_1 = arith.constant 0 : index
    %c0_2 = arith.constant 0 : index
    %1 = vector.load %arg2[%c0_1, %c0_2] : memref<1x16xf32, #tpu.memory_space<vmem>>, vector<1x16xf32>
    %2 = vector.broadcast %1 : vector<1x16xf32> to vector<32x16xf32>
    %3 = arith.mulf %0, %2 : vector<32x16xf32>
    %c0_3 = arith.constant 0 : index
    %c0_4 = arith.constant 0 : index
    %4 = vector.load %arg3[%c0_3, %c0_4] : memref<1x16xf32, #tpu.memory_space<vmem>>, vector<1x16xf32>
    %5 = vector.broadcast %4 : vector<1x16xf32> to vector<32x16xf32>
    %6 = arith.addf %3, %5 : vector<32x16xf32>
    %cst = arith.constant 0.000000e+00 : f32
    %7 = vector.broadcast %cst : f32 to vector<32x16xf32>
    %8 = arith.maximumf %6, %7 : vector<32x16xf32>
    %9 = arith.truncf %8 : vector<32x16xf32> to vector<32x16xbf16>
    %c0_5 = arith.constant 0 : index
    %c0_6 = arith.constant 0 : index
    %10 = vector.load %arg4[%c0_5, %c0_6] : memref<16x8xf32, #tpu.memory_space<vmem>>, vector<16x8xf32>
    %11 = arith.truncf %10 : vector<16x8xf32> to vector<16x8xbf16>
    %cst_7 = arith.constant dense<0.000000e+00> : vector<32x8xf32>
    %12 = tpu.matmul %9, %11, %cst_7 {dimension_numbers = #tpu.dot_dimension_numbers<[1], [0], [0], [1], [0, 0, 1, 1], [], []>} : vector<32x16xbf16>, vector<16x8xbf16>, vector<32x8xf32> -> vector<32x8xf32>
    %c0_8 = arith.constant 0 : index
    %c0_9 = arith.constant 0 : index
    %13 = vector.load %arg5[%c0_8, %c0_9] : memref<1x8xf32, #tpu.memory_space<vmem>>, vector<1x8xf32>
    %14 = vector.broadcast %13 : vector<1x8xf32> to vector<32x8xf32>
    %15 = arith.mulf %12, %14 : vector<32x8xf32>
    %c0_10 = arith.constant 0 : index
    %c0_11 = arith.constant 0 : index
    %16 = vector.load %arg6[%c0_10, %c0_11] : memref<1x8xf32, #tpu.memory_space<vmem>>, vector<1x8xf32>
    %17 = vector.broadcast %16 : vector<1x8xf32> to vector<32x8xf32>
    %18 = arith.addf %15, %17 : vector<32x8xf32>
    %c0_12 = arith.constant 0 : index
    %c0_13 = arith.constant 0 : index
    %19 = vector.load %arg7[%c0_12, %c0_13] : memref<32x8xf32, #tpu.memory_space<vmem>>, vector<32x8xf32>
    tpu.vector_store %arg7[%c0_12, %c0_13], %18 {strides = array<i32>} : memref<32x8xf32, #tpu.memory_space<vmem>>, vector<32x8xf32>,
    return
  }
  func.func @transform_0(%arg0: i32) -> (i32, i32) {
    %c0_i32 = arith.constant 0 : i32
    %c0_i32_0 = arith.constant 0 : i32
    return %arg0, %c0_i32 : i32, i32
  }
  func.func @transform_1(%arg0: i32) -> (i32, i32) {
    %c0_i32 = arith.constant 0 : i32
    %c0_i32_0 = arith.constant 0 : i32
    %c0_i32_1 = arith.constant 0 : i32
    return %c0_i32, %c0_i32_0 : i32, i32
  }
  func.func @transform_2(%arg0: i32) -> (i32, i32) {
    %c0_i32 = arith.constant 0 : i32
    %c0_i32_0 = arith.constant 0 : i32
    %c0_i32_1 = arith.constant 0 : i32
    return %c0_i32, %c0_i32_0 : i32, i32
  }
  func.func @transform_3(%arg0: i32) -> (i32, i32) {
    %c0_i32 = arith.constant 0 : i32
    %c0_i32_0 = arith.constant 0 : i32
    %c0_i32_1 = arith.constant 0 : i32
    return %c0_i32, %c0_i32_0 : i32, i32
  }
  func.func @transform_4(%arg0: i32) -> (i32, i32) {
    %c0_i32 = arith.constant 0 : i32
    %c0_i32_0 = arith.constant 0 : i32
    %c0_i32_1 = arith.constant 0 : i32
    return %c0_i32, %c0_i32_0 : i32, i32
  }
  func.func @transform_5(%arg0: i32) -> (i32, i32) {
    %c0_i32 = arith.constant 0 : i32
    %c0_i32_0 = arith.constant 0 : i32
    %c0_i32_1 = arith.constant 0 : i32
    return %c0_i32, %c0_i32_0 : i32, i32
  }
  func.func @transform_6(%arg0: i32) -> (i32, i32) {
    %c0_i32 = arith.constant 0 : i32
    %c0_i32_0 = arith.constant 0 : i32
    return %arg0, %c0_i32 : i32, i32
  }
}

module attributes {stable_mosaic.version = 11 : i64} {
  func.func @_fused_matmul_kernel(%arg0: i32, %arg1: memref<32x8xf32, #tpu.memory_space<vmem>>, %arg2: memref<8x16xf32, #tpu.memory_space<vmem>>, %arg3: memref<1x16xf32, #tpu.memory_space<vmem>>, %arg4: memref<1x16xf32, #tpu.memory_space<vmem>>, %arg5: memref<1x16xf32, #tpu.memory_space<vmem>>, %arg6: memref<32x16xf32, #tpu.memory_space<vmem>>) attributes {dimension_semantics = [#tpu.dimension_semantics<parallel>], iteration_bounds = array<i64: 1>, scalar_prefetch = 0 : i64, scratch_operands = 0 : i64, tpu.core_type = #tpu.core_type<tc>, window_params = [{transform_indices = @transform_0, window_bounds = array<i64: 32, 8>}, {pipeline_mode = #tpu.pipeline_mode<synchronous>, transform_indices = @transform_1, window_bounds = array<i64: 8, 16>}, {pipeline_mode = #tpu.pipeline_mode<synchronous>, transform_indices = @transform_2, window_bounds = array<i64: 1, 16>}, {pipeline_mode = #tpu.pipeline_mode<synchronous>, transform_indices = @transform_3, window_bounds = array<i64: 1, 16>}, {pipeline_mode = #tpu.pipeline_mode<synchronous>, transform_indices = @transform_4, window_bounds = array<i64: 1, 16>}, {transform_indices = @transform_5, window_bounds = array<i64: 32, 16>}]} {
    %c0 = arith.constant 0 : index
    %c0_0 = arith.constant 0 : index
    %0 = vector.load %arg1[%c0, %c0_0] : memref<32x8xf32, #tpu.memory_space<vmem>>, vector<32x8xf32>
    %cst = arith.constant 0.000000e+00 : f32
    %1 = vector.broadcast %cst : f32 to vector<32x8xf32>
    %2 = arith.maximumf %0, %1 : vector<32x8xf32>
    %3 = arith.truncf %2 : vector<32x8xf32> to vector<32x8xbf16>
    %c0_1 = arith.constant 0 : index
    %c0_2 = arith.constant 0 : index
    %4 = vector.load %arg2[%c0_1, %c0_2] : memref<8x16xf32, #tpu.memory_space<vmem>>, vector<8x16xf32>
    %5 = arith.truncf %4 : vector<8x16xf32> to vector<8x16xbf16>
    %cst_3 = arith.constant dense<0.000000e+00> : vector<32x16xf32>
    %6 = tpu.matmul %3, %5, %cst_3 {dimension_numbers = #tpu.dot_dimension_numbers<[1], [0], [0], [1], [0, 0, 1, 1], [], []>} : vector<32x8xbf16>, vector<8x16xbf16>, vector<32x16xf32> -> vector<32x16xf32>
    %c0_4 = arith.constant 0 : index
    %c0_5 = arith.constant 0 : index
    %7 = vector.load %arg3[%c0_4, %c0_5] : memref<1x16xf32, #tpu.memory_space<vmem>>, vector<1x16xf32>
    %8 = vector.broadcast %7 : vector<1x16xf32> to vector<32x16xf32>
    %9 = arith.addf %6, %8 : vector<32x16xf32>
    %c0_6 = arith.constant 0 : index
    %c0_7 = arith.constant 0 : index
    %10 = vector.load %arg4[%c0_6, %c0_7] : memref<1x16xf32, #tpu.memory_space<vmem>>, vector<1x16xf32>
    %11 = vector.broadcast %10 : vector<1x16xf32> to vector<32x16xf32>
    %12 = arith.mulf %9, %11 : vector<32x16xf32>
    %c0_8 = arith.constant 0 : index
    %c0_9 = arith.constant 0 : index
    %13 = vector.load %arg5[%c0_8, %c0_9] : memref<1x16xf32, #tpu.memory_space<vmem>>, vector<1x16xf32>
    %14 = vector.broadcast %13 : vector<1x16xf32> to vector<32x16xf32>
    %15 = arith.addf %12, %14 : vector<32x16xf32>
    %cst_10 = arith.constant 0.000000e+00 : f32
    %16 = vector.broadcast %cst_10 : f32 to vector<32x16xf32>
    %17 = arith.maximumf %15, %16 : vector<32x16xf32>
    %c0_11 = arith.constant 0 : index
    %c0_12 = arith.constant 0 : index
    %18 = vector.load %arg6[%c0_11, %c0_12] : memref<32x16xf32, #tpu.memory_space<vmem>>, vector<32x16xf32>
    tpu.vector_store %arg6[%c0_11, %c0_12], %17 {strides = array<i32>} : memref<32x16xf32, #tpu.memory_space<vmem>>, vector<32x16xf32>,
    return
  }
  func.func @transform_0(%arg0: i32) -> (i32, i32) {
    %c0_i32 = arith.constant 0 : i32
    %c0_i32_0 = arith.constant 0 : i32
    return %arg0, %c0_i32 : i32, i32
  }
  func.func @transform_1(%arg0: i32) -> (i32, i32) {
    %c0_i32 = arith.constant 0 : i32
    %c0_i32_0 = arith.constant 0 : i32
    %c0_i32_1 = arith.constant 0 : i32
    return %c0_i32, %c0_i32_0 : i32, i32
  }
  func.func @transform_2(%arg0: i32) -> (i32, i32) {
    %c0_i32 = arith.constant 0 : i32
    %c0_i32_0 = arith.constant 0 : i32
    %c0_i32_1 = arith.constant 0 : i32
    return %c0_i32, %c0_i32_0 : i32, i32
  }
  func.func @transform_3(%arg0: i32) -> (i32, i32) {
    %c0_i32 = arith.constant 0 : i32
    %c0_i32_0 = arith.constant 0 : i32
    %c0_i32_1 = arith.constant 0 : i32
    return %c0_i32, %c0_i32_0 : i32, i32
  }
  func.func @transform_4(%arg0: i32) -> (i32, i32) {
    %c0_i32 = arith.constant 0 : i32
    %c0_i32_0 = arith.constant 0 : i32
    %c0_i32_1 = arith.constant 0 : i32
    return %c0_i32, %c0_i32_0 : i32, i32
  }
  func.func @transform_5(%arg0: i32) -> (i32, i32) {
    %c0_i32 = arith.constant 0 : i32
    %c0_i32_0 = arith.constant 0 : i32
    return %arg0, %c0_i32 : i32, i32
  }
}

module attributes {stable_mosaic.version = 11 : i64} {
  func.func @_fused_matmul_kernel(%arg0: i32, %arg1: memref<32x144xf32, #tpu.memory_space<vmem>>, %arg2: memref<144x8xf32, #tpu.memory_space<vmem>>, %arg3: memref<1x8xf32, #tpu.memory_space<vmem>>, %arg4: memref<32x8xf32, #tpu.memory_space<vmem>>) attributes {dimension_semantics = [#tpu.dimension_semantics<parallel>], iteration_bounds = array<i64: 1>, scalar_prefetch = 0 : i64, scratch_operands = 0 : i64, tpu.core_type = #tpu.core_type<tc>, window_params = [{transform_indices = @transform_0, window_bounds = array<i64: 32, 144>}, {pipeline_mode = #tpu.pipeline_mode<synchronous>, transform_indices = @transform_1, window_bounds = array<i64: 144, 8>}, {pipeline_mode = #tpu.pipeline_mode<synchronous>, transform_indices = @transform_2, window_bounds = array<i64: 1, 8>}, {transform_indices = @transform_3, window_bounds = array<i64: 32, 8>}]} {
    %c0 = arith.constant 0 : index
    %c0_0 = arith.constant 0 : index
    %0 = vector.load %arg1[%c0, %c0_0] : memref<32x144xf32, #tpu.memory_space<vmem>>, vector<32x144xf32>
    %1 = arith.truncf %0 : vector<32x144xf32> to vector<32x144xbf16>
    %c0_1 = arith.constant 0 : index
    %c0_2 = arith.constant 0 : index
    %2 = vector.load %arg2[%c0_1, %c0_2] : memref<144x8xf32, #tpu.memory_space<vmem>>, vector<144x8xf32>
    %3 = arith.truncf %2 : vector<144x8xf32> to vector<144x8xbf16>
    %cst = arith.constant dense<0.000000e+00> : vector<32x8xf32>
    %4 = tpu.matmul %1, %3, %cst {dimension_numbers = #tpu.dot_dimension_numbers<[1], [0], [0], [1], [0, 0, 1, 1], [], []>} : vector<32x144xbf16>, vector<144x8xbf16>, vector<32x8xf32> -> vector<32x8xf32>
    %c0_3 = arith.constant 0 : index
    %c0_4 = arith.constant 0 : index
    %5 = vector.load %arg3[%c0_3, %c0_4] : memref<1x8xf32, #tpu.memory_space<vmem>>, vector<1x8xf32>
    %6 = vector.broadcast %5 : vector<1x8xf32> to vector<32x8xf32>
    %7 = arith.addf %4, %6 : vector<32x8xf32>
    %c0_5 = arith.constant 0 : index
    %c0_6 = arith.constant 0 : index
    %8 = vector.load %arg4[%c0_5, %c0_6] : memref<32x8xf32, #tpu.memory_space<vmem>>, vector<32x8xf32>
    tpu.vector_store %arg4[%c0_5, %c0_6], %7 {strides = array<i32>} : memref<32x8xf32, #tpu.memory_space<vmem>>, vector<32x8xf32>,
    return
  }
  func.func @transform_0(%arg0: i32) -> (i32, i32) {
    %c0_i32 = arith.constant 0 : i32
    %c0_i32_0 = arith.constant 0 : i32
    return %arg0, %c0_i32 : i32, i32
  }
  func.func @transform_1(%arg0: i32) -> (i32, i32) {
    %c0_i32 = arith.constant 0 : i32
    %c0_i32_0 = arith.constant 0 : i32
    %c0_i32_1 = arith.constant 0 : i32
    return %c0_i32, %c0_i32_0 : i32, i32
  }
  func.func @transform_2(%arg0: i32) -> (i32, i32) {
    %c0_i32 = arith.constant 0 : i32
    %c0_i32_0 = arith.constant 0 : i32
    %c0_i32_1 = arith.constant 0 : i32
    return %c0_i32, %c0_i32_0 : i32, i32
  }
  func.func @transform_3(%arg0: i32) -> (i32, i32) {
    %c0_i32 = arith.constant 0 : i32
    %c0_i32_0 = arith.constant 0 : i32
    return %arg0, %c0_i32 : i32, i32
  }
}

module attributes {stable_mosaic.version = 11 : i64} {
  func.func @_fused_matmul_kernel(%arg0: i32, %arg1: memref<32x16xf32, #tpu.memory_space<vmem>>, %arg2: memref<1x16xf32, #tpu.memory_space<vmem>>, %arg3: memref<1x16xf32, #tpu.memory_space<vmem>>, %arg4: memref<16x16xf32, #tpu.memory_space<vmem>>, %arg5: memref<1x16xf32, #tpu.memory_space<vmem>>, %arg6: memref<1x16xf32, #tpu.memory_space<vmem>>, %arg7: memref<1x16xf32, #tpu.memory_space<vmem>>, %arg8: memref<32x16xf32, #tpu.memory_space<vmem>>) attributes {dimension_semantics = [#tpu.dimension_semantics<parallel>], iteration_bounds = array<i64: 1>, scalar_prefetch = 0 : i64, scratch_operands = 0 : i64, tpu.core_type = #tpu.core_type<tc>, window_params = [{transform_indices = @transform_0, window_bounds = array<i64: 32, 16>}, {pipeline_mode = #tpu.pipeline_mode<synchronous>, transform_indices = @transform_1, window_bounds = array<i64: 1, 16>}, {pipeline_mode = #tpu.pipeline_mode<synchronous>, transform_indices = @transform_2, window_bounds = array<i64: 1, 16>}, {pipeline_mode = #tpu.pipeline_mode<synchronous>, transform_indices = @transform_3, window_bounds = array<i64: 16, 16>}, {pipeline_mode = #tpu.pipeline_mode<synchronous>, transform_indices = @transform_4, window_bounds = array<i64: 1, 16>}, {pipeline_mode = #tpu.pipeline_mode<synchronous>, transform_indices = @transform_5, window_bounds = array<i64: 1, 16>}, {pipeline_mode = #tpu.pipeline_mode<synchronous>, transform_indices = @transform_6, window_bounds = array<i64: 1, 16>}, {transform_indices = @transform_7, window_bounds = array<i64: 32, 16>}]} {
    %c0 = arith.constant 0 : index
    %c0_0 = arith.constant 0 : index
    %0 = vector.load %arg1[%c0, %c0_0] : memref<32x16xf32, #tpu.memory_space<vmem>>, vector<32x16xf32>
    %c0_1 = arith.constant 0 : index
    %c0_2 = arith.constant 0 : index
    %1 = vector.load %arg2[%c0_1, %c0_2] : memref<1x16xf32, #tpu.memory_space<vmem>>, vector<1x16xf32>
    %2 = vector.broadcast %1 : vector<1x16xf32> to vector<32x16xf32>
    %3 = arith.mulf %0, %2 : vector<32x16xf32>
    %c0_3 = arith.constant 0 : index
    %c0_4 = arith.constant 0 : index
    %4 = vector.load %arg3[%c0_3, %c0_4] : memref<1x16xf32, #tpu.memory_space<vmem>>, vector<1x16xf32>
    %5 = vector.broadcast %4 : vector<1x16xf32> to vector<32x16xf32>
    %6 = arith.addf %3, %5 : vector<32x16xf32>
    %cst = arith.constant 0.000000e+00 : f32
    %7 = vector.broadcast %cst : f32 to vector<32x16xf32>
    %8 = arith.maximumf %6, %7 : vector<32x16xf32>
    %9 = arith.truncf %8 : vector<32x16xf32> to vector<32x16xbf16>
    %c0_5 = arith.constant 0 : index
    %c0_6 = arith.constant 0 : index
    %10 = vector.load %arg4[%c0_5, %c0_6] : memref<16x16xf32, #tpu.memory_space<vmem>>, vector<16x16xf32>
    %11 = arith.truncf %10 : vector<16x16xf32> to vector<16x16xbf16>
    %cst_7 = arith.constant dense<0.000000e+00> : vector<32x16xf32>
    %12 = tpu.matmul %9, %11, %cst_7 {dimension_numbers = #tpu.dot_dimension_numbers<[1], [0], [0], [1], [0, 0, 1, 1], [], []>} : vector<32x16xbf16>, vector<16x16xbf16>, vector<32x16xf32> -> vector<32x16xf32>
    %c0_8 = arith.constant 0 : index
    %c0_9 = arith.constant 0 : index
    %13 = vector.load %arg5[%c0_8, %c0_9] : memref<1x16xf32, #tpu.memory_space<vmem>>, vector<1x16xf32>
    %14 = vector.broadcast %13 : vector<1x16xf32> to vector<32x16xf32>
    %15 = arith.addf %12, %14 : vector<32x16xf32>
    %c0_10 = arith.constant 0 : index
    %c0_11 = arith.constant 0 : index
    %16 = vector.load %arg6[%c0_10, %c0_11] : memref<1x16xf32, #tpu.memory_space<vmem>>, vector<1x16xf32>
    %17 = vector.broadcast %16 : vector<1x16xf32> to vector<32x16xf32>
    %18 = arith.mulf %15, %17 : vector<32x16xf32>
    %c0_12 = arith.constant 0 : index
    %c0_13 = arith.constant 0 : index
    %19 = vector.load %arg7[%c0_12, %c0_13] : memref<1x16xf32, #tpu.memory_space<vmem>>, vector<1x16xf32>
    %20 = vector.broadcast %19 : vector<1x16xf32> to vector<32x16xf32>
    %21 = arith.addf %18, %20 : vector<32x16xf32>
    %cst_14 = arith.constant 0.000000e+00 : f32
    %22 = vector.broadcast %cst_14 : f32 to vector<32x16xf32>
    %23 = arith.maximumf %21, %22 : vector<32x16xf32>
    %c0_15 = arith.constant 0 : index
    %c0_16 = arith.constant 0 : index
    %24 = vector.load %arg8[%c0_15, %c0_16] : memref<32x16xf32, #tpu.memory_space<vmem>>, vector<32x16xf32>
    tpu.vector_store %arg8[%c0_15, %c0_16], %23 {strides = array<i32>} : memref<32x16xf32, #tpu.memory_space<vmem>>, vector<32x16xf32>,
    return
  }
  func.func @transform_0(%arg0: i32) -> (i32, i32) {
    %c0_i32 = arith.constant 0 : i32
    %c0_i32_0 = arith.constant 0 : i32
    return %arg0, %c0_i32 : i32, i32
  }
  func.func @transform_1(%arg0: i32) -> (i32, i32) {
    %c0_i32 = arith.constant 0 : i32
    %c0_i32_0 = arith.constant 0 : i32
    %c0_i32_1 = arith.constant 0 : i32
    return %c0_i32, %c0_i32_0 : i32, i32
  }
  func.func @transform_2(%arg0: i32) -> (i32, i32) {
    %c0_i32 = arith.constant 0 : i32
    %c0_i32_0 = arith.constant 0 : i32
    %c0_i32_1 = arith.constant 0 : i32
    return %c0_i32, %c0_i32_0 : i32, i32
  }
  func.func @transform_3(%arg0: i32) -> (i32, i32) {
    %c0_i32 = arith.constant 0 : i32
    %c0_i32_0 = arith.constant 0 : i32
    %c0_i32_1 = arith.constant 0 : i32
    return %c0_i32, %c0_i32_0 : i32, i32
  }
  func.func @transform_4(%arg0: i32) -> (i32, i32) {
    %c0_i32 = arith.constant 0 : i32
    %c0_i32_0 = arith.constant 0 : i32
    %c0_i32_1 = arith.constant 0 : i32
    return %c0_i32, %c0_i32_0 : i32, i32
  }
  func.func @transform_5(%arg0: i32) -> (i32, i32) {
    %c0_i32 = arith.constant 0 : i32
    %c0_i32_0 = arith.constant 0 : i32
    %c0_i32_1 = arith.constant 0 : i32
    return %c0_i32, %c0_i32_0 : i32, i32
  }
  func.func @transform_6(%arg0: i32) -> (i32, i32) {
    %c0_i32 = arith.constant 0 : i32
    %c0_i32_0 = arith.constant 0 : i32
    %c0_i32_1 = arith.constant 0 : i32
    return %c0_i32, %c0_i32_0 : i32, i32
  }
  func.func @transform_7(%arg0: i32) -> (i32, i32) {
    %c0_i32 = arith.constant 0 : i32
    %c0_i32_0 = arith.constant 0 : i32
    return %arg0, %c0_i32 : i32, i32
  }
}

module attributes {stable_mosaic.version = 11 : i64} {
  func.func @_fused_matmul_kernel(%arg0: i32, %arg1: memref<32x16xf32, #tpu.memory_space<vmem>>, %arg2: memref<16x8xf32, #tpu.memory_space<vmem>>, %arg3: memref<1x8xf32, #tpu.memory_space<vmem>>, %arg4: memref<32x8xf32, #tpu.memory_space<vmem>>) attributes {dimension_semantics = [#tpu.dimension_semantics<parallel>], iteration_bounds = array<i64: 1>, scalar_prefetch = 0 : i64, scratch_operands = 0 : i64, tpu.core_type = #tpu.core_type<tc>, window_params = [{transform_indices = @transform_0, window_bounds = array<i64: 32, 16>}, {pipeline_mode = #tpu.pipeline_mode<synchronous>, transform_indices = @transform_1, window_bounds = array<i64: 16, 8>}, {pipeline_mode = #tpu.pipeline_mode<synchronous>, transform_indices = @transform_2, window_bounds = array<i64: 1, 8>}, {transform_indices = @transform_3, window_bounds = array<i64: 32, 8>}]} {
    %c0 = arith.constant 0 : index
    %c0_0 = arith.constant 0 : index
    %0 = vector.load %arg1[%c0, %c0_0] : memref<32x16xf32, #tpu.memory_space<vmem>>, vector<32x16xf32>
    %1 = arith.truncf %0 : vector<32x16xf32> to vector<32x16xbf16>
    %c0_1 = arith.constant 0 : index
    %c0_2 = arith.constant 0 : index
    %2 = vector.load %arg2[%c0_1, %c0_2] : memref<16x8xf32, #tpu.memory_space<vmem>>, vector<16x8xf32>
    %3 = arith.truncf %2 : vector<16x8xf32> to vector<16x8xbf16>
    %cst = arith.constant dense<0.000000e+00> : vector<32x8xf32>
    %4 = tpu.matmul %1, %3, %cst {dimension_numbers = #tpu.dot_dimension_numbers<[1], [0], [0], [1], [0, 0, 1, 1], [], []>} : vector<32x16xbf16>, vector<16x8xbf16>, vector<32x8xf32> -> vector<32x8xf32>
    %c0_3 = arith.constant 0 : index
    %c0_4 = arith.constant 0 : index
    %5 = vector.load %arg3[%c0_3, %c0_4] : memref<1x8xf32, #tpu.memory_space<vmem>>, vector<1x8xf32>
    %6 = vector.broadcast %5 : vector<1x8xf32> to vector<32x8xf32>
    %7 = arith.addf %4, %6 : vector<32x8xf32>
    %c0_5 = arith.constant 0 : index
    %c0_6 = arith.constant 0 : index
    %8 = vector.load %arg4[%c0_5, %c0_6] : memref<32x8xf32, #tpu.memory_space<vmem>>, vector<32x8xf32>
    tpu.vector_store %arg4[%c0_5, %c0_6], %7 {strides = array<i32>} : memref<32x8xf32, #tpu.memory_space<vmem>>, vector<32x8xf32>,
    return
  }
  func.func @transform_0(%arg0: i32) -> (i32, i32) {
    %c0_i32 = arith.constant 0 : i32
    %c0_i32_0 = arith.constant 0 : i32
    return %arg0, %c0_i32 : i32, i32
  }
  func.func @transform_1(%arg0: i32) -> (i32, i32) {
    %c0_i32 = arith.constant 0 : i32
    %c0_i32_0 = arith.constant 0 : i32
    %c0_i32_1 = arith.constant 0 : i32
    return %c0_i32, %c0_i32_0 : i32, i32
  }
  func.func @transform_2(%arg0: i32) -> (i32, i32) {
    %c0_i32 = arith.constant 0 : i32
    %c0_i32_0 = arith.constant 0 : i32
    %c0_i32_1 = arith.constant 0 : i32
    return %c0_i32, %c0_i32_0 : i32, i32
  }
  func.func @transform_3(%arg0: i32) -> (i32, i32) {
    %c0_i32 = arith.constant 0 : i32
    %c0_i32_0 = arith.constant 0 : i32
    return %arg0, %c0_i32 : i32, i32
  }
}

module attributes {stable_mosaic.version = 11 : i64} {
  func.func @_fused_matmul_kernel(%arg0: i32, %arg1: memref<32x24xf32, #tpu.memory_space<vmem>>, %arg2: memref<1x24xf32, #tpu.memory_space<vmem>>, %arg3: memref<1x24xf32, #tpu.memory_space<vmem>>, %arg4: memref<24x16xf32, #tpu.memory_space<vmem>>, %arg5: memref<1x16xf32, #tpu.memory_space<vmem>>, %arg6: memref<1x16xf32, #tpu.memory_space<vmem>>, %arg7: memref<1x16xf32, #tpu.memory_space<vmem>>, %arg8: memref<32x16xf32, #tpu.memory_space<vmem>>) attributes {dimension_semantics = [#tpu.dimension_semantics<parallel>], iteration_bounds = array<i64: 1>, scalar_prefetch = 0 : i64, scratch_operands = 0 : i64, tpu.core_type = #tpu.core_type<tc>, window_params = [{transform_indices = @transform_0, window_bounds = array<i64: 32, 24>}, {pipeline_mode = #tpu.pipeline_mode<synchronous>, transform_indices = @transform_1, window_bounds = array<i64: 1, 24>}, {pipeline_mode = #tpu.pipeline_mode<synchronous>, transform_indices = @transform_2, window_bounds = array<i64: 1, 24>}, {pipeline_mode = #tpu.pipeline_mode<synchronous>, transform_indices = @transform_3, window_bounds = array<i64: 24, 16>}, {pipeline_mode = #tpu.pipeline_mode<synchronous>, transform_indices = @transform_4, window_bounds = array<i64: 1, 16>}, {pipeline_mode = #tpu.pipeline_mode<synchronous>, transform_indices = @transform_5, window_bounds = array<i64: 1, 16>}, {pipeline_mode = #tpu.pipeline_mode<synchronous>, transform_indices = @transform_6, window_bounds = array<i64: 1, 16>}, {transform_indices = @transform_7, window_bounds = array<i64: 32, 16>}]} {
    %c0 = arith.constant 0 : index
    %c0_0 = arith.constant 0 : index
    %0 = vector.load %arg1[%c0, %c0_0] : memref<32x24xf32, #tpu.memory_space<vmem>>, vector<32x24xf32>
    %c0_1 = arith.constant 0 : index
    %c0_2 = arith.constant 0 : index
    %1 = vector.load %arg2[%c0_1, %c0_2] : memref<1x24xf32, #tpu.memory_space<vmem>>, vector<1x24xf32>
    %2 = vector.broadcast %1 : vector<1x24xf32> to vector<32x24xf32>
    %3 = arith.mulf %0, %2 : vector<32x24xf32>
    %c0_3 = arith.constant 0 : index
    %c0_4 = arith.constant 0 : index
    %4 = vector.load %arg3[%c0_3, %c0_4] : memref<1x24xf32, #tpu.memory_space<vmem>>, vector<1x24xf32>
    %5 = vector.broadcast %4 : vector<1x24xf32> to vector<32x24xf32>
    %6 = arith.addf %3, %5 : vector<32x24xf32>
    %cst = arith.constant 0.000000e+00 : f32
    %7 = vector.broadcast %cst : f32 to vector<32x24xf32>
    %8 = arith.maximumf %6, %7 : vector<32x24xf32>
    %9 = arith.truncf %8 : vector<32x24xf32> to vector<32x24xbf16>
    %c0_5 = arith.constant 0 : index
    %c0_6 = arith.constant 0 : index
    %10 = vector.load %arg4[%c0_5, %c0_6] : memref<24x16xf32, #tpu.memory_space<vmem>>, vector<24x16xf32>
    %11 = arith.truncf %10 : vector<24x16xf32> to vector<24x16xbf16>
    %cst_7 = arith.constant dense<0.000000e+00> : vector<32x16xf32>
    %12 = tpu.matmul %9, %11, %cst_7 {dimension_numbers = #tpu.dot_dimension_numbers<[1], [0], [0], [1], [0, 0, 1, 1], [], []>} : vector<32x24xbf16>, vector<24x16xbf16>, vector<32x16xf32> -> vector<32x16xf32>
    %c0_8 = arith.constant 0 : index
    %c0_9 = arith.constant 0 : index
    %13 = vector.load %arg5[%c0_8, %c0_9] : memref<1x16xf32, #tpu.memory_space<vmem>>, vector<1x16xf32>
    %14 = vector.broadcast %13 : vector<1x16xf32> to vector<32x16xf32>
    %15 = arith.addf %12, %14 : vector<32x16xf32>
    %c0_10 = arith.constant 0 : index
    %c0_11 = arith.constant 0 : index
    %16 = vector.load %arg6[%c0_10, %c0_11] : memref<1x16xf32, #tpu.memory_space<vmem>>, vector<1x16xf32>
    %17 = vector.broadcast %16 : vector<1x16xf32> to vector<32x16xf32>
    %18 = arith.mulf %15, %17 : vector<32x16xf32>
    %c0_12 = arith.constant 0 : index
    %c0_13 = arith.constant 0 : index
    %19 = vector.load %arg7[%c0_12, %c0_13] : memref<1x16xf32, #tpu.memory_space<vmem>>, vector<1x16xf32>
    %20 = vector.broadcast %19 : vector<1x16xf32> to vector<32x16xf32>
    %21 = arith.addf %18, %20 : vector<32x16xf32>
    %cst_14 = arith.constant 0.000000e+00 : f32
    %22 = vector.broadcast %cst_14 : f32 to vector<32x16xf32>
    %23 = arith.maximumf %21, %22 : vector<32x16xf32>
    %c0_15 = arith.constant 0 : index
    %c0_16 = arith.constant 0 : index
    %24 = vector.load %arg8[%c0_15, %c0_16] : memref<32x16xf32, #tpu.memory_space<vmem>>, vector<32x16xf32>
    tpu.vector_store %arg8[%c0_15, %c0_16], %23 {strides = array<i32>} : memref<32x16xf32, #tpu.memory_space<vmem>>, vector<32x16xf32>,
    return
  }
  func.func @transform_0(%arg0: i32) -> (i32, i32) {
    %c0_i32 = arith.constant 0 : i32
    %c0_i32_0 = arith.constant 0 : i32
    return %arg0, %c0_i32 : i32, i32
  }
  func.func @transform_1(%arg0: i32) -> (i32, i32) {
    %c0_i32 = arith.constant 0 : i32
    %c0_i32_0 = arith.constant 0 : i32
    %c0_i32_1 = arith.constant 0 : i32
    return %c0_i32, %c0_i32_0 : i32, i32
  }
  func.func @transform_2(%arg0: i32) -> (i32, i32) {
    %c0_i32 = arith.constant 0 : i32
    %c0_i32_0 = arith.constant 0 : i32
    %c0_i32_1 = arith.constant 0 : i32
    return %c0_i32, %c0_i32_0 : i32, i32
  }
  func.func @transform_3(%arg0: i32) -> (i32, i32) {
    %c0_i32 = arith.constant 0 : i32
    %c0_i32_0 = arith.constant 0 : i32
    %c0_i32_1 = arith.constant 0 : i32
    return %c0_i32, %c0_i32_0 : i32, i32
  }
  func.func @transform_4(%arg0: i32) -> (i32, i32) {
    %c0_i32 = arith.constant 0 : i32
    %c0_i32_0 = arith.constant 0 : i32
    %c0_i32_1 = arith.constant 0 : i32
    return %c0_i32, %c0_i32_0 : i32, i32
  }
  func.func @transform_5(%arg0: i32) -> (i32, i32) {
    %c0_i32 = arith.constant 0 : i32
    %c0_i32_0 = arith.constant 0 : i32
    %c0_i32_1 = arith.constant 0 : i32
    return %c0_i32, %c0_i32_0 : i32, i32
  }
  func.func @transform_6(%arg0: i32) -> (i32, i32) {
    %c0_i32 = arith.constant 0 : i32
    %c0_i32_0 = arith.constant 0 : i32
    %c0_i32_1 = arith.constant 0 : i32
    return %c0_i32, %c0_i32_0 : i32, i32
  }
  func.func @transform_7(%arg0: i32) -> (i32, i32) {
    %c0_i32 = arith.constant 0 : i32
    %c0_i32_0 = arith.constant 0 : i32
    return %arg0, %c0_i32 : i32, i32
  }
}

module attributes {stable_mosaic.version = 11 : i64} {
  func.func @_fused_matmul_kernel(%arg0: i32, %arg1: memref<32x32xf32, #tpu.memory_space<vmem>>, %arg2: memref<1x32xf32, #tpu.memory_space<vmem>>, %arg3: memref<1x32xf32, #tpu.memory_space<vmem>>, %arg4: memref<32x16xf32, #tpu.memory_space<vmem>>, %arg5: memref<1x16xf32, #tpu.memory_space<vmem>>, %arg6: memref<1x16xf32, #tpu.memory_space<vmem>>, %arg7: memref<1x16xf32, #tpu.memory_space<vmem>>, %arg8: memref<32x16xf32, #tpu.memory_space<vmem>>) attributes {dimension_semantics = [#tpu.dimension_semantics<parallel>], iteration_bounds = array<i64: 1>, scalar_prefetch = 0 : i64, scratch_operands = 0 : i64, tpu.core_type = #tpu.core_type<tc>, window_params = [{transform_indices = @transform_0, window_bounds = array<i64: 32, 32>}, {pipeline_mode = #tpu.pipeline_mode<synchronous>, transform_indices = @transform_1, window_bounds = array<i64: 1, 32>}, {pipeline_mode = #tpu.pipeline_mode<synchronous>, transform_indices = @transform_2, window_bounds = array<i64: 1, 32>}, {pipeline_mode = #tpu.pipeline_mode<synchronous>, transform_indices = @transform_3, window_bounds = array<i64: 32, 16>}, {pipeline_mode = #tpu.pipeline_mode<synchronous>, transform_indices = @transform_4, window_bounds = array<i64: 1, 16>}, {pipeline_mode = #tpu.pipeline_mode<synchronous>, transform_indices = @transform_5, window_bounds = array<i64: 1, 16>}, {pipeline_mode = #tpu.pipeline_mode<synchronous>, transform_indices = @transform_6, window_bounds = array<i64: 1, 16>}, {transform_indices = @transform_7, window_bounds = array<i64: 32, 16>}]} {
    %c0 = arith.constant 0 : index
    %c0_0 = arith.constant 0 : index
    %0 = vector.load %arg1[%c0, %c0_0] : memref<32x32xf32, #tpu.memory_space<vmem>>, vector<32x32xf32>
    %c0_1 = arith.constant 0 : index
    %c0_2 = arith.constant 0 : index
    %1 = vector.load %arg2[%c0_1, %c0_2] : memref<1x32xf32, #tpu.memory_space<vmem>>, vector<1x32xf32>
    %2 = vector.broadcast %1 : vector<1x32xf32> to vector<32x32xf32>
    %3 = arith.mulf %0, %2 : vector<32x32xf32>
    %c0_3 = arith.constant 0 : index
    %c0_4 = arith.constant 0 : index
    %4 = vector.load %arg3[%c0_3, %c0_4] : memref<1x32xf32, #tpu.memory_space<vmem>>, vector<1x32xf32>
    %5 = vector.broadcast %4 : vector<1x32xf32> to vector<32x32xf32>
    %6 = arith.addf %3, %5 : vector<32x32xf32>
    %cst = arith.constant 0.000000e+00 : f32
    %7 = vector.broadcast %cst : f32 to vector<32x32xf32>
    %8 = arith.maximumf %6, %7 : vector<32x32xf32>
    %9 = arith.truncf %8 : vector<32x32xf32> to vector<32x32xbf16>
    %c0_5 = arith.constant 0 : index
    %c0_6 = arith.constant 0 : index
    %10 = vector.load %arg4[%c0_5, %c0_6] : memref<32x16xf32, #tpu.memory_space<vmem>>, vector<32x16xf32>
    %11 = arith.truncf %10 : vector<32x16xf32> to vector<32x16xbf16>
    %cst_7 = arith.constant dense<0.000000e+00> : vector<32x16xf32>
    %12 = tpu.matmul %9, %11, %cst_7 {dimension_numbers = #tpu.dot_dimension_numbers<[1], [0], [0], [1], [0, 0, 1, 1], [], []>} : vector<32x32xbf16>, vector<32x16xbf16>, vector<32x16xf32> -> vector<32x16xf32>
    %c0_8 = arith.constant 0 : index
    %c0_9 = arith.constant 0 : index
    %13 = vector.load %arg5[%c0_8, %c0_9] : memref<1x16xf32, #tpu.memory_space<vmem>>, vector<1x16xf32>
    %14 = vector.broadcast %13 : vector<1x16xf32> to vector<32x16xf32>
    %15 = arith.addf %12, %14 : vector<32x16xf32>
    %c0_10 = arith.constant 0 : index
    %c0_11 = arith.constant 0 : index
    %16 = vector.load %arg6[%c0_10, %c0_11] : memref<1x16xf32, #tpu.memory_space<vmem>>, vector<1x16xf32>
    %17 = vector.broadcast %16 : vector<1x16xf32> to vector<32x16xf32>
    %18 = arith.mulf %15, %17 : vector<32x16xf32>
    %c0_12 = arith.constant 0 : index
    %c0_13 = arith.constant 0 : index
    %19 = vector.load %arg7[%c0_12, %c0_13] : memref<1x16xf32, #tpu.memory_space<vmem>>, vector<1x16xf32>
    %20 = vector.broadcast %19 : vector<1x16xf32> to vector<32x16xf32>
    %21 = arith.addf %18, %20 : vector<32x16xf32>
    %cst_14 = arith.constant 0.000000e+00 : f32
    %22 = vector.broadcast %cst_14 : f32 to vector<32x16xf32>
    %23 = arith.maximumf %21, %22 : vector<32x16xf32>
    %c0_15 = arith.constant 0 : index
    %c0_16 = arith.constant 0 : index
    %24 = vector.load %arg8[%c0_15, %c0_16] : memref<32x16xf32, #tpu.memory_space<vmem>>, vector<32x16xf32>
    tpu.vector_store %arg8[%c0_15, %c0_16], %23 {strides = array<i32>} : memref<32x16xf32, #tpu.memory_space<vmem>>, vector<32x16xf32>,
    return
  }
  func.func @transform_0(%arg0: i32) -> (i32, i32) {
    %c0_i32 = arith.constant 0 : i32
    %c0_i32_0 = arith.constant 0 : i32
    return %arg0, %c0_i32 : i32, i32
  }
  func.func @transform_1(%arg0: i32) -> (i32, i32) {
    %c0_i32 = arith.constant 0 : i32
    %c0_i32_0 = arith.constant 0 : i32
    %c0_i32_1 = arith.constant 0 : i32
    return %c0_i32, %c0_i32_0 : i32, i32
  }
  func.func @transform_2(%arg0: i32) -> (i32, i32) {
    %c0_i32 = arith.constant 0 : i32
    %c0_i32_0 = arith.constant 0 : i32
    %c0_i32_1 = arith.constant 0 : i32
    return %c0_i32, %c0_i32_0 : i32, i32
  }
  func.func @transform_3(%arg0: i32) -> (i32, i32) {
    %c0_i32 = arith.constant 0 : i32
    %c0_i32_0 = arith.constant 0 : i32
    %c0_i32_1 = arith.constant 0 : i32
    return %c0_i32, %c0_i32_0 : i32, i32
  }
  func.func @transform_4(%arg0: i32) -> (i32, i32) {
    %c0_i32 = arith.constant 0 : i32
    %c0_i32_0 = arith.constant 0 : i32
    %c0_i32_1 = arith.constant 0 : i32
    return %c0_i32, %c0_i32_0 : i32, i32
  }
  func.func @transform_5(%arg0: i32) -> (i32, i32) {
    %c0_i32 = arith.constant 0 : i32
    %c0_i32_0 = arith.constant 0 : i32
    %c0_i32_1 = arith.constant 0 : i32
    return %c0_i32, %c0_i32_0 : i32, i32
  }
  func.func @transform_6(%arg0: i32) -> (i32, i32) {
    %c0_i32 = arith.constant 0 : i32
    %c0_i32_0 = arith.constant 0 : i32
    %c0_i32_1 = arith.constant 0 : i32
    return %c0_i32, %c0_i32_0 : i32, i32
  }
  func.func @transform_7(%arg0: i32) -> (i32, i32) {
    %c0_i32 = arith.constant 0 : i32
    %c0_i32_0 = arith.constant 0 : i32
    return %arg0, %c0_i32 : i32, i32
  }
}

module attributes {stable_mosaic.version = 11 : i64} {
  func.func @_fused_matmul_kernel(%arg0: i32, %arg1: memref<32x40xf32, #tpu.memory_space<vmem>>, %arg2: memref<1x40xf32, #tpu.memory_space<vmem>>, %arg3: memref<1x40xf32, #tpu.memory_space<vmem>>, %arg4: memref<40x16xf32, #tpu.memory_space<vmem>>, %arg5: memref<1x16xf32, #tpu.memory_space<vmem>>, %arg6: memref<1x16xf32, #tpu.memory_space<vmem>>, %arg7: memref<1x16xf32, #tpu.memory_space<vmem>>, %arg8: memref<32x16xf32, #tpu.memory_space<vmem>>) attributes {dimension_semantics = [#tpu.dimension_semantics<parallel>], iteration_bounds = array<i64: 1>, scalar_prefetch = 0 : i64, scratch_operands = 0 : i64, tpu.core_type = #tpu.core_type<tc>, window_params = [{transform_indices = @transform_0, window_bounds = array<i64: 32, 40>}, {pipeline_mode = #tpu.pipeline_mode<synchronous>, transform_indices = @transform_1, window_bounds = array<i64: 1, 40>}, {pipeline_mode = #tpu.pipeline_mode<synchronous>, transform_indices = @transform_2, window_bounds = array<i64: 1, 40>}, {pipeline_mode = #tpu.pipeline_mode<synchronous>, transform_indices = @transform_3, window_bounds = array<i64: 40, 16>}, {pipeline_mode = #tpu.pipeline_mode<synchronous>, transform_indices = @transform_4, window_bounds = array<i64: 1, 16>}, {pipeline_mode = #tpu.pipeline_mode<synchronous>, transform_indices = @transform_5, window_bounds = array<i64: 1, 16>}, {pipeline_mode = #tpu.pipeline_mode<synchronous>, transform_indices = @transform_6, window_bounds = array<i64: 1, 16>}, {transform_indices = @transform_7, window_bounds = array<i64: 32, 16>}]} {
    %c0 = arith.constant 0 : index
    %c0_0 = arith.constant 0 : index
    %0 = vector.load %arg1[%c0, %c0_0] : memref<32x40xf32, #tpu.memory_space<vmem>>, vector<32x40xf32>
    %c0_1 = arith.constant 0 : index
    %c0_2 = arith.constant 0 : index
    %1 = vector.load %arg2[%c0_1, %c0_2] : memref<1x40xf32, #tpu.memory_space<vmem>>, vector<1x40xf32>
    %2 = vector.broadcast %1 : vector<1x40xf32> to vector<32x40xf32>
    %3 = arith.mulf %0, %2 : vector<32x40xf32>
    %c0_3 = arith.constant 0 : index
    %c0_4 = arith.constant 0 : index
    %4 = vector.load %arg3[%c0_3, %c0_4] : memref<1x40xf32, #tpu.memory_space<vmem>>, vector<1x40xf32>
    %5 = vector.broadcast %4 : vector<1x40xf32> to vector<32x40xf32>
    %6 = arith.addf %3, %5 : vector<32x40xf32>
    %cst = arith.constant 0.000000e+00 : f32
    %7 = vector.broadcast %cst : f32 to vector<32x40xf32>
    %8 = arith.maximumf %6, %7 : vector<32x40xf32>
    %9 = arith.truncf %8 : vector<32x40xf32> to vector<32x40xbf16>
    %c0_5 = arith.constant 0 : index
    %c0_6 = arith.constant 0 : index
    %10 = vector.load %arg4[%c0_5, %c0_6] : memref<40x16xf32, #tpu.memory_space<vmem>>, vector<40x16xf32>
    %11 = arith.truncf %10 : vector<40x16xf32> to vector<40x16xbf16>
    %cst_7 = arith.constant dense<0.000000e+00> : vector<32x16xf32>
    %12 = tpu.matmul %9, %11, %cst_7 {dimension_numbers = #tpu.dot_dimension_numbers<[1], [0], [0], [1], [0, 0, 1, 1], [], []>} : vector<32x40xbf16>, vector<40x16xbf16>, vector<32x16xf32> -> vector<32x16xf32>
    %c0_8 = arith.constant 0 : index
    %c0_9 = arith.constant 0 : index
    %13 = vector.load %arg5[%c0_8, %c0_9] : memref<1x16xf32, #tpu.memory_space<vmem>>, vector<1x16xf32>
    %14 = vector.broadcast %13 : vector<1x16xf32> to vector<32x16xf32>
    %15 = arith.addf %12, %14 : vector<32x16xf32>
    %c0_10 = arith.constant 0 : index
    %c0_11 = arith.constant 0 : index
    %16 = vector.load %arg6[%c0_10, %c0_11] : memref<1x16xf32, #tpu.memory_space<vmem>>, vector<1x16xf32>
    %17 = vector.broadcast %16 : vector<1x16xf32> to vector<32x16xf32>
    %18 = arith.mulf %15, %17 : vector<32x16xf32>
    %c0_12 = arith.constant 0 : index
    %c0_13 = arith.constant 0 : index
    %19 = vector.load %arg7[%c0_12, %c0_13] : memref<1x16xf32, #tpu.memory_space<vmem>>, vector<1x16xf32>
    %20 = vector.broadcast %19 : vector<1x16xf32> to vector<32x16xf32>
    %21 = arith.addf %18, %20 : vector<32x16xf32>
    %cst_14 = arith.constant 0.000000e+00 : f32
    %22 = vector.broadcast %cst_14 : f32 to vector<32x16xf32>
    %23 = arith.maximumf %21, %22 : vector<32x16xf32>
    %c0_15 = arith.constant 0 : index
    %c0_16 = arith.constant 0 : index
    %24 = vector.load %arg8[%c0_15, %c0_16] : memref<32x16xf32, #tpu.memory_space<vmem>>, vector<32x16xf32>
    tpu.vector_store %arg8[%c0_15, %c0_16], %23 {strides = array<i32>} : memref<32x16xf32, #tpu.memory_space<vmem>>, vector<32x16xf32>,
    return
  }
  func.func @transform_0(%arg0: i32) -> (i32, i32) {
    %c0_i32 = arith.constant 0 : i32
    %c0_i32_0 = arith.constant 0 : i32
    return %arg0, %c0_i32 : i32, i32
  }
  func.func @transform_1(%arg0: i32) -> (i32, i32) {
    %c0_i32 = arith.constant 0 : i32
    %c0_i32_0 = arith.constant 0 : i32
    %c0_i32_1 = arith.constant 0 : i32
    return %c0_i32, %c0_i32_0 : i32, i32
  }
  func.func @transform_2(%arg0: i32) -> (i32, i32) {
    %c0_i32 = arith.constant 0 : i32
    %c0_i32_0 = arith.constant 0 : i32
    %c0_i32_1 = arith.constant 0 : i32
    return %c0_i32, %c0_i32_0 : i32, i32
  }
  func.func @transform_3(%arg0: i32) -> (i32, i32) {
    %c0_i32 = arith.constant 0 : i32
    %c0_i32_0 = arith.constant 0 : i32
    %c0_i32_1 = arith.constant 0 : i32
    return %c0_i32, %c0_i32_0 : i32, i32
  }
  func.func @transform_4(%arg0: i32) -> (i32, i32) {
    %c0_i32 = arith.constant 0 : i32
    %c0_i32_0 = arith.constant 0 : i32
    %c0_i32_1 = arith.constant 0 : i32
    return %c0_i32, %c0_i32_0 : i32, i32
  }
  func.func @transform_5(%arg0: i32) -> (i32, i32) {
    %c0_i32 = arith.constant 0 : i32
    %c0_i32_0 = arith.constant 0 : i32
    %c0_i32_1 = arith.constant 0 : i32
    return %c0_i32, %c0_i32_0 : i32, i32
  }
  func.func @transform_6(%arg0: i32) -> (i32, i32) {
    %c0_i32 = arith.constant 0 : i32
    %c0_i32_0 = arith.constant 0 : i32
    %c0_i32_1 = arith.constant 0 : i32
    return %c0_i32, %c0_i32_0 : i32, i32
  }
  func.func @transform_7(%arg0: i32) -> (i32, i32) {
    %c0_i32 = arith.constant 0 : i32
    %c0_i32_0 = arith.constant 0 : i32
    return %arg0, %c0_i32 : i32, i32
  }
}

module attributes {stable_mosaic.version = 11 : i64} {
  func.func @_fused_matmul_kernel(%arg0: i32, %arg1: memref<32x48xf32, #tpu.memory_space<vmem>>, %arg2: memref<48x8xf32, #tpu.memory_space<vmem>>, %arg3: memref<1x8xf32, #tpu.memory_space<vmem>>, %arg4: memref<32x8xf32, #tpu.memory_space<vmem>>) attributes {dimension_semantics = [#tpu.dimension_semantics<parallel>], iteration_bounds = array<i64: 1>, scalar_prefetch = 0 : i64, scratch_operands = 0 : i64, tpu.core_type = #tpu.core_type<tc>, window_params = [{transform_indices = @transform_0, window_bounds = array<i64: 32, 48>}, {pipeline_mode = #tpu.pipeline_mode<synchronous>, transform_indices = @transform_1, window_bounds = array<i64: 48, 8>}, {pipeline_mode = #tpu.pipeline_mode<synchronous>, transform_indices = @transform_2, window_bounds = array<i64: 1, 8>}, {transform_indices = @transform_3, window_bounds = array<i64: 32, 8>}]} {
    %c0 = arith.constant 0 : index
    %c0_0 = arith.constant 0 : index
    %0 = vector.load %arg1[%c0, %c0_0] : memref<32x48xf32, #tpu.memory_space<vmem>>, vector<32x48xf32>
    %1 = arith.truncf %0 : vector<32x48xf32> to vector<32x48xbf16>
    %c0_1 = arith.constant 0 : index
    %c0_2 = arith.constant 0 : index
    %2 = vector.load %arg2[%c0_1, %c0_2] : memref<48x8xf32, #tpu.memory_space<vmem>>, vector<48x8xf32>
    %3 = arith.truncf %2 : vector<48x8xf32> to vector<48x8xbf16>
    %cst = arith.constant dense<0.000000e+00> : vector<32x8xf32>
    %4 = tpu.matmul %1, %3, %cst {dimension_numbers = #tpu.dot_dimension_numbers<[1], [0], [0], [1], [0, 0, 1, 1], [], []>} : vector<32x48xbf16>, vector<48x8xbf16>, vector<32x8xf32> -> vector<32x8xf32>
    %c0_3 = arith.constant 0 : index
    %c0_4 = arith.constant 0 : index
    %5 = vector.load %arg3[%c0_3, %c0_4] : memref<1x8xf32, #tpu.memory_space<vmem>>, vector<1x8xf32>
    %6 = vector.broadcast %5 : vector<1x8xf32> to vector<32x8xf32>
    %7 = arith.addf %4, %6 : vector<32x8xf32>
    %c0_5 = arith.constant 0 : index
    %c0_6 = arith.constant 0 : index
    %8 = vector.load %arg4[%c0_5, %c0_6] : memref<32x8xf32, #tpu.memory_space<vmem>>, vector<32x8xf32>
    tpu.vector_store %arg4[%c0_5, %c0_6], %7 {strides = array<i32>} : memref<32x8xf32, #tpu.memory_space<vmem>>, vector<32x8xf32>,
    return
  }
  func.func @transform_0(%arg0: i32) -> (i32, i32) {
    %c0_i32 = arith.constant 0 : i32
    %c0_i32_0 = arith.constant 0 : i32
    return %arg0, %c0_i32 : i32, i32
  }
  func.func @transform_1(%arg0: i32) -> (i32, i32) {
    %c0_i32 = arith.constant 0 : i32
    %c0_i32_0 = arith.constant 0 : i32
    %c0_i32_1 = arith.constant 0 : i32
    return %c0_i32, %c0_i32_0 : i32, i32
  }
  func.func @transform_2(%arg0: i32) -> (i32, i32) {
    %c0_i32 = arith.constant 0 : i32
    %c0_i32_0 = arith.constant 0 : i32
    %c0_i32_1 = arith.constant 0 : i32
    return %c0_i32, %c0_i32_0 : i32, i32
  }
  func.func @transform_3(%arg0: i32) -> (i32, i32) {
    %c0_i32 = arith.constant 0 : i32
    %c0_i32_0 = arith.constant 0 : i32
    return %arg0, %c0_i32 : i32, i32
  }
}

</mosaic_0001>

<llo_original>
// kernel: forward.33
$region0: #{forward.33}
  #allocation0 [shape = 'u32[]', space=smem, size = 0x4, offset = 0x4, fixed_abs, tag = 'smem constant byte address 0x4 - core index']
  #allocation1 [shape = 'u32[144,128]{1,0:T(1,128)}', space=vmem, size = 0x12000, scoped, tag = 'internal scratch']
  %s0 = inlined_call_operand.vmem [shape: f32[128,8], index: 0, kind: input, shape index: {}]
  %s1 = inlined_call_operand.vmem [shape: f32[1,8], index: 1, kind: input, shape index: {}]
  %s2 = inlined_call_operand.vmem [shape: f32[1,8], index: 2, kind: input, shape index: {}]
  %s3 = inlined_call_operand.vmem [shape: f32[8,8], index: 3, kind: input, shape index: {}]
  %s4 = inlined_call_operand.vmem [shape: f32[1,8], index: 4, kind: input, shape index: {}]
  %s5 = inlined_call_operand.vmem [shape: f32[1,8], index: 5, kind: input, shape index: {}]
  %s6 = inlined_call_operand.vmem [shape: f32[128,8], index: 6, kind: output, shape index: {}]
  %s7 = sld [smem:[#allocation0]]
  $region34: #{forward.33} parent=0
    _
  %s9 = ssub.s32 1, %s7
  %s10 = scalar_select 0, %s9, %s7
  // Predicated region
  $region2: #{forward.33} parent=0 // pred_check
    _
  $region3: #{forward.33} parent=0 // pred_check_branch
    %12 = sbr.rel (0) target = $region5
  $region4: #{forward.33} parent=0 // pred_region
    _
  $region5: #{forward.33} parent=0 // pred_fallthru
    _
  // Predicated region
  $region6: #{forward.33} parent=0 // pred_check
    _
  $region7: #{forward.33} parent=0 // pred_check_branch
    %14 = sbr.rel (0) target = $region9
  $region8: #{forward.33} parent=0 // pred_region
    _
  $region9: #{forward.33} parent=0 // pred_fallthru
    _
  // Predicated region
  $region10: #{forward.33} parent=0 // pred_check
    _
  $region11: #{forward.33} parent=0 // pred_check_branch
    %16 = sbr.rel (0) target = $region13
  $region12: #{forward.33} parent=0 // pred_region
    _
  $region13: #{forward.33} parent=0 // pred_fallthru
    _
  // Predicated region
  $region14: #{forward.33} parent=0 // pred_check
    _
  $region15: #{forward.33} parent=0 // pred_check_branch
    %18 = sbr.rel (0) target = $region17
  $region16: #{forward.33} parent=0 // pred_region
    _
  $region17: #{forward.33} parent=0 // pred_fallthru
    _
  // Predicated region
  $region18: #{forward.33} parent=0 // pred_check
    _
  $region19: #{forward.33} parent=0 // pred_check_branch
    %20 = sbr.rel (0) target = $region21
  $region20: #{forward.33} parent=0 // pred_region
    _
  $region21: #{forward.33} parent=0 // pred_fallthru
    _
  // Predicated region
  $region22: #{forward.33} parent=0 // pred_check
    _
  $region23: #{forward.33} parent=0 // pred_check_branch
    %22 = sbr.rel (0) target = $region25
  $region24: #{forward.33} parent=0 // pred_region
    _
  $region25: #{forward.33} parent=0 // pred_fallthru
    _
  %v24 = vld [vmem:[%s0] sm:$0xff]
  %v25 = vld [vmem:[%s0 + $0x8] sm:$0xff]
  %v26 = vld [vmem:[%s0 + $0x10] sm:$0xff]
  %v27 = vld [vmem:[%s0 + $0x18] sm:$0xff]
  %v28 = vld [vmem:[%s0 + $0x20] sm:$0xff]
  %v29 = vld [vmem:[%s0 + $0x28] sm:$0xff]
  %v30 = vld [vmem:[%s0 + $0x30] sm:$0xff]
  %v31 = vld [vmem:[%s0 + $0x38] sm:$0xff]
  %v32 = vld [vmem:[%s0 + $0x40] sm:$0xff]
  %v33 = vld [vmem:[%s0 + $0x48] sm:$0xff]
  %v34 = vld [vmem:[%s0 + $0x50] sm:$0xff]
  %v35 = vld [vmem:[%s0 + $0x58] sm:$0xff]
  %v36 = vld [vmem:[%s0 + $0x60] sm:$0xff]
  %v37 = vld [vmem:[%s0 + $0x68] sm:$0xff]
  %v38 = vld [vmem:[%s0 + $0x70] sm:$0xff]
  %v39 = vld [vmem:[%s0 + $0x78] sm:$0xff]
  %v40 = vld [vmem:[%s1] sm:$0x1]
  %v42 = vlaneseq
  %v43 = vshrl.u32 %v42, 7
  %v44 = vsub.s32 0, %v43
  %v45 = vrot.slane %v40, %v44
  %v47 = vmul.f32 %v24, %v45
  %v48 = vmul.f32 %v25, %v45
  %v49 = vmul.f32 %v26, %v45
  %v50 = vmul.f32 %v27, %v45
  %v51 = vmul.f32 %v28, %v45
  %v52 = vmul.f32 %v29, %v45
  %v53 = vmul.f32 %v30, %v45
  %v54 = vmul.f32 %v31, %v45
  %v55 = vmul.f32 %v32, %v45
  %v56 = vmul.f32 %v33, %v45
  %v57 = vmul.f32 %v34, %v45
  %v58 = vmul.f32 %v35, %v45
  %v59 = vmul.f32 %v36, %v45
  %v60 = vmul.f32 %v37, %v45
  %v61 = vmul.f32 %v38, %v45
  %v62 = vmul.f32 %v39, %v45
  %v63 = vld [vmem:[%s2] sm:$0x1]
  %v65 = vlaneseq
  %v66 = vshrl.u32 %v65, 7
  %v67 = vsub.s32 0, %v66
  %v68 = vrot.slane %v63, %v67
  %v70 = vadd.f32 %v47, %v68
  %v71 = vadd.f32 %v48, %v68
  %v72 = vadd.f32 %v49, %v68
  %v73 = vadd.f32 %v50, %v68
  %v74 = vadd.f32 %v51, %v68
  %v75 = vadd.f32 %v52, %v68
  %v76 = vadd.f32 %v53, %v68
  %v77 = vadd.f32 %v54, %v68
  %v78 = vadd.f32 %v55, %v68
  %v79 = vadd.f32 %v56, %v68
  %v80 = vadd.f32 %v57, %v68
  %v81 = vadd.f32 %v58, %v68
  %v82 = vadd.f32 %v59, %v68
  %v83 = vadd.f32 %v60, %v68
  %v84 = vadd.f32 %v61, %v68
  %v85 = vadd.f32 %v62, %v68
  %v86 = vmax.f32 %v70, 0.0
  %v87 = vmax.f32 %v71, 0.0
  %v88 = vmax.f32 %v72, 0.0
  %v89 = vmax.f32 %v73, 0.0
  %v90 = vmax.f32 %v74, 0.0
  %v91 = vmax.f32 %v75, 0.0
  %v92 = vmax.f32 %v76, 0.0
  %v93 = vmax.f32 %v77, 0.0
  %v94 = vmax.f32 %v78, 0.0
  %v95 = vmax.f32 %v79, 0.0
  %v96 = vmax.f32 %v80, 0.0
  %v97 = vmax.f32 %v81, 0.0
  %v98 = vmax.f32 %v82, 0.0
  %v99 = vmax.f32 %v83, 0.0
  %v100 = vmax.f32 %v84, 0.0
  %v101 = vmax.f32 %v85, 0.0
  %v102 = vpack.c.bf16 %v87, %v86
  %v103 = vpack.c.bf16 %v89, %v88
  %v104 = vpack.c.bf16 %v91, %v90
  %v105 = vpack.c.bf16 %v93, %v92
  %v106 = vpack.c.bf16 %v95, %v94
  %v107 = vpack.c.bf16 %v97, %v96
  %v108 = vpack.c.bf16 %v99, %v98
  %v109 = vpack.c.bf16 %v101, %v100
  %v110 = vld [vmem:[%s3] sm:$0xff]
  %v111 = vpack.c.bf16 %v110, %v110
  %vm112 = vcmask 64512
  %v114 = vsel %vm112, %v102, 0
  %v117 = vsel %vm112, %v103, 0
  %v120 = vsel %vm112, %v104, 0
  %v123 = vsel %vm112, %v105, 0
  %v126 = vsel %vm112, %v106, 0
  %v129 = vsel %vm112, %v107, 0
  %v132 = vsel %vm112, %v108, 0
  %v135 = vsel %vm112, %v109, 0
  %vm137 = vcmask 1043456
  %v139 = vsel %vm137, %v111, 0
  %141 = vmatprep.subr.bf16.mxu0 0
  %142 = vmatpush1.bf16.msra.mxu0 %v139
  %143 = vmatprep.subr.bf16.mxu0 0
  %144 = vmatpush1.bf16.msra.mxu0 0
  %145 = vmatprep.subr.bf16.mxu0 0
  %146 = vmatpush1.bf16.msra.mxu0 0
  %147 = vmatprep.subr.bf16.mxu0 0
  %148 = vmatpush1.bf16.msra.mxu0 0
  %149 = vmatprep.subr.bf16.mxu0 0
  %150 = vmatpush1.bf16.msra.mxu0 0
  %151 = vmatprep.subr.bf16.mxu0 0
  %152 = vmatpush1.bf16.msra.mxu0 0
  %153 = vmatprep.subr.bf16.mxu0 0
  %154 = vmatpush1.bf16.msra.mxu0 0
  %155 = vmatprep.subr.bf16.mxu0 0
  %156 = vmatpush1.bf16.msra.mxu0 0
  %157 = vmatprep.subr.bf16.mxu0 0
  %158 = vmatpush1.bf16.msra.mxu0 0
  %159 = vmatprep.subr.bf16.mxu0 0
  %160 = vmatpush1.bf16.msra.mxu0 0
  %161 = vmatprep.subr.bf16.mxu0 0
  %162 = vmatpush1.bf16.msra.mxu0 0
  %163 = vmatprep.subr.bf16.mxu0 0
  %164 = vmatpush1.bf16.msra.mxu0 0
  %165 = vmatprep.subr.bf16.mxu0 0
  %166 = vmatpush1.bf16.msra.mxu0 0
  %167 = vmatprep.subr.bf16.mxu0 0
  %168 = vmatpush1.bf16.msra.mxu0 0
  %169 = vmatprep.subr.bf16.mxu0 0
  %170 = vmatpush1.bf16.msra.mxu0 0
  %171 = vmatprep.subr.bf16.mxu0 0
  %172 = vmatpush1.bf16.msra.mxu0 0
  %173 = vmatprep.mubr.bf16.mxu0 0
  %174 = vmatmul.mubr.bf16.gmra.mrb[0].mxu0 %v114
  %v175 = vpop.f32.mrb[0].mxu0
  %v176 = vadd.f32 0.0, %v175
  %v177 = vpop.f32.mrb[0].mxu0
  %v178 = vpop.f32.mrb[0].mxu0
  %v179 = vadd.f32 0.0, %v178
  %v180 = vpop.f32.mrb[0].mxu0
  %181 = vmatprep.mubr.bf16.mxu0 0
  %182 = vmatmul.mubr.bf16.gmra.mrb[0].mxu0 %v117
  %v183 = vpop.f32.mrb[0].mxu0
  %v184 = vadd.f32 0.0, %v183
  %v185 = vpop.f32.mrb[0].mxu0
  %v186 = vpop.f32.mrb[0].mxu0
  %v187 = vadd.f32 0.0, %v186
  %v188 = vpop.f32.mrb[0].mxu0
  %189 = vmatprep.mubr.bf16.mxu0 0
  %190 = vmatmul.mubr.bf16.gmra.mrb[0].mxu0 %v120
  %v191 = vpop.f32.mrb[0].mxu0
  %v192 = vadd.f32 0.0, %v191
  %v193 = vpop.f32.mrb[0].mxu0
  %v194 = vpop.f32.mrb[0].mxu0
  %v195 = vadd.f32 0.0, %v194
  %v196 = vpop.f32.mrb[0].mxu0
  %197 = vmatprep.mubr.bf16.mxu0 0
  %198 = vmatmul.mubr.bf16.gmra.mrb[0].mxu0 %v123
  %v199 = vpop.f32.mrb[0].mxu0
  %v200 = vadd.f32 0.0, %v199
  %v201 = vpop.f32.mrb[0].mxu0
  %v202 = vpop.f32.mrb[0].mxu0
  %v203 = vadd.f32 0.0, %v202
  %v204 = vpop.f32.mrb[0].mxu0
  %205 = vmatprep.mubr.bf16.mxu0 0
  %206 = vmatmul.mubr.bf16.gmra.mrb[0].mxu0 %v126
  %v207 = vpop.f32.mrb[0].mxu0
  %v208 = vadd.f32 0.0, %v207
  %v209 = vpop.f32.mrb[0].mxu0
  %v210 = vpop.f32.mrb[0].mxu0
  %v211 = vadd.f32 0.0, %v210
  %v212 = vpop.f32.mrb[0].mxu0
  %213 = vmatprep.mubr.bf16.mxu0 0
  %214 = vmatmul.mubr.bf16.gmra.mrb[0].mxu0 %v129
  %v215 = vpop.f32.mrb[0].mxu0
  %v216 = vadd.f32 0.0, %v215
  %v217 = vpop.f32.mrb[0].mxu0
  %v218 = vpop.f32.mrb[0].mxu0
  %v219 = vadd.f32 0.0, %v218
  %v220 = vpop.f32.mrb[0].mxu0
  %221 = vmatprep.mubr.bf16.mxu0 0
  %222 = vmatmul.mubr.bf16.gmra.mrb[0].mxu0 %v132
  %v223 = vpop.f32.mrb[0].mxu0
  %v224 = vadd.f32 0.0, %v223
  %v225 = vpop.f32.mrb[0].mxu0
  %v226 = vpop.f32.mrb[0].mxu0
  %v227 = vadd.f32 0.0, %v226
  %v228 = vpop.f32.mrb[0].mxu0
  %229 = vmatprep.mubr.bf16.mxu0 0
  %230 = vmatmul.mubr.bf16.gmra.mrb[0].mxu0 %v135
  %v231 = vpop.f32.mrb[0].mxu0
  %v232 = vadd.f32 0.0, %v231
  %v233 = vpop.f32.mrb[0].mxu0
  %v234 = vpop.f32.mrb[0].mxu0
  %v235 = vadd.f32 0.0, %v234
  %v236 = vpop.f32.mrb[0].mxu0
  %237 = vdwg.mxu0
  %v238 = vld [vmem:[%s4] sm:$0x1]
  %v240 = vlaneseq
  %v241 = vshrl.u32 %v240, 7
  %v242 = vsub.s32 0, %v241
  %v243 = vrot.slane %v238, %v242
  %v245 = vmul.f32 %v176, %v243
  %v246 = vmul.f32 %v179, %v243
  %v247 = vmul.f32 %v184, %v243
  %v248 = vmul.f32 %v187, %v243
  %v249 = vmul.f32 %v192, %v243
  %v250 = vmul.f32 %v195, %v243
  %v251 = vmul.f32 %v200, %v243
  %v252 = vmul.f32 %v203, %v243
  %v253 = vmul.f32 %v208, %v243
  %v254 = vmul.f32 %v211, %v243
  %v255 = vmul.f32 %v216, %v243
  %v256 = vmul.f32 %v219, %v243
  %v257 = vmul.f32 %v224, %v243
  %v258 = vmul.f32 %v227, %v243
  %v259 = vmul.f32 %v232, %v243
  %v260 = vmul.f32 %v235, %v243
  %v261 = vld [vmem:[%s5] sm:$0x1]
  %v263 = vlaneseq
  %v264 = vshrl.u32 %v263, 7
  %v265 = vsub.s32 0, %v264
  %v266 = vrot.slane %v261, %v265
  %v268 = vadd.f32 %v245, %v266
  %v269 = vadd.f32 %v246, %v266
  %v270 = vadd.f32 %v247, %v266
  %v271 = vadd.f32 %v248, %v266
  %v272 = vadd.f32 %v249, %v266
  %v273 = vadd.f32 %v250, %v266
  %v274 = vadd.f32 %v251, %v266
  %v275 = vadd.f32 %v252, %v266
  %v276 = vadd.f32 %v253, %v266
  %v277 = vadd.f32 %v254, %v266
  %v278 = vadd.f32 %v255, %v266
  %v279 = vadd.f32 %v256, %v266
  %v280 = vadd.f32 %v257, %v266
  %v281 = vadd.f32 %v258, %v266
  %v282 = vadd.f32 %v259, %v266
  %v283 = vadd.f32 %v260, %v266
  %v284 = vmax.f32 %v268, 0.0
  %v285 = vmax.f32 %v269, 0.0
  %v286 = vmax.f32 %v270, 0.0
  %v287 = vmax.f32 %v271, 0.0
  %v288 = vmax.f32 %v272, 0.0
  %v289 = vmax.f32 %v273, 0.0
  %v290 = vmax.f32 %v274, 0.0
  %v291 = vmax.f32 %v275, 0.0
  %v292 = vmax.f32 %v276, 0.0
  %v293 = vmax.f32 %v277, 0.0
  %v294 = vmax.f32 %v278, 0.0
  %v295 = vmax.f32 %v279, 0.0
  %v296 = vmax.f32 %v280, 0.0
  %v297 = vmax.f32 %v281, 0.0
  %v298 = vmax.f32 %v282, 0.0
  %v299 = vmax.f32 %v283, 0.0
  %300 = vst.msk [vmem:[%s6] sm:$0xff] %vm112, %v284
  %301 = vst.msk [vmem:[%s6 + $0x8] sm:$0xff] %vm112, %v285
  %302 = vst.msk [vmem:[%s6 + $0x10] sm:$0xff] %vm112, %v286
  %303 = vst.msk [vmem:[%s6 + $0x18] sm:$0xff] %vm112, %v287
  %304 = vst.msk [vmem:[%s6 + $0x20] sm:$0xff] %vm112, %v288
  %305 = vst.msk [vmem:[%s6 + $0x28] sm:$0xff] %vm112, %v289
  %306 = vst.msk [vmem:[%s6 + $0x30] sm:$0xff] %vm112, %v290
  %307 = vst.msk [vmem:[%s6 + $0x38] sm:$0xff] %vm112, %v291
  %308 = vst.msk [vmem:[%s6 + $0x40] sm:$0xff] %vm112, %v292
  %309 = vst.msk [vmem:[%s6 + $0x48] sm:$0xff] %vm112, %v293
  %310 = vst.msk [vmem:[%s6 + $0x50] sm:$0xff] %vm112, %v294
  %311 = vst.msk [vmem:[%s6 + $0x58] sm:$0xff] %vm112, %v295
  %312 = vst.msk [vmem:[%s6 + $0x60] sm:$0xff] %vm112, %v296
  %313 = vst.msk [vmem:[%s6 + $0x68] sm:$0xff] %vm112, %v297
  %314 = vst.msk [vmem:[%s6 + $0x70] sm:$0xff] %vm112, %v298
  %315 = vst.msk [vmem:[%s6 + $0x78] sm:$0xff] %vm112, %v299
  // Predicated region
  $region26: #{forward.33} parent=0 // pred_check
    _
  $region27: #{forward.33} parent=0 // pred_check_branch
    %317 = sbr.rel (0) target = $region29
  $region28: #{forward.33} parent=0 // pred_region
    _
  $region29: #{forward.33} parent=0 // pred_fallthru
    _
  // Predicated region
  $region30: #{forward.33} parent=0 // pred_check
    _
  $region31: #{forward.33} parent=0 // pred_check_branch
    %319 = sbr.rel (0) target = $region33
  $region32: #{forward.33} parent=0 // pred_region
    _
  $region33: #{forward.33} parent=0 // pred_fallthru
    _

// kernel: forward.32
$region0: #{forward.32}
  #allocation0 [shape = 'u32[]', space=smem, size = 0x4, offset = 0x4, fixed_abs, tag = 'smem constant byte address 0x4 - core index']
  #allocation1 [shape = 'u32[144,128]{1,0:T(1,128)}', space=vmem, size = 0x12000, scoped, tag = 'internal scratch']
  %s0 = inlined_call_operand.vmem [shape: f32[512,147], index: 0, kind: input, shape index: {}]
  %s1 = inlined_call_operand.vmem [shape: f32[147,8], index: 1, kind: input, shape index: {}]
  %s2 = inlined_call_operand.vmem [shape: f32[1,8], index: 2, kind: input, shape index: {}]
  %s3 = inlined_call_operand.vmem [shape: f32[1,8], index: 3, kind: input, shape index: {}]
  %s4 = inlined_call_operand.vmem [shape: f32[512,8], index: 4, kind: output, shape index: {}]
  %s5 = sld [smem:[#allocation0]]
  $region49: #{forward.32} parent=0
    _
  %s7 = ssub.s32 1, %s5
  %s8 = scalar_select 0, %s7, %s5
  loop: start=0, step=1, limit=4
  $region2: #{forward.32} parent=0 // loop_pre_header
    _
  $region3: #{forward.32} parent=0 // loop_header
    %s10 = sphi 0, %s14
    %p11 = scmp.ge.s32.totalorder %s10, 4
    %s20 = sphi 0, %s22
    %s23 = sphi 0, %s20
    %s24 = sphi 0, %s23
    %s40 = sphi 0, %s24
    %s44 = sphi 0, %s44
    %s46 = sphi 0, %s44
    %s47 = sphi 0, %s46
    %s61 = sphi 0, %s47
    %s65 = sphi 0, %s65
    %s67 = sphi 0, %s65
    %s68 = sphi 0, %s67
    %s82 = sphi 0, %s68
    %s86 = sphi 0, %s86
    %s88 = sphi 0, %s86
    %s89 = sphi 0, %s88
    %s103 = sphi 0, %s89
    %s109 = sphi 0, %s111
    %s112 = sphi 0, %s109
    %s113 = sphi 0, %s112
    %s129 = sphi 0, %s113
  $region4: #{forward.32} parent=0 // loop_header_branch
    %13 = sbr.rel (%p11) target = $region8
  $region5: #{forward.32} parent=0 // loop_body
    %s15 = ssub.s32 %s10, 1
    %s16 = ssub.s32 %s10, 2
    %s17 = sadd.s32 %s10, 1
    %s18 = ssub.s32 %s10, %s17
    %p19 = scmp.eq.s32.totalorder %s18, 0
    %s21 = sadd.s32 %s20, 1
    %s22 = scalar_select %p19, %s20, %s21
    %p25 = pneg %p19
    %p26 = scmp.eq.s32.totalorder %s10, 1
    %p27 = por %p25, %p26
    %p28 = scmp.ne.s32.totalorder %s20, %s23
    %p29 = scmp.eq.s32.totalorder %s10, 0
    %p30 = por %p28, %p29
    %p31 = scmp.ne.s32.totalorder %s20, %s23
    %p32 = scmp.eq.s32.totalorder %s15, 1
    %p33 = por %p31, %p32
    %p34 = scmp.ne.s32.totalorder %s23, %s24
    %p35 = scmp.eq.s32.totalorder %s15, 0
    %p36 = por %p34, %p35
    %p37 = scmp.ne.s32.totalorder %s23, %s24
    %p38 = scmp.eq.s32.totalorder %s16, 1
    %p39 = por %p37, %p38
    %p41 = scmp.ne.s32.totalorder %s24, %s40
    %p42 = scmp.eq.s32.totalorder %s16, 0
    %p43 = por %p41, %p42
    %s45 = sadd.s32 %s44, 1
    %p48 = scmp.eq.s32.totalorder %s10, 1
    %p49 = scmp.ne.s32.totalorder %s44, %s46
    %p50 = scmp.eq.s32.totalorder %s10, 0
    %p51 = por %p49, %p50
    %p52 = scmp.ne.s32.totalorder %s44, %s46
    %p53 = scmp.eq.s32.totalorder %s15, 1
    %p54 = por %p52, %p53
    %p55 = scmp.ne.s32.totalorder %s46, %s47
    %p56 = scmp.eq.s32.totalorder %s15, 0
    %p57 = por %p55, %p56
    %p58 = scmp.ne.s32.totalorder %s46, %s47
    %p59 = scmp.eq.s32.totalorder %s16, 1
    %p60 = por %p58, %p59
    %p62 = scmp.ne.s32.totalorder %s47, %s61
    %p63 = scmp.eq.s32.totalorder %s16, 0
    %p64 = por %p62, %p63
    %s66 = sadd.s32 %s65, 1
    %p69 = scmp.eq.s32.totalorder %s10, 1
    %p70 = scmp.ne.s32.totalorder %s65, %s67
    %p71 = scmp.eq.s32.totalorder %s10, 0
    %p72 = por %p70, %p71
    %p73 = scmp.ne.s32.totalorder %s65, %s67
    %p74 = scmp.eq.s32.totalorder %s15, 1
    %p75 = por %p73, %p74
    %p76 = scmp.ne.s32.totalorder %s67, %s68
    %p77 = scmp.eq.s32.totalorder %s15, 0
    %p78 = por %p76, %p77
    %p79 = scmp.ne.s32.totalorder %s67, %s68
    %p80 = scmp.eq.s32.totalorder %s16, 1
    %p81 = por %p79, %p80
    %p83 = scmp.ne.s32.totalorder %s68, %s82
    %p84 = scmp.eq.s32.totalorder %s16, 0
    %p85 = por %p83, %p84
    %s87 = sadd.s32 %s86, 1
    %p90 = scmp.eq.s32.totalorder %s10, 1
    %p91 = scmp.ne.s32.totalorder %s86, %s88
    %p92 = scmp.eq.s32.totalorder %s10, 0
    %p93 = por %p91, %p92
    %p94 = scmp.ne.s32.totalorder %s86, %s88
    %p95 = scmp.eq.s32.totalorder %s15, 1
    %p96 = por %p94, %p95
    %p97 = scmp.ne.s32.totalorder %s88, %s89
    %p98 = scmp.eq.s32.totalorder %s15, 0
    %p99 = por %p97, %p98
    %p100 = scmp.ne.s32.totalorder %s88, %s89
    %p101 = scmp.eq.s32.totalorder %s16, 1
    %p102 = por %p100, %p101
    %p104 = scmp.ne.s32.totalorder %s89, %s103
    %p105 = scmp.eq.s32.totalorder %s16, 0
    %p106 = por %p104, %p105
    %s107 = ssub.s32 %s10, %s17
    %p108 = scmp.eq.s32.totalorder %s107, 0
    %s110 = sadd.s32 %s109, 1
    %s111 = scalar_select %p108, %s109, %s110
    %p114 = pneg %p108
    %p115 = scmp.eq.s32.totalorder %s10, 1
    %p116 = por %p114, %p115
    %p117 = scmp.ne.s32.totalorder %s109, %s112
    %p118 = scmp.eq.s32.totalorder %s10, 0
    %p119 = por %p117, %p118
    %p120 = scmp.ne.s32.totalorder %s109, %s112
    %p121 = scmp.eq.s32.totalorder %s15, 1
    %p122 = por %p120, %p121
    %p123 = scmp.ne.s32.totalorder %s112, %s113
    %p124 = scmp.eq.s32.totalorder %s15, 0
    %p125 = por %p123, %p124
    %p126 = scmp.ne.s32.totalorder %s112, %s113
    %p127 = scmp.eq.s32.totalorder %s16, 1
    %p128 = por %p126, %p127
    %p130 = scmp.ne.s32.totalorder %s113, %s129
    %p131 = scmp.eq.s32.totalorder %s16, 0
    %p132 = por %p130, %p131
    %p133 = scmp.le.s32.totalorder 1, %s10
    %p134 = scmp.lt.s32.totalorder %s10, 3
    %p135 = pnand %p133, %p134
    %p136 = pneg %p135
    // Predicated region
    $region9: #{forward.32} parent=5 // pred_check
      _
    $region10: #{forward.32} parent=5 // pred_check_branch
      %138 = sbr.rel (%p135) target = $region12
    $region11: #{forward.32} parent=5 // pred_region
      %s139 = ssub.s32 %s10, 1
      // Predicated region
      $region13: #{forward.32} parent=11 // pred_check
        %p140 = pneg %p57
      $region14: #{forward.32} parent=11 // pred_check_branch
        %142 = sbr.rel (%p140) target = $region16
      $region15: #{forward.32} parent=11 // pred_region
        _
      $region16: #{forward.32} parent=11 // pred_fallthru
        _
      // Predicated region
      $region17: #{forward.32} parent=11 // pred_check
        %p143 = pneg %p78
      $region18: #{forward.32} parent=11 // pred_check_branch
        %145 = sbr.rel (%p143) target = $region20
      $region19: #{forward.32} parent=11 // pred_region
        _
      $region20: #{forward.32} parent=11 // pred_fallthru
        _
      // Predicated region
      $region21: #{forward.32} parent=11 // pred_check
        %p146 = pneg %p99
      $region22: #{forward.32} parent=11 // pred_check_branch
        %148 = sbr.rel (%p146) target = $region24
      $region23: #{forward.32} parent=11 // pred_region
        _
      $region24: #{forward.32} parent=11 // pred_fallthru
        _
    $region12: #{forward.32} parent=5 // pred_fallthru
      _
    %p149 = scmp.lt.s32.totalorder %s10, 2
    // Predicated region
    $region25: #{forward.32} parent=5 // pred_check
      %p150 = pneg %p149
    $region26: #{forward.32} parent=5 // pred_check_branch
      %152 = sbr.rel (%p150) target = $region28
    $region27: #{forward.32} parent=5 // pred_region
      // Predicated region
      $region29: #{forward.32} parent=27 // pred_check
        %p153 = pneg %p30
      $region30: #{forward.32} parent=27 // pred_check_branch
        %155 = sbr.rel (%p153) target = $region32
      $region31: #{forward.32} parent=27 // pred_region
        %s156 = smul.u32 32, %s10
        %p157 = scmp.lt.s32.totalorder %s156, 63
        %s158 = scalar_select %p157, %s156, 63
        %s159 = smul.addr %s158, 2
        %s160 = smul.addr %s159, 8
        %s161 = scalar_lea.vmem %s0, %s160
        %s162 = smul.u32 32, %s10
      $region32: #{forward.32} parent=27 // pred_fallthru
        _
    $region28: #{forward.32} parent=5 // pred_fallthru
      _
    %p163 = scmp.le.s32.totalorder 1, %s10
    %p164 = scmp.lt.s32.totalorder %s10, 3
    %p165 = pnand %p163, %p164
    %p166 = pneg %p165
    // Predicated region
    $region33: #{forward.32} parent=5 // pred_check
      _
    $region34: #{forward.32} parent=5 // pred_check_branch
      %168 = sbr.rel (%p165) target = $region36
    $region35: #{forward.32} parent=5 // pred_region
      %s169 = ssub.s32 %s10, 1
      %s170 = smul.u32 32, %s15
      %p171 = scmp.lt.s32.totalorder %s170, 63
      %s172 = scalar_select %p171, %s170, 63
      %s173 = smul.addr %s172, 2
      %s174 = smul.addr %s173, 8
      %s175 = scalar_lea.vmem %s0, %s174
      %p176 = pneg %p36
      %p177 = pneg %p33
      %p178 = pneg %p57
      %p179 = pneg %p54
      %p180 = pneg %p78
      %p181 = pneg %p75
      %p182 = pneg %p99
      %p183 = pneg %p96
      %p184 = pneg %p125
      %p185 = pneg %p122
      %s186 = smul.u32 32, %s15
      %p187 = scmp.lt.s32.totalorder %s186, 63
      %s188 = scalar_select %p187, %s186, 63
      %s189 = smul.addr %s188, 8
      %s190 = scalar_lea.vmem %s4, %s189
      %s191 = smul.u32 32, %s15
      %p192 = scmp.lt.s32.totalorder %s191, 63
      %s193 = scalar_select %p192, %s191, 63
      %s194 = smul.addr %s193, 2
      %s195 = smul.addr %s194, 8
      %s196 = scalar_lea.vmem %s0, %s195
      %s197 = smul.u32 32, %s15
      %s198 = smul.u32 32, %s15
      %p199 = scmp.lt.s32.totalorder %s198, 63
      %s200 = scalar_select %p199, %s198, 63
      %s201 = smul.addr %s200, 8
      %s202 = scalar_lea.vmem %s4, %s201
      %s203 = smul.u32 32, %s15
      %v205 = vld [vmem:[%s196] sm:$0xff]
      %v206 = vld [vmem:[%s196 + $0x8] sm:$0xff]
      %v207 = vld [vmem:[%s196 + $0x10] sm:$0xff]
      %v208 = vld [vmem:[%s196 + $0x18] sm:$0xff]
      %v209 = vld [vmem:[%s196 + $0x20] sm:$0xff]
      %v210 = vld [vmem:[%s196 + $0x28] sm:$0xff]
      %v211 = vld [vmem:[%s196 + $0x30] sm:$0xff]
      %v212 = vld [vmem:[%s196 + $0x38] sm:$0xff]
      %v213 = vld [vmem:[%s196 + $0x40] sm:$0xff]
      %v214 = vld [vmem:[%s196 + $0x48] sm:$0xff]
      %v215 = vld [vmem:[%s196 + $0x50] sm:$0xff]
      %v216 = vld [vmem:[%s196 + $0x58] sm:$0xff]
      %v217 = vld [vmem:[%s196 + $0x60] sm:$0xff]
      %v218 = vld [vmem:[%s196 + $0x68] sm:$0xff]
      %v219 = vld [vmem:[%s196 + $0x70] sm:$0xff]
      %v220 = vld [vmem:[%s196 + $0x78] sm:$0xff]
      %v221 = vld [vmem:[%s196 + $0x80] sm:$0xff]
      %v222 = vld [vmem:[%s196 + $0x88] sm:$0xff]
      %v223 = vld [vmem:[%s196 + $0x90] sm:$0xff]
      %v224 = vld [vmem:[%s196 + $0x98] sm:$0xff]
      %v225 = vld [vmem:[%s196 + $0xa0] sm:$0xff]
      %v226 = vld [vmem:[%s196 + $0xa8] sm:$0xff]
      %v227 = vld [vmem:[%s196 + $0xb0] sm:$0xff]
      %v228 = vld [vmem:[%s196 + $0xb8] sm:$0xff]
      %v229 = vld [vmem:[%s196 + $0xc0] sm:$0xff]
      %v230 = vld [vmem:[%s196 + $0xc8] sm:$0xff]
      %v231 = vld [vmem:[%s196 + $0xd0] sm:$0xff]
      %v232 = vld [vmem:[%s196 + $0xd8] sm:$0xff]
      %v233 = vld [vmem:[%s196 + $0xe0] sm:$0xff]
      %v234 = vld [vmem:[%s196 + $0xe8] sm:$0xff]
      %v235 = vld [vmem:[%s196 + $0xf0] sm:$0xff]
      %v236 = vld [vmem:[%s196 + $0xf8] sm:$0xff]
      %v237 = vld [vmem:[%s196 + $0x100] sm:$0xff]
      %v238 = vld [vmem:[%s196 + $0x108] sm:$0xff]
      %v239 = vld [vmem:[%s196 + $0x110] sm:$0xff]
      %v240 = vld [vmem:[%s196 + $0x118] sm:$0xff]
      %v241 = vld [vmem:[%s196 + $0x120] sm:$0xff]
      %v242 = vld [vmem:[%s196 + $0x128] sm:$0xff]
      %v243 = vld [vmem:[%s196 + $0x130] sm:$0xff]
      %v244 = vld [vmem:[%s196 + $0x138] sm:$0xff]
      %v245 = vld [vmem:[%s196 + $0x140] sm:$0xff]
      %v246 = vld [vmem:[%s196 + $0x148] sm:$0xff]
      %v247 = vld [vmem:[%s196 + $0x150] sm:$0xff]
      %v248 = vld [vmem:[%s196 + $0x158] sm:$0xff]
      %v249 = vld [vmem:[%s196 + $0x160] sm:$0xff]
      %v250 = vld [vmem:[%s196 + $0x168] sm:$0xff]
      %v251 = vld [vmem:[%s196 + $0x170] sm:$0xff]
      %v252 = vld [vmem:[%s196 + $0x178] sm:$0xff]
      %v253 = vld [vmem:[%s196 + $0x180] sm:$0xff]
      %v254 = vld [vmem:[%s196 + $0x188] sm:$0xff]
      %v255 = vld [vmem:[%s196 + $0x190] sm:$0xff]
      %v256 = vld [vmem:[%s196 + $0x198] sm:$0xff]
      %v257 = vld [vmem:[%s196 + $0x1a0] sm:$0xff]
      %v258 = vld [vmem:[%s196 + $0x1a8] sm:$0xff]
      %v259 = vld [vmem:[%s196 + $0x1b0] sm:$0xff]
      %v260 = vld [vmem:[%s196 + $0x1b8] sm:$0xff]
      %v261 = vld [vmem:[%s196 + $0x1c0] sm:$0xff]
      %v262 = vld [vmem:[%s196 + $0x1c8] sm:$0xff]
      %v263 = vld [vmem:[%s196 + $0x1d0] sm:$0xff]
      %v264 = vld [vmem:[%s196 + $0x1d8] sm:$0xff]
      %v265 = vld [vmem:[%s196 + $0x1e0] sm:$0xff]
      %v266 = vld [vmem:[%s196 + $0x1e8] sm:$0xff]
      %v267 = vld [vmem:[%s196 + $0x1f0] sm:$0xff]
      %v268 = vld [vmem:[%s196 + $0x1f8] sm:$0xff]
      %v269 = vpack.c.bf16 %v207, %v205
      %v270 = vpack.c.bf16 %v208, %v206
      %v271 = vpack.c.bf16 %v211, %v209
      %v272 = vpack.c.bf16 %v212, %v210
      %v273 = vpack.c.bf16 %v215, %v213
      %v274 = vpack.c.bf16 %v216, %v214
      %v275 = vpack.c.bf16 %v219, %v217
      %v276 = vpack.c.bf16 %v220, %v218
      %v277 = vpack.c.bf16 %v223, %v221
      %v278 = vpack.c.bf16 %v224, %v222
      %v279 = vpack.c.bf16 %v227, %v225
      %v280 = vpack.c.bf16 %v228, %v226
      %v281 = vpack.c.bf16 %v231, %v229
      %v282 = vpack.c.bf16 %v232, %v230
      %v283 = vpack.c.bf16 %v235, %v233
      %v284 = vpack.c.bf16 %v236, %v234
      %v285 = vpack.c.bf16 %v239, %v237
      %v286 = vpack.c.bf16 %v240, %v238
      %v287 = vpack.c.bf16 %v243, %v241
      %v288 = vpack.c.bf16 %v244, %v242
      %v289 = vpack.c.bf16 %v247, %v245
      %v290 = vpack.c.bf16 %v248, %v246
      %v291 = vpack.c.bf16 %v251, %v249
      %v292 = vpack.c.bf16 %v252, %v250
      %v293 = vpack.c.bf16 %v255, %v253
      %v294 = vpack.c.bf16 %v256, %v254
      %v295 = vpack.c.bf16 %v259, %v257
      %v296 = vpack.c.bf16 %v260, %v258
      %v297 = vpack.c.bf16 %v263, %v261
      %v298 = vpack.c.bf16 %v264, %v262
      %v299 = vpack.c.bf16 %v267, %v265
      %v300 = vpack.c.bf16 %v268, %v266
      %v301 = vld [vmem:[%s1] sm:$0xff]
      %v302 = vld [vmem:[%s1 + $0x8] sm:$0xff]
      %v303 = vld [vmem:[%s1 + $0x10] sm:$0xff]
      %v304 = vld [vmem:[%s1 + $0x18] sm:$0xff]
      %v305 = vld [vmem:[%s1 + $0x20] sm:$0xff]
      %v306 = vld [vmem:[%s1 + $0x28] sm:$0xff]
      %v307 = vld [vmem:[%s1 + $0x30] sm:$0xff]
      %v308 = vld [vmem:[%s1 + $0x38] sm:$0xff]
      %v309 = vld [vmem:[%s1 + $0x40] sm:$0xff]
      %v310 = vld [vmem:[%s1 + $0x48] sm:$0xff]
      %v311 = vld [vmem:[%s1 + $0x50] sm:$0xff]
      %v312 = vld [vmem:[%s1 + $0x58] sm:$0xff]
      %v313 = vld [vmem:[%s1 + $0x60] sm:$0xff]
      %v314 = vld [vmem:[%s1 + $0x68] sm:$0xff]
      %v315 = vld [vmem:[%s1 + $0x70] sm:$0xff]
      %v316 = vld [vmem:[%s1 + $0x78] sm:$0xff]
      %v317 = vld [vmem:[%s1 + $0x80] sm:$0xff]
      %v318 = vld [vmem:[%s1 + $0x88] sm:$0xff]
      %v319 = vld [vmem:[%s1 + $0x90] sm:$0x7]
      %v320 = vpack.c.bf16 %v302, %v301
      %v321 = vpack.c.bf16 %v304, %v303
      %v322 = vpack.c.bf16 %v306, %v305
      %v323 = vpack.c.bf16 %v308, %v307
      %v324 = vpack.c.bf16 %v310, %v309
      %v325 = vpack.c.bf16 %v312, %v311
      %v326 = vpack.c.bf16 %v314, %v313
      %v327 = vpack.c.bf16 %v316, %v315
      %v328 = vpack.c.bf16 %v318, %v317
      %v329 = vpack.c.bf16 %v319, %v319
      %vm330 = vcmask 154624
      %v332 = vsel %vm330, %v270, 0
      %v335 = vsel %vm330, %v272, 0
      %v338 = vsel %vm330, %v274, 0
      %v341 = vsel %vm330, %v276, 0
      %v344 = vsel %vm330, %v278, 0
      %v347 = vsel %vm330, %v280, 0
      %v350 = vsel %vm330, %v282, 0
      %v353 = vsel %vm330, %v284, 0
      %v356 = vsel %vm330, %v286, 0
      %v359 = vsel %vm330, %v288, 0
      %v362 = vsel %vm330, %v290, 0
      %v365 = vsel %vm330, %v292, 0
      %v368 = vsel %vm330, %v294, 0
      %v371 = vsel %vm330, %v296, 0
      %v374 = vsel %vm330, %v298, 0
      %v377 = vsel %vm330, %v300, 0
      %vm379 = vcmask 1040384
      %vm380 = vcmask 1041408
      %v381 = vsel %vm379, 4294967295, 65535
      %v382 = vsel %vm380, %v381, 0
      %v384 = vand.u32 %v329, %v382
      %386 = vmatprep.subr.bf16.mxu0 0
      %387 = vmatpush1.bf16.msra.mxu0 %v320
      %388 = vmatprep.subr.bf16.mxu0 0
      %389 = vmatpush1.bf16.msra.mxu0 %v321
      %390 = vmatprep.subr.bf16.mxu0 0
      %391 = vmatpush1.bf16.msra.mxu0 %v322
      %392 = vmatprep.subr.bf16.mxu0 0
      %393 = vmatpush1.bf16.msra.mxu0 %v323
      %394 = vmatprep.subr.bf16.mxu0 0
      %395 = vmatpush1.bf16.msra.mxu0 %v324
      %396 = vmatprep.subr.bf16.mxu0 0
      %397 = vmatpush1.bf16.msra.mxu0 %v325
      %398 = vmatprep.subr.bf16.mxu0 0
      %399 = vmatpush1.bf16.msra.mxu0 %v326
      %400 = vmatprep.subr.bf16.mxu0 0
      %401 = vmatpush1.bf16.msra.mxu0 %v327
      %402 = vmatprep.subr.bf16.mxu0 0
      %403 = vmatpush1.bf16.msra.mxu0 %v328
      %404 = vmatprep.subr.bf16.mxu0 0
      %405 = vmatpush1.bf16.msra.mxu0 %v384
      %406 = vmatprep.subr.bf16.mxu0 0
      %407 = vmatpush1.bf16.msra.mxu0 0
      %408 = vmatprep.subr.bf16.mxu0 0
      %409 = vmatpush1.bf16.msra.mxu0 0
      %410 = vmatprep.subr.bf16.mxu0 0
      %411 = vmatpush1.bf16.msra.mxu0 0
      %412 = vmatprep.subr.bf16.mxu0 0
      %413 = vmatpush1.bf16.msra.mxu0 0
      %414 = vmatprep.subr.bf16.mxu0 0
      %415 = vmatpush1.bf16.msra.mxu0 0
      %416 = vmatprep.subr.bf16.mxu0 0
      %417 = vmatpush1.bf16.msra.mxu0 0
      %418 = vmatprep.mubr.bf16.mxu0 %v332
      %419 = vmatmul.mubr.bf16.gmra.mrb[0].mxu0 %v269
      %v420 = vpop.f32.mrb[0].mxu0
      %v421 = vadd.f32 0.0, %v420
      %v422 = vpop.f32.mrb[0].mxu0
      %v423 = vpop.f32.mrb[0].mxu0
      %v424 = vadd.f32 0.0, %v423
      %v425 = vpop.f32.mrb[0].mxu0
      %426 = vmatprep.mubr.bf16.mxu0 %v335
      %427 = vmatmul.mubr.bf16.gmra.mrb[0].mxu0 %v271
      %v428 = vpop.f32.mrb[0].mxu0
      %v429 = vadd.f32 0.0, %v428
      %v430 = vpop.f32.mrb[0].mxu0
      %v431 = vpop.f32.mrb[0].mxu0
      %v432 = vadd.f32 0.0, %v431
      %v433 = vpop.f32.mrb[0].mxu0
      %434 = vmatprep.mubr.bf16.mxu0 %v338
      %435 = vmatmul.mubr.bf16.gmra.mrb[0].mxu0 %v273
      %v436 = vpop.f32.mrb[0].mxu0
      %v437 = vadd.f32 0.0, %v436
      %v438 = vpop.f32.mrb[0].mxu0
      %v439 = vpop.f32.mrb[0].mxu0
      %v440 = vadd.f32 0.0, %v439
      %v441 = vpop.f32.mrb[0].mxu0
      %442 = vmatprep.mubr.bf16.mxu0 %v341
      %443 = vmatmul.mubr.bf16.gmra.mrb[0].mxu0 %v275
      %v444 = vpop.f32.mrb[0].mxu0
      %v445 = vadd.f32 0.0, %v444
      %v446 = vpop.f32.mrb[0].mxu0
      %v447 = vpop.f32.mrb[0].mxu0
      %v448 = vadd.f32 0.0, %v447
      %v449 = vpop.f32.mrb[0].mxu0
      %450 = vmatprep.mubr.bf16.mxu0 %v344
      %451 = vmatmul.mubr.bf16.gmra.mrb[0].mxu0 %v277
      %v452 = vpop.f32.mrb[0].mxu0
      %v453 = vadd.f32 0.0, %v452
      %v454 = vpop.f32.mrb[0].mxu0
      %v455 = vpop.f32.mrb[0].mxu0
      %v456 = vadd.f32 0.0, %v455
      %v457 = vpop.f32.mrb[0].mxu0
      %458 = vmatprep.mubr.bf16.mxu0 %v347
      %459 = vmatmul.mubr.bf16.gmra.mrb[0].mxu0 %v279
      %v460 = vpop.f32.mrb[0].mxu0
      %v461 = vadd.f32 0.0, %v460
      %v462 = vpop.f32.mrb[0].mxu0
      %v463 = vpop.f32.mrb[0].mxu0
      %v464 = vadd.f32 0.0, %v463
      %v465 = vpop.f32.mrb[0].mxu0
      %466 = vmatprep.mubr.bf16.mxu0 %v350
      %467 = vmatmul.mubr.bf16.gmra.mrb[0].mxu0 %v281
      %v468 = vpop.f32.mrb[0].mxu0
      %v469 = vadd.f32 0.0, %v468
      %v470 = vpop.f32.mrb[0].mxu0
      %v471 = vpop.f32.mrb[0].mxu0
      %v472 = vadd.f32 0.0, %v471
      %v473 = vpop.f32.mrb[0].mxu0
      %474 = vmatprep.mubr.bf16.mxu0 %v353
      %475 = vmatmul.mubr.bf16.gmra.mrb[0].mxu0 %v283
      %v476 = vpop.f32.mrb[0].mxu0
      %v477 = vadd.f32 0.0, %v476
      %v478 = vpop.f32.mrb[0].mxu0
      %v479 = vpop.f32.mrb[0].mxu0
      %v480 = vadd.f32 0.0, %v479
      %v481 = vpop.f32.mrb[0].mxu0
      %482 = vmatprep.mubr.bf16.mxu0 %v356
      %483 = vmatmul.mubr.bf16.gmra.mrb[0].mxu0 %v285
      %v484 = vpop.f32.mrb[0].mxu0
      %v485 = vadd.f32 0.0, %v484
      %v486 = vpop.f32.mrb[0].mxu0
      %v487 = vpop.f32.mrb[0].mxu0
      %v488 = vadd.f32 0.0, %v487
      %v489 = vpop.f32.mrb[0].mxu0
      %490 = vmatprep.mubr.bf16.mxu0 %v359
      %491 = vmatmul.mubr.bf16.gmra.mrb[0].mxu0 %v287
      %v492 = vpop.f32.mrb[0].mxu0
      %v493 = vadd.f32 0.0, %v492
      %v494 = vpop.f32.mrb[0].mxu0
      %v495 = vpop.f32.mrb[0].mxu0
      %v496 = vadd.f32 0.0, %v495
      %v497 = vpop.f32.mrb[0].mxu0
      %498 = vmatprep.mubr.bf16.mxu0 %v362
      %499 = vmatmul.mubr.bf16.gmra.mrb[0].mxu0 %v289
      %v500 = vpop.f32.mrb[0].mxu0
      %v501 = vadd.f32 0.0, %v500
      %v502 = vpop.f32.mrb[0].mxu0
      %v503 = vpop.f32.mrb[0].mxu0
      %v504 = vadd.f32 0.0, %v503
      %v505 = vpop.f32.mrb[0].mxu0
      %506 = vmatprep.mubr.bf16.mxu0 %v365
      %507 = vmatmul.mubr.bf16.gmra.mrb[0].mxu0 %v291
      %v508 = vpop.f32.mrb[0].mxu0
      %v509 = vadd.f32 0.0, %v508
      %v510 = vpop.f32.mrb[0].mxu0
      %v511 = vpop.f32.mrb[0].mxu0
      %v512 = vadd.f32 0.0, %v511
      %v513 = vpop.f32.mrb[0].mxu0
      %514 = vmatprep.mubr.bf16.mxu0 %v368
      %515 = vmatmul.mubr.bf16.gmra.mrb[0].mxu0 %v293
      %v516 = vpop.f32.mrb[0].mxu0
      %v517 = vadd.f32 0.0, %v516
      %v518 = vpop.f32.mrb[0].mxu0
      %v519 = vpop.f32.mrb[0].mxu0
      %v520 = vadd.f32 0.0, %v519
      %v521 = vpop.f32.mrb[0].mxu0
      %522 = vmatprep.mubr.bf16.mxu0 %v371
      %523 = vmatmul.mubr.bf16.gmra.mrb[0].mxu0 %v295
      %v524 = vpop.f32.mrb[0].mxu0
      %v525 = vadd.f32 0.0, %v524
      %v526 = vpop.f32.mrb[0].mxu0
      %v527 = vpop.f32.mrb[0].mxu0
      %v528 = vadd.f32 0.0, %v527
      %v529 = vpop.f32.mrb[0].mxu0
      %530 = vmatprep.mubr.bf16.mxu0 %v374
      %531 = vmatmul.mubr.bf16.gmra.mrb[0].mxu0 %v297
      %v532 = vpop.f32.mrb[0].mxu0
      %v533 = vadd.f32 0.0, %v532
      %v534 = vpop.f32.mrb[0].mxu0
      %v535 = vpop.f32.mrb[0].mxu0
      %v536 = vadd.f32 0.0, %v535
      %v537 = vpop.f32.mrb[0].mxu0
      %538 = vmatprep.mubr.bf16.mxu0 %v377
      %539 = vmatmul.mubr.bf16.gmra.mrb[0].mxu0 %v299
      %v540 = vpop.f32.mrb[0].mxu0
      %v541 = vadd.f32 0.0, %v540
      %v542 = vpop.f32.mrb[0].mxu0
      %v543 = vpop.f32.mrb[0].mxu0
      %v544 = vadd.f32 0.0, %v543
      %v545 = vpop.f32.mrb[0].mxu0
      %546 = vdwg.mxu0
      %v547 = vld [vmem:[%s2] sm:$0x1]
      %v549 = vlaneseq
      %v550 = vshrl.u32 %v549, 7
      %v551 = vsub.s32 0, %v550
      %v552 = vrot.slane %v547, %v551
      %v554 = vmul.f32 %v421, %v552
      %v555 = vmul.f32 %v424, %v552
      %v556 = vmul.f32 %v429, %v552
      %v557 = vmul.f32 %v432, %v552
      %v558 = vmul.f32 %v437, %v552
      %v559 = vmul.f32 %v440, %v552
      %v560 = vmul.f32 %v445, %v552
      %v561 = vmul.f32 %v448, %v552
      %v562 = vmul.f32 %v453, %v552
      %v563 = vmul.f32 %v456, %v552
      %v564 = vmul.f32 %v461, %v552
      %v565 = vmul.f32 %v464, %v552
      %v566 = vmul.f32 %v469, %v552
      %v567 = vmul.f32 %v472, %v552
      %v568 = vmul.f32 %v477, %v552
      %v569 = vmul.f32 %v480, %v552
      %v570 = vmul.f32 %v485, %v552
      %v571 = vmul.f32 %v488, %v552
      %v572 = vmul.f32 %v493, %v552
      %v573 = vmul.f32 %v496, %v552
      %v574 = vmul.f32 %v501, %v552
      %v575 = vmul.f32 %v504, %v552
      %v576 = vmul.f32 %v509, %v552
      %v577 = vmul.f32 %v512, %v552
      %v578 = vmul.f32 %v517, %v552
      %v579 = vmul.f32 %v520, %v552
      %v580 = vmul.f32 %v525, %v552
      %v581 = vmul.f32 %v528, %v552
      %v582 = vmul.f32 %v533, %v552
      %v583 = vmul.f32 %v536, %v552
      %v584 = vmul.f32 %v541, %v552
      %v585 = vmul.f32 %v544, %v552
      %v586 = vld [vmem:[%s3] sm:$0x1]
      %v588 = vlaneseq
      %v589 = vshrl.u32 %v588, 7
      %v590 = vsub.s32 0, %v589
      %v591 = vrot.slane %v586, %v590
      %v593 = vadd.f32 %v554, %v591
      %v594 = vadd.f32 %v555, %v591
      %v595 = vadd.f32 %v556, %v591
      %v596 = vadd.f32 %v557, %v591
      %v597 = vadd.f32 %v558, %v591
      %v598 = vadd.f32 %v559, %v591
      %v599 = vadd.f32 %v560, %v591
      %v600 = vadd.f32 %v561, %v591
      %v601 = vadd.f32 %v562, %v591
      %v602 = vadd.f32 %v563, %v591
      %v603 = vadd.f32 %v564, %v591
      %v604 = vadd.f32 %v565, %v591
      %v605 = vadd.f32 %v566, %v591
      %v606 = vadd.f32 %v567, %v591
      %v607 = vadd.f32 %v568, %v591
      %v608 = vadd.f32 %v569, %v591
      %v609 = vadd.f32 %v570, %v591
      %v610 = vadd.f32 %v571, %v591
      %v611 = vadd.f32 %v572, %v591
      %v612 = vadd.f32 %v573, %v591
      %v613 = vadd.f32 %v574, %v591
      %v614 = vadd.f32 %v575, %v591
      %v615 = vadd.f32 %v576, %v591
      %v616 = vadd.f32 %v577, %v591
      %v617 = vadd.f32 %v578, %v591
      %v618 = vadd.f32 %v579, %v591
      %v619 = vadd.f32 %v580, %v591
      %v620 = vadd.f32 %v581, %v591
      %v621 = vadd.f32 %v582, %v591
      %v622 = vadd.f32 %v583, %v591
      %v623 = vadd.f32 %v584, %v591
      %v624 = vadd.f32 %v585, %v591
      %v625 = vmax.f32 %v593, 0.0
      %v626 = vmax.f32 %v594, 0.0
      %v627 = vmax.f32 %v595, 0.0
      %v628 = vmax.f32 %v596, 0.0
      %v629 = vmax.f32 %v597, 0.0
      %v630 = vmax.f32 %v598, 0.0
      %v631 = vmax.f32 %v599, 0.0
      %v632 = vmax.f32 %v600, 0.0
      %v633 = vmax.f32 %v601, 0.0
      %v634 = vmax.f32 %v602, 0.0
      %v635 = vmax.f32 %v603, 0.0
      %v636 = vmax.f32 %v604, 0.0
      %v637 = vmax.f32 %v605, 0.0
      %v638 = vmax.f32 %v606, 0.0
      %v639 = vmax.f32 %v607, 0.0
      %v640 = vmax.f32 %v608, 0.0
      %v641 = vmax.f32 %v609, 0.0
      %v642 = vmax.f32 %v610, 0.0
      %v643 = vmax.f32 %v611, 0.0
      %v644 = vmax.f32 %v612, 0.0
      %v645 = vmax.f32 %v613, 0.0
      %v646 = vmax.f32 %v614, 0.0
      %v647 = vmax.f32 %v615, 0.0
      %v648 = vmax.f32 %v616, 0.0
      %v649 = vmax.f32 %v617, 0.0
      %v650 = vmax.f32 %v618, 0.0
      %v651 = vmax.f32 %v619, 0.0
      %v652 = vmax.f32 %v620, 0.0
      %v653 = vmax.f32 %v621, 0.0
      %v654 = vmax.f32 %v622, 0.0
      %v655 = vmax.f32 %v623, 0.0
      %v656 = vmax.f32 %v624, 0.0
      %vm657 = vcmask 64512
      %658 = vst.msk [vmem:[%s202] sm:$0xff] %vm657, %v625
      %659 = vst.msk [vmem:[%s202 + $0x8] sm:$0xff] %vm657, %v626
      %660 = vst.msk [vmem:[%s202 + $0x10] sm:$0xff] %vm657, %v627
      %661 = vst.msk [vmem:[%s202 + $0x18] sm:$0xff] %vm657, %v628
      %662 = vst.msk [vmem:[%s202 + $0x20] sm:$0xff] %vm657, %v629
      %663 = vst.msk [vmem:[%s202 + $0x28] sm:$0xff] %vm657, %v630
      %664 = vst.msk [vmem:[%s202 + $0x30] sm:$0xff] %vm657, %v631
      %665 = vst.msk [vmem:[%s202 + $0x38] sm:$0xff] %vm657, %v632
      %666 = vst.msk [vmem:[%s202 + $0x40] sm:$0xff] %vm657, %v633
      %667 = vst.msk [vmem:[%s202 + $0x48] sm:$0xff] %vm657, %v634
      %668 = vst.msk [vmem:[%s202 + $0x50] sm:$0xff] %vm657, %v635
      %669 = vst.msk [vmem:[%s202 + $0x58] sm:$0xff] %vm657, %v636
      %670 = vst.msk [vmem:[%s202 + $0x60] sm:$0xff] %vm657, %v637
      %671 = vst.msk [vmem:[%s202 + $0x68] sm:$0xff] %vm657, %v638
      %672 = vst.msk [vmem:[%s202 + $0x70] sm:$0xff] %vm657, %v639
      %673 = vst.msk [vmem:[%s202 + $0x78] sm:$0xff] %vm657, %v640
      %674 = vst.msk [vmem:[%s202 + $0x80] sm:$0xff] %vm657, %v641
      %675 = vst.msk [vmem:[%s202 + $0x88] sm:$0xff] %vm657, %v642
      %676 = vst.msk [vmem:[%s202 + $0x90] sm:$0xff] %vm657, %v643
      %677 = vst.msk [vmem:[%s202 + $0x98] sm:$0xff] %vm657, %v644
      %678 = vst.msk [vmem:[%s202 + $0xa0] sm:$0xff] %vm657, %v645
      %679 = vst.msk [vmem:[%s202 + $0xa8] sm:$0xff] %vm657, %v646
      %680 = vst.msk [vmem:[%s202 + $0xb0] sm:$0xff] %vm657, %v647
      %681 = vst.msk [vmem:[%s202 + $0xb8] sm:$0xff] %vm657, %v648
      %682 = vst.msk [vmem:[%s202 + $0xc0] sm:$0xff] %vm657, %v649
      %683 = vst.msk [vmem:[%s202 + $0xc8] sm:$0xff] %vm657, %v650
      %684 = vst.msk [vmem:[%s202 + $0xd0] sm:$0xff] %vm657, %v651
      %685 = vst.msk [vmem:[%s202 + $0xd8] sm:$0xff] %vm657, %v652
      %686 = vst.msk [vmem:[%s202 + $0xe0] sm:$0xff] %vm657, %v653
      %687 = vst.msk [vmem:[%s202 + $0xe8] sm:$0xff] %vm657, %v654
      %688 = vst.msk [vmem:[%s202 + $0xf0] sm:$0xff] %vm657, %v655
      %689 = vst.msk [vmem:[%s202 + $0xf8] sm:$0xff] %vm657, %v656
      %s690 = smul.u32 32, %s15
      %p691 = scmp.lt.s32.totalorder %s690, 63
      %s692 = scalar_select %p691, %s690, 63
      %s693 = smul.addr %s692, 8
      %s694 = scalar_lea.vmem %s4, %s693
      // Predicated region
      $region37: #{forward.32} parent=35 // pred_check
        %p695 = pneg %p122
      $region38: #{forward.32} parent=35 // pred_check_branch
        %697 = sbr.rel (%p695) target = $region40
      $region39: #{forward.32} parent=35 // pred_region
        %s698 = smul.u32 32, %s15
      $region40: #{forward.32} parent=35 // pred_fallthru
        _
    $region36: #{forward.32} parent=5 // pred_fallthru
      _
    %p699 = scmp.le.s32.totalorder 2, %s10
    // Predicated region
    $region41: #{forward.32} parent=5 // pred_check
      %p700 = pneg %p699
    $region42: #{forward.32} parent=5 // pred_check_branch
      %702 = sbr.rel (%p700) target = $region44
    $region43: #{forward.32} parent=5 // pred_region
      %s703 = ssub.s32 %s10, 2
      // Predicated region
      $region45: #{forward.32} parent=43 // pred_check
        %p704 = pneg %p128
      $region46: #{forward.32} parent=43 // pred_check_branch
        %706 = sbr.rel (%p704) target = $region48
      $region47: #{forward.32} parent=43 // pred_region
        %s707 = smul.u32 32, %s16
        %p708 = scmp.lt.s32.totalorder %s707, 63
        %s709 = scalar_select %p708, %s707, 63
        %s710 = smul.addr %s709, 8
        %s711 = scalar_lea.vmem %s4, %s710
      $region48: #{forward.32} parent=43 // pred_fallthru
        _
    $region44: #{forward.32} parent=5 // pred_fallthru
      _
  $region6: #{forward.32} parent=0 // loop_footer
    %s14 = sadd.s32 1, %s10
  $region7: #{forward.32} parent=0 // loop_footer_branch
    %9 = sbr.rel target = $region3
  $region8: #{forward.32} parent=0 // loop_exit
    _

// kernel: forward.35
$region0: #{forward.35}
  #allocation0 [shape = 'u32[]', space=smem, size = 0x4, offset = 0x4, fixed_abs, tag = 'smem constant byte address 0x4 - core index']
  #allocation1 [shape = 'u32[144,128]{1,0:T(1,128)}', space=vmem, size = 0x12000, scoped, tag = 'internal scratch']
  %s0 = inlined_call_operand.vmem [shape: f32[128,12], index: 0, kind: input, shape index: {}]
  %s1 = inlined_call_operand.vmem [shape: f32[1,12], index: 1, kind: input, shape index: {}]
  %s2 = inlined_call_operand.vmem [shape: f32[1,12], index: 2, kind: input, shape index: {}]
  %s3 = inlined_call_operand.vmem [shape: f32[12,8], index: 3, kind: input, shape index: {}]
  %s4 = inlined_call_operand.vmem [shape: f32[1,8], index: 4, kind: input, shape index: {}]
  %s5 = inlined_call_operand.vmem [shape: f32[1,8], index: 5, kind: input, shape index: {}]
  %s6 = inlined_call_operand.vmem [shape: f32[128,8], index: 6, kind: output, shape index: {}]
  %s7 = sld [smem:[#allocation0]]
  $region34: #{forward.35} parent=0
    _
  %s9 = ssub.s32 1, %s7
  %s10 = scalar_select 0, %s9, %s7
  // Predicated region
  $region2: #{forward.35} parent=0 // pred_check
    _
  $region3: #{forward.35} parent=0 // pred_check_branch
    %12 = sbr.rel (0) target = $region5
  $region4: #{forward.35} parent=0 // pred_region
    _
  $region5: #{forward.35} parent=0 // pred_fallthru
    _
  // Predicated region
  $region6: #{forward.35} parent=0 // pred_check
    _
  $region7: #{forward.35} parent=0 // pred_check_branch
    %14 = sbr.rel (0) target = $region9
  $region8: #{forward.35} parent=0 // pred_region
    _
  $region9: #{forward.35} parent=0 // pred_fallthru
    _
  // Predicated region
  $region10: #{forward.35} parent=0 // pred_check
    _
  $region11: #{forward.35} parent=0 // pred_check_branch
    %16 = sbr.rel (0) target = $region13
  $region12: #{forward.35} parent=0 // pred_region
    _
  $region13: #{forward.35} parent=0 // pred_fallthru
    _
  // Predicated region
  $region14: #{forward.35} parent=0 // pred_check
    _
  $region15: #{forward.35} parent=0 // pred_check_branch
    %18 = sbr.rel (0) target = $region17
  $region16: #{forward.35} parent=0 // pred_region
    _
  $region17: #{forward.35} parent=0 // pred_fallthru
    _
  // Predicated region
  $region18: #{forward.35} parent=0 // pred_check
    _
  $region19: #{forward.35} parent=0 // pred_check_branch
    %20 = sbr.rel (0) target = $region21
  $region20: #{forward.35} parent=0 // pred_region
    _
  $region21: #{forward.35} parent=0 // pred_fallthru
    _
  // Predicated region
  $region22: #{forward.35} parent=0 // pred_check
    _
  $region23: #{forward.35} parent=0 // pred_check_branch
    %22 = sbr.rel (0) target = $region25
  $region24: #{forward.35} parent=0 // pred_region
    _
  $region25: #{forward.35} parent=0 // pred_fallthru
    _
  %v24 = vld [vmem:[%s0] sm:$0xff]
  %v25 = vld [vmem:[%s0 + $0x8] sm:$0xff]
  %v26 = vld [vmem:[%s0 + $0x10] sm:$0xff]
  %v27 = vld [vmem:[%s0 + $0x18] sm:$0xff]
  %v28 = vld [vmem:[%s0 + $0x20] sm:$0xff]
  %v29 = vld [vmem:[%s0 + $0x28] sm:$0xff]
  %v30 = vld [vmem:[%s0 + $0x30] sm:$0xff]
  %v31 = vld [vmem:[%s0 + $0x38] sm:$0xff]
  %v32 = vld [vmem:[%s0 + $0x40] sm:$0xff]
  %v33 = vld [vmem:[%s0 + $0x48] sm:$0xff]
  %v34 = vld [vmem:[%s0 + $0x50] sm:$0xff]
  %v35 = vld [vmem:[%s0 + $0x58] sm:$0xff]
  %v36 = vld [vmem:[%s0 + $0x60] sm:$0xff]
  %v37 = vld [vmem:[%s0 + $0x68] sm:$0xff]
  %v38 = vld [vmem:[%s0 + $0x70] sm:$0xff]
  %v39 = vld [vmem:[%s0 + $0x78] sm:$0xff]
  %v40 = vld [vmem:[%s1] sm:$0x1]
  %v42 = vlaneseq
  %v43 = vshrl.u32 %v42, 7
  %v44 = vsub.s32 0, %v43
  %v45 = vrot.slane %v40, %v44
  %v47 = vmul.f32 %v24, %v45
  %v48 = vmul.f32 %v25, %v45
  %v49 = vmul.f32 %v26, %v45
  %v50 = vmul.f32 %v27, %v45
  %v51 = vmul.f32 %v28, %v45
  %v52 = vmul.f32 %v29, %v45
  %v53 = vmul.f32 %v30, %v45
  %v54 = vmul.f32 %v31, %v45
  %v55 = vmul.f32 %v32, %v45
  %v56 = vmul.f32 %v33, %v45
  %v57 = vmul.f32 %v34, %v45
  %v58 = vmul.f32 %v35, %v45
  %v59 = vmul.f32 %v36, %v45
  %v60 = vmul.f32 %v37, %v45
  %v61 = vmul.f32 %v38, %v45
  %v62 = vmul.f32 %v39, %v45
  %v63 = vld [vmem:[%s2] sm:$0x1]
  %v65 = vlaneseq
  %v66 = vshrl.u32 %v65, 7
  %v67 = vsub.s32 0, %v66
  %v68 = vrot.slane %v63, %v67
  %v70 = vadd.f32 %v47, %v68
  %v71 = vadd.f32 %v48, %v68
  %v72 = vadd.f32 %v49, %v68
  %v73 = vadd.f32 %v50, %v68
  %v74 = vadd.f32 %v51, %v68
  %v75 = vadd.f32 %v52, %v68
  %v76 = vadd.f32 %v53, %v68
  %v77 = vadd.f32 %v54, %v68
  %v78 = vadd.f32 %v55, %v68
  %v79 = vadd.f32 %v56, %v68
  %v80 = vadd.f32 %v57, %v68
  %v81 = vadd.f32 %v58, %v68
  %v82 = vadd.f32 %v59, %v68
  %v83 = vadd.f32 %v60, %v68
  %v84 = vadd.f32 %v61, %v68
  %v85 = vadd.f32 %v62, %v68
  %v86 = vmax.f32 %v70, 0.0
  %v87 = vmax.f32 %v71, 0.0
  %v88 = vmax.f32 %v72, 0.0
  %v89 = vmax.f32 %v73, 0.0
  %v90 = vmax.f32 %v74, 0.0
  %v91 = vmax.f32 %v75, 0.0
  %v92 = vmax.f32 %v76, 0.0
  %v93 = vmax.f32 %v77, 0.0
  %v94 = vmax.f32 %v78, 0.0
  %v95 = vmax.f32 %v79, 0.0
  %v96 = vmax.f32 %v80, 0.0
  %v97 = vmax.f32 %v81, 0.0
  %v98 = vmax.f32 %v82, 0.0
  %v99 = vmax.f32 %v83, 0.0
  %v100 = vmax.f32 %v84, 0.0
  %v101 = vmax.f32 %v85, 0.0
  %v102 = vpack.c.bf16 %v87, %v86
  %v103 = vpack.c.bf16 %v89, %v88
  %v104 = vpack.c.bf16 %v91, %v90
  %v105 = vpack.c.bf16 %v93, %v92
  %v106 = vpack.c.bf16 %v95, %v94
  %v107 = vpack.c.bf16 %v97, %v96
  %v108 = vpack.c.bf16 %v99, %v98
  %v109 = vpack.c.bf16 %v101, %v100
  %v110 = vld [vmem:[%s3] sm:$0xff]
  %v111 = vld [vmem:[%s3 + $0x8] sm:$0xf]
  %v112 = vpack.c.bf16 %v111, %v110
  %vm113 = vcmask 97280
  %v115 = vsel %vm113, %v102, 0
  %v118 = vsel %vm113, %v103, 0
  %v121 = vsel %vm113, %v104, 0
  %v124 = vsel %vm113, %v105, 0
  %v127 = vsel %vm113, %v106, 0
  %v130 = vsel %vm113, %v107, 0
  %v133 = vsel %vm113, %v108, 0
  %v136 = vsel %vm113, %v109, 0
  %vm138 = vcmask 1045504
  %v140 = vsel %vm138, %v112, 0
  %142 = vmatprep.subr.bf16.mxu0 0
  %143 = vmatpush1.bf16.msra.mxu0 %v140
  %144 = vmatprep.subr.bf16.mxu0 0
  %145 = vmatpush1.bf16.msra.mxu0 0
  %146 = vmatprep.subr.bf16.mxu0 0
  %147 = vmatpush1.bf16.msra.mxu0 0
  %148 = vmatprep.subr.bf16.mxu0 0
  %149 = vmatpush1.bf16.msra.mxu0 0
  %150 = vmatprep.subr.bf16.mxu0 0
  %151 = vmatpush1.bf16.msra.mxu0 0
  %152 = vmatprep.subr.bf16.mxu0 0
  %153 = vmatpush1.bf16.msra.mxu0 0
  %154 = vmatprep.subr.bf16.mxu0 0
  %155 = vmatpush1.bf16.msra.mxu0 0
  %156 = vmatprep.subr.bf16.mxu0 0
  %157 = vmatpush1.bf16.msra.mxu0 0
  %158 = vmatprep.subr.bf16.mxu0 0
  %159 = vmatpush1.bf16.msra.mxu0 0
  %160 = vmatprep.subr.bf16.mxu0 0
  %161 = vmatpush1.bf16.msra.mxu0 0
  %162 = vmatprep.subr.bf16.mxu0 0
  %163 = vmatpush1.bf16.msra.mxu0 0
  %164 = vmatprep.subr.bf16.mxu0 0
  %165 = vmatpush1.bf16.msra.mxu0 0
  %166 = vmatprep.subr.bf16.mxu0 0
  %167 = vmatpush1.bf16.msra.mxu0 0
  %168 = vmatprep.subr.bf16.mxu0 0
  %169 = vmatpush1.bf16.msra.mxu0 0
  %170 = vmatprep.subr.bf16.mxu0 0
  %171 = vmatpush1.bf16.msra.mxu0 0
  %172 = vmatprep.subr.bf16.mxu0 0
  %173 = vmatpush1.bf16.msra.mxu0 0
  %174 = vmatprep.mubr.bf16.mxu0 0
  %175 = vmatmul.mubr.bf16.gmra.mrb[0].mxu0 %v115
  %v176 = vpop.f32.mrb[0].mxu0
  %v177 = vadd.f32 0.0, %v176
  %v178 = vpop.f32.mrb[0].mxu0
  %v179 = vpop.f32.mrb[0].mxu0
  %v180 = vadd.f32 0.0, %v179
  %v181 = vpop.f32.mrb[0].mxu0
  %182 = vmatprep.mubr.bf16.mxu0 0
  %183 = vmatmul.mubr.bf16.gmra.mrb[0].mxu0 %v118
  %v184 = vpop.f32.mrb[0].mxu0
  %v185 = vadd.f32 0.0, %v184
  %v186 = vpop.f32.mrb[0].mxu0
  %v187 = vpop.f32.mrb[0].mxu0
  %v188 = vadd.f32 0.0, %v187
  %v189 = vpop.f32.mrb[0].mxu0
  %190 = vmatprep.mubr.bf16.mxu0 0
  %191 = vmatmul.mubr.bf16.gmra.mrb[0].mxu0 %v121
  %v192 = vpop.f32.mrb[0].mxu0
  %v193 = vadd.f32 0.0, %v192
  %v194 = vpop.f32.mrb[0].mxu0
  %v195 = vpop.f32.mrb[0].mxu0
  %v196 = vadd.f32 0.0, %v195
  %v197 = vpop.f32.mrb[0].mxu0
  %198 = vmatprep.mubr.bf16.mxu0 0
  %199 = vmatmul.mubr.bf16.gmra.mrb[0].mxu0 %v124
  %v200 = vpop.f32.mrb[0].mxu0
  %v201 = vadd.f32 0.0, %v200
  %v202 = vpop.f32.mrb[0].mxu0
  %v203 = vpop.f32.mrb[0].mxu0
  %v204 = vadd.f32 0.0, %v203
  %v205 = vpop.f32.mrb[0].mxu0
  %206 = vmatprep.mubr.bf16.mxu0 0
  %207 = vmatmul.mubr.bf16.gmra.mrb[0].mxu0 %v127
  %v208 = vpop.f32.mrb[0].mxu0
  %v209 = vadd.f32 0.0, %v208
  %v210 = vpop.f32.mrb[0].mxu0
  %v211 = vpop.f32.mrb[0].mxu0
  %v212 = vadd.f32 0.0, %v211
  %v213 = vpop.f32.mrb[0].mxu0
  %214 = vmatprep.mubr.bf16.mxu0 0
  %215 = vmatmul.mubr.bf16.gmra.mrb[0].mxu0 %v130
  %v216 = vpop.f32.mrb[0].mxu0
  %v217 = vadd.f32 0.0, %v216
  %v218 = vpop.f32.mrb[0].mxu0
  %v219 = vpop.f32.mrb[0].mxu0
  %v220 = vadd.f32 0.0, %v219
  %v221 = vpop.f32.mrb[0].mxu0
  %222 = vmatprep.mubr.bf16.mxu0 0
  %223 = vmatmul.mubr.bf16.gmra.mrb[0].mxu0 %v133
  %v224 = vpop.f32.mrb[0].mxu0
  %v225 = vadd.f32 0.0, %v224
  %v226 = vpop.f32.mrb[0].mxu0
  %v227 = vpop.f32.mrb[0].mxu0
  %v228 = vadd.f32 0.0, %v227
  %v229 = vpop.f32.mrb[0].mxu0
  %230 = vmatprep.mubr.bf16.mxu0 0
  %231 = vmatmul.mubr.bf16.gmra.mrb[0].mxu0 %v136
  %v232 = vpop.f32.mrb[0].mxu0
  %v233 = vadd.f32 0.0, %v232
  %v234 = vpop.f32.mrb[0].mxu0
  %v235 = vpop.f32.mrb[0].mxu0
  %v236 = vadd.f32 0.0, %v235
  %v237 = vpop.f32.mrb[0].mxu0
  %238 = vdwg.mxu0
  %v239 = vld [vmem:[%s4] sm:$0x1]
  %v241 = vlaneseq
  %v242 = vshrl.u32 %v241, 7
  %v243 = vsub.s32 0, %v242
  %v244 = vrot.slane %v239, %v243
  %v246 = vmul.f32 %v177, %v244
  %v247 = vmul.f32 %v180, %v244
  %v248 = vmul.f32 %v185, %v244
  %v249 = vmul.f32 %v188, %v244
  %v250 = vmul.f32 %v193, %v244
  %v251 = vmul.f32 %v196, %v244
  %v252 = vmul.f32 %v201, %v244
  %v253 = vmul.f32 %v204, %v244
  %v254 = vmul.f32 %v209, %v244
  %v255 = vmul.f32 %v212, %v244
  %v256 = vmul.f32 %v217, %v244
  %v257 = vmul.f32 %v220, %v244
  %v258 = vmul.f32 %v225, %v244
  %v259 = vmul.f32 %v228, %v244
  %v260 = vmul.f32 %v233, %v244
  %v261 = vmul.f32 %v236, %v244
  %v262 = vld [vmem:[%s5] sm:$0x1]
  %v264 = vlaneseq
  %v265 = vshrl.u32 %v264, 7
  %v266 = vsub.s32 0, %v265
  %v267 = vrot.slane %v262, %v266
  %v269 = vadd.f32 %v246, %v267
  %v270 = vadd.f32 %v247, %v267
  %v271 = vadd.f32 %v248, %v267
  %v272 = vadd.f32 %v249, %v267
  %v273 = vadd.f32 %v250, %v267
  %v274 = vadd.f32 %v251, %v267
  %v275 = vadd.f32 %v252, %v267
  %v276 = vadd.f32 %v253, %v267
  %v277 = vadd.f32 %v254, %v267
  %v278 = vadd.f32 %v255, %v267
  %v279 = vadd.f32 %v256, %v267
  %v280 = vadd.f32 %v257, %v267
  %v281 = vadd.f32 %v258, %v267
  %v282 = vadd.f32 %v259, %v267
  %v283 = vadd.f32 %v260, %v267
  %v284 = vadd.f32 %v261, %v267
  %v285 = vmax.f32 %v269, 0.0
  %v286 = vmax.f32 %v270, 0.0
  %v287 = vmax.f32 %v271, 0.0
  %v288 = vmax.f32 %v272, 0.0
  %v289 = vmax.f32 %v273, 0.0
  %v290 = vmax.f32 %v274, 0.0
  %v291 = vmax.f32 %v275, 0.0
  %v292 = vmax.f32 %v276, 0.0
  %v293 = vmax.f32 %v277, 0.0
  %v294 = vmax.f32 %v278, 0.0
  %v295 = vmax.f32 %v279, 0.0
  %v296 = vmax.f32 %v280, 0.0
  %v297 = vmax.f32 %v281, 0.0
  %v298 = vmax.f32 %v282, 0.0
  %v299 = vmax.f32 %v283, 0.0
  %v300 = vmax.f32 %v284, 0.0
  %vm301 = vcmask 64512
  %302 = vst.msk [vmem:[%s6] sm:$0xff] %vm301, %v285
  %303 = vst.msk [vmem:[%s6 + $0x8] sm:$0xff] %vm301, %v286
  %304 = vst.msk [vmem:[%s6 + $0x10] sm:$0xff] %vm301, %v287
  %305 = vst.msk [vmem:[%s6 + $0x18] sm:$0xff] %vm301, %v288
  %306 = vst.msk [vmem:[%s6 + $0x20] sm:$0xff] %vm301, %v289
  %307 = vst.msk [vmem:[%s6 + $0x28] sm:$0xff] %vm301, %v290
  %308 = vst.msk [vmem:[%s6 + $0x30] sm:$0xff] %vm301, %v291
  %309 = vst.msk [vmem:[%s6 + $0x38] sm:$0xff] %vm301, %v292
  %310 = vst.msk [vmem:[%s6 + $0x40] sm:$0xff] %vm301, %v293
  %311 = vst.msk [vmem:[%s6 + $0x48] sm:$0xff] %vm301, %v294
  %312 = vst.msk [vmem:[%s6 + $0x50] sm:$0xff] %vm301, %v295
  %313 = vst.msk [vmem:[%s6 + $0x58] sm:$0xff] %vm301, %v296
  %314 = vst.msk [vmem:[%s6 + $0x60] sm:$0xff] %vm301, %v297
  %315 = vst.msk [vmem:[%s6 + $0x68] sm:$0xff] %vm301, %v298
  %316 = vst.msk [vmem:[%s6 + $0x70] sm:$0xff] %vm301, %v299
  %317 = vst.msk [vmem:[%s6 + $0x78] sm:$0xff] %vm301, %v300
  // Predicated region
  $region26: #{forward.35} parent=0 // pred_check
    _
  $region27: #{forward.35} parent=0 // pred_check_branch
    %319 = sbr.rel (0) target = $region29
  $region28: #{forward.35} parent=0 // pred_region
    _
  $region29: #{forward.35} parent=0 // pred_fallthru
    _
  // Predicated region
  $region30: #{forward.35} parent=0 // pred_check
    _
  $region31: #{forward.35} parent=0 // pred_check_branch
    %321 = sbr.rel (0) target = $region33
  $region32: #{forward.35} parent=0 // pred_region
    _
  $region33: #{forward.35} parent=0 // pred_fallthru
    _

// kernel: forward.34
$region0: #{forward.34}
  #allocation0 [shape = 'u32[]', space=smem, size = 0x4, offset = 0x4, fixed_abs, tag = 'smem constant byte address 0x4 - core index']
  #allocation1 [shape = 'u32[144,128]{1,0:T(1,128)}', space=vmem, size = 0x12000, scoped, tag = 'internal scratch']
  %s0 = inlined_call_operand.vmem [shape: f32[128,72], index: 0, kind: input, shape index: {}]
  %s1 = inlined_call_operand.vmem [shape: f32[72,4], index: 1, kind: input, shape index: {}]
  %s2 = inlined_call_operand.vmem [shape: f32[128,4], index: 2, kind: output, shape index: {}]
  %s3 = sld [smem:[#allocation0]]
  $region18: #{forward.34} parent=0
    _
  %s5 = ssub.s32 1, %s3
  %s6 = scalar_select 0, %s5, %s3
  // Predicated region
  $region2: #{forward.34} parent=0 // pred_check
    _
  $region3: #{forward.34} parent=0 // pred_check_branch
    %8 = sbr.rel (0) target = $region5
  $region4: #{forward.34} parent=0 // pred_region
    _
  $region5: #{forward.34} parent=0 // pred_fallthru
    _
  // Predicated region
  $region6: #{forward.34} parent=0 // pred_check
    _
  $region7: #{forward.34} parent=0 // pred_check_branch
    %10 = sbr.rel (0) target = $region9
  $region8: #{forward.34} parent=0 // pred_region
    _
  $region9: #{forward.34} parent=0 // pred_fallthru
    _
  %v12 = vld [vmem:[%s0] sm:$0xff]
  %v13 = vld [vmem:[%s0 + $0x8] sm:$0xff]
  %v14 = vld [vmem:[%s0 + $0x10] sm:$0xff]
  %v15 = vld [vmem:[%s0 + $0x18] sm:$0xff]
  %v16 = vld [vmem:[%s0 + $0x20] sm:$0xff]
  %v17 = vld [vmem:[%s0 + $0x28] sm:$0xff]
  %v18 = vld [vmem:[%s0 + $0x30] sm:$0xff]
  %v19 = vld [vmem:[%s0 + $0x38] sm:$0xff]
  %v20 = vld [vmem:[%s0 + $0x40] sm:$0xff]
  %v21 = vld [vmem:[%s0 + $0x48] sm:$0xff]
  %v22 = vld [vmem:[%s0 + $0x50] sm:$0xff]
  %v23 = vld [vmem:[%s0 + $0x58] sm:$0xff]
  %v24 = vld [vmem:[%s0 + $0x60] sm:$0xff]
  %v25 = vld [vmem:[%s0 + $0x68] sm:$0xff]
  %v26 = vld [vmem:[%s0 + $0x70] sm:$0xff]
  %v27 = vld [vmem:[%s0 + $0x78] sm:$0xff]
  %v28 = vpack.c.bf16 %v13, %v12
  %v29 = vpack.c.bf16 %v15, %v14
  %v30 = vpack.c.bf16 %v17, %v16
  %v31 = vpack.c.bf16 %v19, %v18
  %v32 = vpack.c.bf16 %v21, %v20
  %v33 = vpack.c.bf16 %v23, %v22
  %v34 = vpack.c.bf16 %v25, %v24
  %v35 = vpack.c.bf16 %v27, %v26
  %v36 = vld [vmem:[%s1] sm:$0xff]
  %v37 = vld [vmem:[%s1 + $0x8] sm:$0xff]
  %v38 = vld [vmem:[%s1 + $0x10] sm:$0xff]
  %v39 = vld [vmem:[%s1 + $0x18] sm:$0xff]
  %v40 = vld [vmem:[%s1 + $0x20] sm:$0xff]
  %v41 = vld [vmem:[%s1 + $0x28] sm:$0xff]
  %v42 = vld [vmem:[%s1 + $0x30] sm:$0xff]
  %v43 = vld [vmem:[%s1 + $0x38] sm:$0xff]
  %v44 = vld [vmem:[%s1 + $0x40] sm:$0xff]
  %v45 = vpack.c.bf16 %v37, %v36
  %v46 = vpack.c.bf16 %v39, %v38
  %v47 = vpack.c.bf16 %v41, %v40
  %v48 = vpack.c.bf16 %v43, %v42
  %v49 = vpack.c.bf16 %v44, %v44
  %vm50 = vcmask 588800
  %v52 = vsel %vm50, %v28, 0
  %v55 = vsel %vm50, %v29, 0
  %v58 = vsel %vm50, %v30, 0
  %v61 = vsel %vm50, %v31, 0
  %v64 = vsel %vm50, %v32, 0
  %v67 = vsel %vm50, %v33, 0
  %v70 = vsel %vm50, %v34, 0
  %v73 = vsel %vm50, %v35, 0
  %vm75 = vcmask 1043456
  %v77 = vsel %vm75, %v49, 0
  %79 = vmatprep.subr.bf16.mxu0 0
  %80 = vmatpush1.bf16.msra.mxu0 %v45
  %81 = vmatprep.subr.bf16.mxu0 0
  %82 = vmatpush1.bf16.msra.mxu0 %v46
  %83 = vmatprep.subr.bf16.mxu0 0
  %84 = vmatpush1.bf16.msra.mxu0 %v47
  %85 = vmatprep.subr.bf16.mxu0 0
  %86 = vmatpush1.bf16.msra.mxu0 %v48
  %87 = vmatprep.subr.bf16.mxu0 0
  %88 = vmatpush1.bf16.msra.mxu0 %v77
  %89 = vmatprep.subr.bf16.mxu0 0
  %90 = vmatpush1.bf16.msra.mxu0 0
  %91 = vmatprep.subr.bf16.mxu0 0
  %92 = vmatpush1.bf16.msra.mxu0 0
  %93 = vmatprep.subr.bf16.mxu0 0
  %94 = vmatpush1.bf16.msra.mxu0 0
  %95 = vmatprep.subr.bf16.mxu0 0
  %96 = vmatpush1.bf16.msra.mxu0 0
  %97 = vmatprep.subr.bf16.mxu0 0
  %98 = vmatpush1.bf16.msra.mxu0 0
  %99 = vmatprep.subr.bf16.mxu0 0
  %100 = vmatpush1.bf16.msra.mxu0 0
  %101 = vmatprep.subr.bf16.mxu0 0
  %102 = vmatpush1.bf16.msra.mxu0 0
  %103 = vmatprep.subr.bf16.mxu0 0
  %104 = vmatpush1.bf16.msra.mxu0 0
  %105 = vmatprep.subr.bf16.mxu0 0
  %106 = vmatpush1.bf16.msra.mxu0 0
  %107 = vmatprep.subr.bf16.mxu0 0
  %108 = vmatpush1.bf16.msra.mxu0 0
  %109 = vmatprep.subr.bf16.mxu0 0
  %110 = vmatpush1.bf16.msra.mxu0 0
  %111 = vmatprep.mubr.bf16.mxu0 0
  %112 = vmatmul.mubr.bf16.gmra.mrb[0].mxu0 %v52
  %v113 = vpop.f32.mrb[0].mxu0
  %v114 = vadd.f32 0.0, %v113
  %v115 = vpop.f32.mrb[0].mxu0
  %v116 = vpop.f32.mrb[0].mxu0
  %v117 = vadd.f32 0.0, %v116
  %v118 = vpop.f32.mrb[0].mxu0
  %119 = vmatprep.mubr.bf16.mxu0 0
  %120 = vmatmul.mubr.bf16.gmra.mrb[0].mxu0 %v55
  %v121 = vpop.f32.mrb[0].mxu0
  %v122 = vadd.f32 0.0, %v121
  %v123 = vpop.f32.mrb[0].mxu0
  %v124 = vpop.f32.mrb[0].mxu0
  %v125 = vadd.f32 0.0, %v124
  %v126 = vpop.f32.mrb[0].mxu0
  %127 = vmatprep.mubr.bf16.mxu0 0
  %128 = vmatmul.mubr.bf16.gmra.mrb[0].mxu0 %v58
  %v129 = vpop.f32.mrb[0].mxu0
  %v130 = vadd.f32 0.0, %v129
  %v131 = vpop.f32.mrb[0].mxu0
  %v132 = vpop.f32.mrb[0].mxu0
  %v133 = vadd.f32 0.0, %v132
  %v134 = vpop.f32.mrb[0].mxu0
  %135 = vmatprep.mubr.bf16.mxu0 0
  %136 = vmatmul.mubr.bf16.gmra.mrb[0].mxu0 %v61
  %v137 = vpop.f32.mrb[0].mxu0
  %v138 = vadd.f32 0.0, %v137
  %v139 = vpop.f32.mrb[0].mxu0
  %v140 = vpop.f32.mrb[0].mxu0
  %v141 = vadd.f32 0.0, %v140
  %v142 = vpop.f32.mrb[0].mxu0
  %143 = vmatprep.mubr.bf16.mxu0 0
  %144 = vmatmul.mubr.bf16.gmra.mrb[0].mxu0 %v64
  %v145 = vpop.f32.mrb[0].mxu0
  %v146 = vadd.f32 0.0, %v145
  %v147 = vpop.f32.mrb[0].mxu0
  %v148 = vpop.f32.mrb[0].mxu0
  %v149 = vadd.f32 0.0, %v148
  %v150 = vpop.f32.mrb[0].mxu0
  %151 = vmatprep.mubr.bf16.mxu0 0
  %152 = vmatmul.mubr.bf16.gmra.mrb[0].mxu0 %v67
  %v153 = vpop.f32.mrb[0].mxu0
  %v154 = vadd.f32 0.0, %v153
  %v155 = vpop.f32.mrb[0].mxu0
  %v156 = vpop.f32.mrb[0].mxu0
  %v157 = vadd.f32 0.0, %v156
  %v158 = vpop.f32.mrb[0].mxu0
  %159 = vmatprep.mubr.bf16.mxu0 0
  %160 = vmatmul.mubr.bf16.gmra.mrb[0].mxu0 %v70
  %v161 = vpop.f32.mrb[0].mxu0
  %v162 = vadd.f32 0.0, %v161
  %v163 = vpop.f32.mrb[0].mxu0
  %v164 = vpop.f32.mrb[0].mxu0
  %v165 = vadd.f32 0.0, %v164
  %v166 = vpop.f32.mrb[0].mxu0
  %167 = vmatprep.mubr.bf16.mxu0 0
  %168 = vmatmul.mubr.bf16.gmra.mrb[0].mxu0 %v73
  %v169 = vpop.f32.mrb[0].mxu0
  %v170 = vadd.f32 0.0, %v169
  %v171 = vpop.f32.mrb[0].mxu0
  %v172 = vpop.f32.mrb[0].mxu0
  %v173 = vadd.f32 0.0, %v172
  %v174 = vpop.f32.mrb[0].mxu0
  %175 = vdwg.mxu0
  %vm176 = vcmask 31744
  %177 = vst.msk [vmem:[%s2] sm:$0xff] %vm176, %v114
  %178 = vst.msk [vmem:[%s2 + $0x8] sm:$0xff] %vm176, %v117
  %179 = vst.msk [vmem:[%s2 + $0x10] sm:$0xff] %vm176, %v122
  %180 = vst.msk [vmem:[%s2 + $0x18] sm:$0xff] %vm176, %v125
  %181 = vst.msk [vmem:[%s2 + $0x20] sm:$0xff] %vm176, %v130
  %182 = vst.msk [vmem:[%s2 + $0x28] sm:$0xff] %vm176, %v133
  %183 = vst.msk [vmem:[%s2 + $0x30] sm:$0xff] %vm176, %v138
  %184 = vst.msk [vmem:[%s2 + $0x38] sm:$0xff] %vm176, %v141
  %185 = vst.msk [vmem:[%s2 + $0x40] sm:$0xff] %vm176, %v146
  %186 = vst.msk [vmem:[%s2 + $0x48] sm:$0xff] %vm176, %v149
  %187 = vst.msk [vmem:[%s2 + $0x50] sm:$0xff] %vm176, %v154
  %188 = vst.msk [vmem:[%s2 + $0x58] sm:$0xff] %vm176, %v157
  %189 = vst.msk [vmem:[%s2 + $0x60] sm:$0xff] %vm176, %v162
  %190 = vst.msk [vmem:[%s2 + $0x68] sm:$0xff] %vm176, %v165
  %191 = vst.msk [vmem:[%s2 + $0x70] sm:$0xff] %vm176, %v170
  %192 = vst.msk [vmem:[%s2 + $0x78] sm:$0xff] %vm176, %v173
  // Predicated region
  $region10: #{forward.34} parent=0 // pred_check
    _
  $region11: #{forward.34} parent=0 // pred_check_branch
    %194 = sbr.rel (0) target = $region13
  $region12: #{forward.34} parent=0 // pred_region
    _
  $region13: #{forward.34} parent=0 // pred_fallthru
    _
  // Predicated region
  $region14: #{forward.34} parent=0 // pred_check
    _
  $region15: #{forward.34} parent=0 // pred_check_branch
    %196 = sbr.rel (0) target = $region17
  $region16: #{forward.34} parent=0 // pred_region
    _
  $region17: #{forward.34} parent=0 // pred_fallthru
    _

// kernel: forward.37
$region0: #{forward.37}
  #allocation0 [shape = 'u32[]', space=smem, size = 0x4, offset = 0x4, fixed_abs, tag = 'smem constant byte address 0x4 - core index']
  #allocation1 [shape = 'u32[144,128]{1,0:T(1,128)}', space=vmem, size = 0x12000, scoped, tag = 'internal scratch']
  %s0 = inlined_call_operand.vmem [shape: f32[128,16], index: 0, kind: input, shape index: {}]
  %s1 = inlined_call_operand.vmem [shape: f32[1,16], index: 1, kind: input, shape index: {}]
  %s2 = inlined_call_operand.vmem [shape: f32[1,16], index: 2, kind: input, shape index: {}]
  %s3 = inlined_call_operand.vmem [shape: f32[16,8], index: 3, kind: input, shape index: {}]
  %s4 = inlined_call_operand.vmem [shape: f32[128,8], index: 4, kind: output, shape index: {}]
  %s5 = sld [smem:[#allocation0]]
  $region26: #{forward.37} parent=0
    _
  %s7 = ssub.s32 1, %s5
  %s8 = scalar_select 0, %s7, %s5
  // Predicated region
  $region2: #{forward.37} parent=0 // pred_check
    _
  $region3: #{forward.37} parent=0 // pred_check_branch
    %10 = sbr.rel (0) target = $region5
  $region4: #{forward.37} parent=0 // pred_region
    _
  $region5: #{forward.37} parent=0 // pred_fallthru
    _
  // Predicated region
  $region6: #{forward.37} parent=0 // pred_check
    _
  $region7: #{forward.37} parent=0 // pred_check_branch
    %12 = sbr.rel (0) target = $region9
  $region8: #{forward.37} parent=0 // pred_region
    _
  $region9: #{forward.37} parent=0 // pred_fallthru
    _
  // Predicated region
  $region10: #{forward.37} parent=0 // pred_check
    _
  $region11: #{forward.37} parent=0 // pred_check_branch
    %14 = sbr.rel (0) target = $region13
  $region12: #{forward.37} parent=0 // pred_region
    _
  $region13: #{forward.37} parent=0 // pred_fallthru
    _
  // Predicated region
  $region14: #{forward.37} parent=0 // pred_check
    _
  $region15: #{forward.37} parent=0 // pred_check_branch
    %16 = sbr.rel (0) target = $region17
  $region16: #{forward.37} parent=0 // pred_region
    _
  $region17: #{forward.37} parent=0 // pred_fallthru
    _
  %v18 = vld [vmem:[%s0] sm:$0xff]
  %v19 = vld [vmem:[%s0 + $0x8] sm:$0xff]
  %v20 = vld [vmem:[%s0 + $0x10] sm:$0xff]
  %v21 = vld [vmem:[%s0 + $0x18] sm:$0xff]
  %v22 = vld [vmem:[%s0 + $0x20] sm:$0xff]
  %v23 = vld [vmem:[%s0 + $0x28] sm:$0xff]
  %v24 = vld [vmem:[%s0 + $0x30] sm:$0xff]
  %v25 = vld [vmem:[%s0 + $0x38] sm:$0xff]
  %v26 = vld [vmem:[%s0 + $0x40] sm:$0xff]
  %v27 = vld [vmem:[%s0 + $0x48] sm:$0xff]
  %v28 = vld [vmem:[%s0 + $0x50] sm:$0xff]
  %v29 = vld [vmem:[%s0 + $0x58] sm:$0xff]
  %v30 = vld [vmem:[%s0 + $0x60] sm:$0xff]
  %v31 = vld [vmem:[%s0 + $0x68] sm:$0xff]
  %v32 = vld [vmem:[%s0 + $0x70] sm:$0xff]
  %v33 = vld [vmem:[%s0 + $0x78] sm:$0xff]
  %v34 = vld [vmem:[%s1] sm:$0x1]
  %v36 = vlaneseq
  %v37 = vshrl.u32 %v36, 7
  %v38 = vsub.s32 0, %v37
  %v39 = vrot.slane %v34, %v38
  %v41 = vmul.f32 %v18, %v39
  %v42 = vmul.f32 %v19, %v39
  %v43 = vmul.f32 %v20, %v39
  %v44 = vmul.f32 %v21, %v39
  %v45 = vmul.f32 %v22, %v39
  %v46 = vmul.f32 %v23, %v39
  %v47 = vmul.f32 %v24, %v39
  %v48 = vmul.f32 %v25, %v39
  %v49 = vmul.f32 %v26, %v39
  %v50 = vmul.f32 %v27, %v39
  %v51 = vmul.f32 %v28, %v39
  %v52 = vmul.f32 %v29, %v39
  %v53 = vmul.f32 %v30, %v39
  %v54 = vmul.f32 %v31, %v39
  %v55 = vmul.f32 %v32, %v39
  %v56 = vmul.f32 %v33, %v39
  %v57 = vld [vmem:[%s2] sm:$0x1]
  %v59 = vlaneseq
  %v60 = vshrl.u32 %v59, 7
  %v61 = vsub.s32 0, %v60
  %v62 = vrot.slane %v57, %v61
  %v64 = vadd.f32 %v41, %v62
  %v65 = vadd.f32 %v42, %v62
  %v66 = vadd.f32 %v43, %v62
  %v67 = vadd.f32 %v44, %v62
  %v68 = vadd.f32 %v45, %v62
  %v69 = vadd.f32 %v46, %v62
  %v70 = vadd.f32 %v47, %v62
  %v71 = vadd.f32 %v48, %v62
  %v72 = vadd.f32 %v49, %v62
  %v73 = vadd.f32 %v50, %v62
  %v74 = vadd.f32 %v51, %v62
  %v75 = vadd.f32 %v52, %v62
  %v76 = vadd.f32 %v53, %v62
  %v77 = vadd.f32 %v54, %v62
  %v78 = vadd.f32 %v55, %v62
  %v79 = vadd.f32 %v56, %v62
  %v80 = vmax.f32 %v64, 0.0
  %v81 = vmax.f32 %v65, 0.0
  %v82 = vmax.f32 %v66, 0.0
  %v83 = vmax.f32 %v67, 0.0
  %v84 = vmax.f32 %v68, 0.0
  %v85 = vmax.f32 %v69, 0.0
  %v86 = vmax.f32 %v70, 0.0
  %v87 = vmax.f32 %v71, 0.0
  %v88 = vmax.f32 %v72, 0.0
  %v89 = vmax.f32 %v73, 0.0
  %v90 = vmax.f32 %v74, 0.0
  %v91 = vmax.f32 %v75, 0.0
  %v92 = vmax.f32 %v76, 0.0
  %v93 = vmax.f32 %v77, 0.0
  %v94 = vmax.f32 %v78, 0.0
  %v95 = vmax.f32 %v79, 0.0
  %v96 = vpack.c.bf16 %v81, %v80
  %v97 = vpack.c.bf16 %v83, %v82
  %v98 = vpack.c.bf16 %v85, %v84
  %v99 = vpack.c.bf16 %v87, %v86
  %v100 = vpack.c.bf16 %v89, %v88
  %v101 = vpack.c.bf16 %v91, %v90
  %v102 = vpack.c.bf16 %v93, %v92
  %v103 = vpack.c.bf16 %v95, %v94
  %v104 = vld [vmem:[%s3] sm:$0xff]
  %v105 = vld [vmem:[%s3 + $0x8] sm:$0xff]
  %v106 = vpack.c.bf16 %v105, %v104
  %vm107 = vcmask 130048
  %v109 = vsel %vm107, %v96, 0
  %v112 = vsel %vm107, %v97, 0
  %v115 = vsel %vm107, %v98, 0
  %v118 = vsel %vm107, %v99, 0
  %v121 = vsel %vm107, %v100, 0
  %v124 = vsel %vm107, %v101, 0
  %v127 = vsel %vm107, %v102, 0
  %v130 = vsel %vm107, %v103, 0
  %132 = vmatprep.subr.bf16.mxu0 0
  %133 = vmatpush1.bf16.msra.mxu0 %v106
  %134 = vmatprep.subr.bf16.mxu0 0
  %135 = vmatpush1.bf16.msra.mxu0 0
  %136 = vmatprep.subr.bf16.mxu0 0
  %137 = vmatpush1.bf16.msra.mxu0 0
  %138 = vmatprep.subr.bf16.mxu0 0
  %139 = vmatpush1.bf16.msra.mxu0 0
  %140 = vmatprep.subr.bf16.mxu0 0
  %141 = vmatpush1.bf16.msra.mxu0 0
  %142 = vmatprep.subr.bf16.mxu0 0
  %143 = vmatpush1.bf16.msra.mxu0 0
  %144 = vmatprep.subr.bf16.mxu0 0
  %145 = vmatpush1.bf16.msra.mxu0 0
  %146 = vmatprep.subr.bf16.mxu0 0
  %147 = vmatpush1.bf16.msra.mxu0 0
  %148 = vmatprep.subr.bf16.mxu0 0
  %149 = vmatpush1.bf16.msra.mxu0 0
  %150 = vmatprep.subr.bf16.mxu0 0
  %151 = vmatpush1.bf16.msra.mxu0 0
  %152 = vmatprep.subr.bf16.mxu0 0
  %153 = vmatpush1.bf16.msra.mxu0 0
  %154 = vmatprep.subr.bf16.mxu0 0
  %155 = vmatpush1.bf16.msra.mxu0 0
  %156 = vmatprep.subr.bf16.mxu0 0
  %157 = vmatpush1.bf16.msra.mxu0 0
  %158 = vmatprep.subr.bf16.mxu0 0
  %159 = vmatpush1.bf16.msra.mxu0 0
  %160 = vmatprep.subr.bf16.mxu0 0
  %161 = vmatpush1.bf16.msra.mxu0 0
  %162 = vmatprep.subr.bf16.mxu0 0
  %163 = vmatpush1.bf16.msra.mxu0 0
  %164 = vmatprep.mubr.bf16.mxu0 0
  %165 = vmatmul.mubr.bf16.gmra.mrb[0].mxu0 %v109
  %v166 = vpop.f32.mrb[0].mxu0
  %v167 = vadd.f32 0.0, %v166
  %v168 = vpop.f32.mrb[0].mxu0
  %v169 = vpop.f32.mrb[0].mxu0
  %v170 = vadd.f32 0.0, %v169
  %v171 = vpop.f32.mrb[0].mxu0
  %172 = vmatprep.mubr.bf16.mxu0 0
  %173 = vmatmul.mubr.bf16.gmra.mrb[0].mxu0 %v112
  %v174 = vpop.f32.mrb[0].mxu0
  %v175 = vadd.f32 0.0, %v174
  %v176 = vpop.f32.mrb[0].mxu0
  %v177 = vpop.f32.mrb[0].mxu0
  %v178 = vadd.f32 0.0, %v177
  %v179 = vpop.f32.mrb[0].mxu0
  %180 = vmatprep.mubr.bf16.mxu0 0
  %181 = vmatmul.mubr.bf16.gmra.mrb[0].mxu0 %v115
  %v182 = vpop.f32.mrb[0].mxu0
  %v183 = vadd.f32 0.0, %v182
  %v184 = vpop.f32.mrb[0].mxu0
  %v185 = vpop.f32.mrb[0].mxu0
  %v186 = vadd.f32 0.0, %v185
  %v187 = vpop.f32.mrb[0].mxu0
  %188 = vmatprep.mubr.bf16.mxu0 0
  %189 = vmatmul.mubr.bf16.gmra.mrb[0].mxu0 %v118
  %v190 = vpop.f32.mrb[0].mxu0
  %v191 = vadd.f32 0.0, %v190
  %v192 = vpop.f32.mrb[0].mxu0
  %v193 = vpop.f32.mrb[0].mxu0
  %v194 = vadd.f32 0.0, %v193
  %v195 = vpop.f32.mrb[0].mxu0
  %196 = vmatprep.mubr.bf16.mxu0 0
  %197 = vmatmul.mubr.bf16.gmra.mrb[0].mxu0 %v121
  %v198 = vpop.f32.mrb[0].mxu0
  %v199 = vadd.f32 0.0, %v198
  %v200 = vpop.f32.mrb[0].mxu0
  %v201 = vpop.f32.mrb[0].mxu0
  %v202 = vadd.f32 0.0, %v201
  %v203 = vpop.f32.mrb[0].mxu0
  %204 = vmatprep.mubr.bf16.mxu0 0
  %205 = vmatmul.mubr.bf16.gmra.mrb[0].mxu0 %v124
  %v206 = vpop.f32.mrb[0].mxu0
  %v207 = vadd.f32 0.0, %v206
  %v208 = vpop.f32.mrb[0].mxu0
  %v209 = vpop.f32.mrb[0].mxu0
  %v210 = vadd.f32 0.0, %v209
  %v211 = vpop.f32.mrb[0].mxu0
  %212 = vmatprep.mubr.bf16.mxu0 0
  %213 = vmatmul.mubr.bf16.gmra.mrb[0].mxu0 %v127
  %v214 = vpop.f32.mrb[0].mxu0
  %v215 = vadd.f32 0.0, %v214
  %v216 = vpop.f32.mrb[0].mxu0
  %v217 = vpop.f32.mrb[0].mxu0
  %v218 = vadd.f32 0.0, %v217
  %v219 = vpop.f32.mrb[0].mxu0
  %220 = vmatprep.mubr.bf16.mxu0 0
  %221 = vmatmul.mubr.bf16.gmra.mrb[0].mxu0 %v130
  %v222 = vpop.f32.mrb[0].mxu0
  %v223 = vadd.f32 0.0, %v222
  %v224 = vpop.f32.mrb[0].mxu0
  %v225 = vpop.f32.mrb[0].mxu0
  %v226 = vadd.f32 0.0, %v225
  %v227 = vpop.f32.mrb[0].mxu0
  %228 = vdwg.mxu0
  %vm229 = vcmask 64512
  %230 = vst.msk [vmem:[%s4] sm:$0xff] %vm229, %v167
  %231 = vst.msk [vmem:[%s4 + $0x8] sm:$0xff] %vm229, %v170
  %232 = vst.msk [vmem:[%s4 + $0x10] sm:$0xff] %vm229, %v175
  %233 = vst.msk [vmem:[%s4 + $0x18] sm:$0xff] %vm229, %v178
  %234 = vst.msk [vmem:[%s4 + $0x20] sm:$0xff] %vm229, %v183
  %235 = vst.msk [vmem:[%s4 + $0x28] sm:$0xff] %vm229, %v186
  %236 = vst.msk [vmem:[%s4 + $0x30] sm:$0xff] %vm229, %v191
  %237 = vst.msk [vmem:[%s4 + $0x38] sm:$0xff] %vm229, %v194
  %238 = vst.msk [vmem:[%s4 + $0x40] sm:$0xff] %vm229, %v199
  %239 = vst.msk [vmem:[%s4 + $0x48] sm:$0xff] %vm229, %v202
  %240 = vst.msk [vmem:[%s4 + $0x50] sm:$0xff] %vm229, %v207
  %241 = vst.msk [vmem:[%s4 + $0x58] sm:$0xff] %vm229, %v210
  %242 = vst.msk [vmem:[%s4 + $0x60] sm:$0xff] %vm229, %v215
  %243 = vst.msk [vmem:[%s4 + $0x68] sm:$0xff] %vm229, %v218
  %244 = vst.msk [vmem:[%s4 + $0x70] sm:$0xff] %vm229, %v223
  %245 = vst.msk [vmem:[%s4 + $0x78] sm:$0xff] %vm229, %v226
  // Predicated region
  $region18: #{forward.37} parent=0 // pred_check
    _
  $region19: #{forward.37} parent=0 // pred_check_branch
    %247 = sbr.rel (0) target = $region21
  $region20: #{forward.37} parent=0 // pred_region
    _
  $region21: #{forward.37} parent=0 // pred_fallthru
    _
  // Predicated region
  $region22: #{forward.37} parent=0 // pred_check
    _
  $region23: #{forward.37} parent=0 // pred_check_branch
    %249 = sbr.rel (0) target = $region25
  $region24: #{forward.37} parent=0 // pred_region
    _
  $region25: #{forward.37} parent=0 // pred_fallthru
    _

// kernel: forward.38
$region0: #{forward.38}
  #allocation0 [shape = 'u32[]', space=smem, size = 0x4, offset = 0x4, fixed_abs, tag = 'smem constant byte address 0x4 - core index']
  #allocation1 [shape = 'u32[144,128]{1,0:T(1,128)}', space=vmem, size = 0x12000, scoped, tag = 'internal scratch']
  %s0 = inlined_call_operand.vmem [shape: f32[32,8], index: 0, kind: input, shape index: {}]
  %s1 = inlined_call_operand.vmem [shape: f32[1,8], index: 1, kind: input, shape index: {}]
  %s2 = inlined_call_operand.vmem [shape: f32[1,8], index: 2, kind: input, shape index: {}]
  %s3 = inlined_call_operand.vmem [shape: f32[8,8], index: 3, kind: input, shape index: {}]
  %s4 = inlined_call_operand.vmem [shape: f32[1,8], index: 4, kind: input, shape index: {}]
  %s5 = inlined_call_operand.vmem [shape: f32[1,8], index: 5, kind: input, shape index: {}]
  %s6 = inlined_call_operand.vmem [shape: f32[32,8], index: 6, kind: output, shape index: {}]
  %s7 = sld [smem:[#allocation0]]
  $region34: #{forward.38} parent=0
    _
  %s9 = ssub.s32 1, %s7
  %s10 = scalar_select 0, %s9, %s7
  // Predicated region
  $region2: #{forward.38} parent=0 // pred_check
    _
  $region3: #{forward.38} parent=0 // pred_check_branch
    %12 = sbr.rel (0) target = $region5
  $region4: #{forward.38} parent=0 // pred_region
    _
  $region5: #{forward.38} parent=0 // pred_fallthru
    _
  // Predicated region
  $region6: #{forward.38} parent=0 // pred_check
    _
  $region7: #{forward.38} parent=0 // pred_check_branch
    %14 = sbr.rel (0) target = $region9
  $region8: #{forward.38} parent=0 // pred_region
    _
  $region9: #{forward.38} parent=0 // pred_fallthru
    _
  // Predicated region
  $region10: #{forward.38} parent=0 // pred_check
    _
  $region11: #{forward.38} parent=0 // pred_check_branch
    %16 = sbr.rel (0) target = $region13
  $region12: #{forward.38} parent=0 // pred_region
    _
  $region13: #{forward.38} parent=0 // pred_fallthru
    _
  // Predicated region
  $region14: #{forward.38} parent=0 // pred_check
    _
  $region15: #{forward.38} parent=0 // pred_check_branch
    %18 = sbr.rel (0) target = $region17
  $region16: #{forward.38} parent=0 // pred_region
    _
  $region17: #{forward.38} parent=0 // pred_fallthru
    _
  // Predicated region
  $region18: #{forward.38} parent=0 // pred_check
    _
  $region19: #{forward.38} parent=0 // pred_check_branch
    %20 = sbr.rel (0) target = $region21
  $region20: #{forward.38} parent=0 // pred_region
    _
  $region21: #{forward.38} parent=0 // pred_fallthru
    _
  // Predicated region
  $region22: #{forward.38} parent=0 // pred_check
    _
  $region23: #{forward.38} parent=0 // pred_check_branch
    %22 = sbr.rel (0) target = $region25
  $region24: #{forward.38} parent=0 // pred_region
    _
  $region25: #{forward.38} parent=0 // pred_fallthru
    _
  %v24 = vld [vmem:[%s0] sm:$0xff]
  %v25 = vld [vmem:[%s0 + $0x8] sm:$0xff]
  %v26 = vld [vmem:[%s0 + $0x10] sm:$0xff]
  %v27 = vld [vmem:[%s0 + $0x18] sm:$0xff]
  %v28 = vld [vmem:[%s1] sm:$0x1]
  %v30 = vlaneseq
  %v31 = vshrl.u32 %v30, 7
  %v32 = vsub.s32 0, %v31
  %v33 = vrot.slane %v28, %v32
  %v35 = vmul.f32 %v24, %v33
  %v36 = vmul.f32 %v25, %v33
  %v37 = vmul.f32 %v26, %v33
  %v38 = vmul.f32 %v27, %v33
  %v39 = vld [vmem:[%s2] sm:$0x1]
  %v41 = vlaneseq
  %v42 = vshrl.u32 %v41, 7
  %v43 = vsub.s32 0, %v42
  %v44 = vrot.slane %v39, %v43
  %v46 = vadd.f32 %v35, %v44
  %v47 = vadd.f32 %v36, %v44
  %v48 = vadd.f32 %v37, %v44
  %v49 = vadd.f32 %v38, %v44
  %v50 = vmax.f32 %v46, 0.0
  %v51 = vmax.f32 %v47, 0.0
  %v52 = vmax.f32 %v48, 0.0
  %v53 = vmax.f32 %v49, 0.0
  %v54 = vpack.c.bf16 %v51, %v50
  %v55 = vpack.c.bf16 %v53, %v52
  %v56 = vld [vmem:[%s3] sm:$0xff]
  %v57 = vpack.c.bf16 %v56, %v56
  %vm58 = vcmask 64512
  %v60 = vsel %vm58, %v54, 0
  %v63 = vsel %vm58, %v55, 0
  %vm65 = vcmask 1043456
  %v67 = vsel %vm65, %v57, 0
  %69 = vmatprep.subr.bf16.mxu0 0
  %70 = vmatpush1.bf16.msra.mxu0 %v67
  %71 = vmatprep.subr.bf16.mxu0 0
  %72 = vmatpush1.bf16.msra.mxu0 0
  %73 = vmatprep.subr.bf16.mxu0 0
  %74 = vmatpush1.bf16.msra.mxu0 0
  %75 = vmatprep.subr.bf16.mxu0 0
  %76 = vmatpush1.bf16.msra.mxu0 0
  %77 = vmatprep.subr.bf16.mxu0 0
  %78 = vmatpush1.bf16.msra.mxu0 0
  %79 = vmatprep.subr.bf16.mxu0 0
  %80 = vmatpush1.bf16.msra.mxu0 0
  %81 = vmatprep.subr.bf16.mxu0 0
  %82 = vmatpush1.bf16.msra.mxu0 0
  %83 = vmatprep.subr.bf16.mxu0 0
  %84 = vmatpush1.bf16.msra.mxu0 0
  %85 = vmatprep.subr.bf16.mxu0 0
  %86 = vmatpush1.bf16.msra.mxu0 0
  %87 = vmatprep.subr.bf16.mxu0 0
  %88 = vmatpush1.bf16.msra.mxu0 0
  %89 = vmatprep.subr.bf16.mxu0 0
  %90 = vmatpush1.bf16.msra.mxu0 0
  %91 = vmatprep.subr.bf16.mxu0 0
  %92 = vmatpush1.bf16.msra.mxu0 0
  %93 = vmatprep.subr.bf16.mxu0 0
  %94 = vmatpush1.bf16.msra.mxu0 0
  %95 = vmatprep.subr.bf16.mxu0 0
  %96 = vmatpush1.bf16.msra.mxu0 0
  %97 = vmatprep.subr.bf16.mxu0 0
  %98 = vmatpush1.bf16.msra.mxu0 0
  %99 = vmatprep.subr.bf16.mxu0 0
  %100 = vmatpush1.bf16.msra.mxu0 0
  %101 = vmatprep.mubr.bf16.mxu0 0
  %102 = vmatmul.mubr.bf16.gmra.mrb[0].mxu0 %v60
  %v103 = vpop.f32.mrb[0].mxu0
  %v104 = vadd.f32 0.0, %v103
  %v105 = vpop.f32.mrb[0].mxu0
  %v106 = vpop.f32.mrb[0].mxu0
  %v107 = vadd.f32 0.0, %v106
  %v108 = vpop.f32.mrb[0].mxu0
  %109 = vmatprep.mubr.bf16.mxu0 0
  %110 = vmatmul.mubr.bf16.gmra.mrb[0].mxu0 %v63
  %v111 = vpop.f32.mrb[0].mxu0
  %v112 = vadd.f32 0.0, %v111
  %v113 = vpop.f32.mrb[0].mxu0
  %v114 = vpop.f32.mrb[0].mxu0
  %v115 = vadd.f32 0.0, %v114
  %v116 = vpop.f32.mrb[0].mxu0
  %117 = vdwg.mxu0
  %v118 = vld [vmem:[%s4] sm:$0x1]
  %v120 = vlaneseq
  %v121 = vshrl.u32 %v120, 7
  %v122 = vsub.s32 0, %v121
  %v123 = vrot.slane %v118, %v122
  %v125 = vmul.f32 %v104, %v123
  %v126 = vmul.f32 %v107, %v123
  %v127 = vmul.f32 %v112, %v123
  %v128 = vmul.f32 %v115, %v123
  %v129 = vld [vmem:[%s5] sm:$0x1]
  %v131 = vlaneseq
  %v132 = vshrl.u32 %v131, 7
  %v133 = vsub.s32 0, %v132
  %v134 = vrot.slane %v129, %v133
  %v136 = vadd.f32 %v125, %v134
  %v137 = vadd.f32 %v126, %v134
  %v138 = vadd.f32 %v127, %v134
  %v139 = vadd.f32 %v128, %v134
  %v140 = vmax.f32 %v136, 0.0
  %v141 = vmax.f32 %v137, 0.0
  %v142 = vmax.f32 %v138, 0.0
  %v143 = vmax.f32 %v139, 0.0
  %144 = vst.msk [vmem:[%s6] sm:$0xff] %vm58, %v140
  %145 = vst.msk [vmem:[%s6 + $0x8] sm:$0xff] %vm58, %v141
  %146 = vst.msk [vmem:[%s6 + $0x10] sm:$0xff] %vm58, %v142
  %147 = vst.msk [vmem:[%s6 + $0x18] sm:$0xff] %vm58, %v143
  // Predicated region
  $region26: #{forward.38} parent=0 // pred_check
    _
  $region27: #{forward.38} parent=0 // pred_check_branch
    %149 = sbr.rel (0) target = $region29
  $region28: #{forward.38} parent=0 // pred_region
    _
  $region29: #{forward.38} parent=0 // pred_fallthru
    _
  // Predicated region
  $region30: #{forward.38} parent=0 // pred_check
    _
  $region31: #{forward.38} parent=0 // pred_check_branch
    %151 = sbr.rel (0) target = $region33
  $region32: #{forward.38} parent=0 // pred_region
    _
  $region33: #{forward.38} parent=0 // pred_fallthru
    _

// kernel: forward.39
$region0: #{forward.39}
  #allocation0 [shape = 'u32[]', space=smem, size = 0x4, offset = 0x4, fixed_abs, tag = 'smem constant byte address 0x4 - core index']
  #allocation1 [shape = 'u32[144,128]{1,0:T(1,128)}', space=vmem, size = 0x12000, scoped, tag = 'internal scratch']
  %s0 = inlined_call_operand.vmem [shape: f32[32,72], index: 0, kind: input, shape index: {}]
  %s1 = inlined_call_operand.vmem [shape: f32[72,4], index: 1, kind: input, shape index: {}]
  %s2 = inlined_call_operand.vmem [shape: f32[32,4], index: 2, kind: output, shape index: {}]
  %s3 = sld [smem:[#allocation0]]
  $region18: #{forward.39} parent=0
    _
  %s5 = ssub.s32 1, %s3
  %s6 = scalar_select 0, %s5, %s3
  // Predicated region
  $region2: #{forward.39} parent=0 // pred_check
    _
  $region3: #{forward.39} parent=0 // pred_check_branch
    %8 = sbr.rel (0) target = $region5
  $region4: #{forward.39} parent=0 // pred_region
    _
  $region5: #{forward.39} parent=0 // pred_fallthru
    _
  // Predicated region
  $region6: #{forward.39} parent=0 // pred_check
    _
  $region7: #{forward.39} parent=0 // pred_check_branch
    %10 = sbr.rel (0) target = $region9
  $region8: #{forward.39} parent=0 // pred_region
    _
  $region9: #{forward.39} parent=0 // pred_fallthru
    _
  %v12 = vld [vmem:[%s0] sm:$0xff]
  %v13 = vld [vmem:[%s0 + $0x8] sm:$0xff]
  %v14 = vld [vmem:[%s0 + $0x10] sm:$0xff]
  %v15 = vld [vmem:[%s0 + $0x18] sm:$0xff]
  %v16 = vpack.c.bf16 %v13, %v12
  %v17 = vpack.c.bf16 %v15, %v14
  %v18 = vld [vmem:[%s1] sm:$0xff]
  %v19 = vld [vmem:[%s1 + $0x8] sm:$0xff]
  %v20 = vld [vmem:[%s1 + $0x10] sm:$0xff]
  %v21 = vld [vmem:[%s1 + $0x18] sm:$0xff]
  %v22 = vld [vmem:[%s1 + $0x20] sm:$0xff]
  %v23 = vld [vmem:[%s1 + $0x28] sm:$0xff]
  %v24 = vld [vmem:[%s1 + $0x30] sm:$0xff]
  %v25 = vld [vmem:[%s1 + $0x38] sm:$0xff]
  %v26 = vld [vmem:[%s1 + $0x40] sm:$0xff]
  %v27 = vpack.c.bf16 %v19, %v18
  %v28 = vpack.c.bf16 %v21, %v20
  %v29 = vpack.c.bf16 %v23, %v22
  %v30 = vpack.c.bf16 %v25, %v24
  %v31 = vpack.c.bf16 %v26, %v26
  %vm32 = vcmask 588800
  %v34 = vsel %vm32, %v16, 0
  %v37 = vsel %vm32, %v17, 0
  %vm39 = vcmask 1043456
  %v41 = vsel %vm39, %v31, 0
  %43 = vmatprep.subr.bf16.mxu0 0
  %44 = vmatpush1.bf16.msra.mxu0 %v27
  %45 = vmatprep.subr.bf16.mxu0 0
  %46 = vmatpush1.bf16.msra.mxu0 %v28
  %47 = vmatprep.subr.bf16.mxu0 0
  %48 = vmatpush1.bf16.msra.mxu0 %v29
  %49 = vmatprep.subr.bf16.mxu0 0
  %50 = vmatpush1.bf16.msra.mxu0 %v30
  %51 = vmatprep.subr.bf16.mxu0 0
  %52 = vmatpush1.bf16.msra.mxu0 %v41
  %53 = vmatprep.subr.bf16.mxu0 0
  %54 = vmatpush1.bf16.msra.mxu0 0
  %55 = vmatprep.subr.bf16.mxu0 0
  %56 = vmatpush1.bf16.msra.mxu0 0
  %57 = vmatprep.subr.bf16.mxu0 0
  %58 = vmatpush1.bf16.msra.mxu0 0
  %59 = vmatprep.subr.bf16.mxu0 0
  %60 = vmatpush1.bf16.msra.mxu0 0
  %61 = vmatprep.subr.bf16.mxu0 0
  %62 = vmatpush1.bf16.msra.mxu0 0
  %63 = vmatprep.subr.bf16.mxu0 0
  %64 = vmatpush1.bf16.msra.mxu0 0
  %65 = vmatprep.subr.bf16.mxu0 0
  %66 = vmatpush1.bf16.msra.mxu0 0
  %67 = vmatprep.subr.bf16.mxu0 0
  %68 = vmatpush1.bf16.msra.mxu0 0
  %69 = vmatprep.subr.bf16.mxu0 0
  %70 = vmatpush1.bf16.msra.mxu0 0
  %71 = vmatprep.subr.bf16.mxu0 0
  %72 = vmatpush1.bf16.msra.mxu0 0
  %73 = vmatprep.subr.bf16.mxu0 0
  %74 = vmatpush1.bf16.msra.mxu0 0
  %75 = vmatprep.mubr.bf16.mxu0 0
  %76 = vmatmul.mubr.bf16.gmra.mrb[0].mxu0 %v34
  %v77 = vpop.f32.mrb[0].mxu0
  %v78 = vadd.f32 0.0, %v77
  %v79 = vpop.f32.mrb[0].mxu0
  %v80 = vpop.f32.mrb[0].mxu0
  %v81 = vadd.f32 0.0, %v80
  %v82 = vpop.f32.mrb[0].mxu0
  %83 = vmatprep.mubr.bf16.mxu0 0
  %84 = vmatmul.mubr.bf16.gmra.mrb[0].mxu0 %v37
  %v85 = vpop.f32.mrb[0].mxu0
  %v86 = vadd.f32 0.0, %v85
  %v87 = vpop.f32.mrb[0].mxu0
  %v88 = vpop.f32.mrb[0].mxu0
  %v89 = vadd.f32 0.0, %v88
  %v90 = vpop.f32.mrb[0].mxu0
  %91 = vdwg.mxu0
  %vm92 = vcmask 31744
  %93 = vst.msk [vmem:[%s2] sm:$0xff] %vm92, %v78
  %94 = vst.msk [vmem:[%s2 + $0x8] sm:$0xff] %vm92, %v81
  %95 = vst.msk [vmem:[%s2 + $0x10] sm:$0xff] %vm92, %v86
  %96 = vst.msk [vmem:[%s2 + $0x18] sm:$0xff] %vm92, %v89
  // Predicated region
  $region10: #{forward.39} parent=0 // pred_check
    _
  $region11: #{forward.39} parent=0 // pred_check_branch
    %98 = sbr.rel (0) target = $region13
  $region12: #{forward.39} parent=0 // pred_region
    _
  $region13: #{forward.39} parent=0 // pred_fallthru
    _
  // Predicated region
  $region14: #{forward.39} parent=0 // pred_check
    _
  $region15: #{forward.39} parent=0 // pred_check_branch
    %100 = sbr.rel (0) target = $region17
  $region16: #{forward.39} parent=0 // pred_region
    _
  $region17: #{forward.39} parent=0 // pred_fallthru
    _

// kernel: forward.42
$region0: #{forward.42}
  #allocation0 [shape = 'u32[]', space=smem, size = 0x4, offset = 0x4, fixed_abs, tag = 'smem constant byte address 0x4 - core index']
  #allocation1 [shape = 'u32[144,128]{1,0:T(1,128)}', space=vmem, size = 0x12000, scoped, tag = 'internal scratch']
  %s0 = inlined_call_operand.vmem [shape: f32[32,16], index: 0, kind: input, shape index: {}]
  %s1 = inlined_call_operand.vmem [shape: f32[1,16], index: 1, kind: input, shape index: {}]
  %s2 = inlined_call_operand.vmem [shape: f32[1,16], index: 2, kind: input, shape index: {}]
  %s3 = inlined_call_operand.vmem [shape: f32[16,8], index: 3, kind: input, shape index: {}]
  %s4 = inlined_call_operand.vmem [shape: f32[32,8], index: 4, kind: output, shape index: {}]
  %s5 = sld [smem:[#allocation0]]
  $region26: #{forward.42} parent=0
    _
  %s7 = ssub.s32 1, %s5
  %s8 = scalar_select 0, %s7, %s5
  // Predicated region
  $region2: #{forward.42} parent=0 // pred_check
    _
  $region3: #{forward.42} parent=0 // pred_check_branch
    %10 = sbr.rel (0) target = $region5
  $region4: #{forward.42} parent=0 // pred_region
    _
  $region5: #{forward.42} parent=0 // pred_fallthru
    _
  // Predicated region
  $region6: #{forward.42} parent=0 // pred_check
    _
  $region7: #{forward.42} parent=0 // pred_check_branch
    %12 = sbr.rel (0) target = $region9
  $region8: #{forward.42} parent=0 // pred_region
    _
  $region9: #{forward.42} parent=0 // pred_fallthru
    _
  // Predicated region
  $region10: #{forward.42} parent=0 // pred_check
    _
  $region11: #{forward.42} parent=0 // pred_check_branch
    %14 = sbr.rel (0) target = $region13
  $region12: #{forward.42} parent=0 // pred_region
    _
  $region13: #{forward.42} parent=0 // pred_fallthru
    _
  // Predicated region
  $region14: #{forward.42} parent=0 // pred_check
    _
  $region15: #{forward.42} parent=0 // pred_check_branch
    %16 = sbr.rel (0) target = $region17
  $region16: #{forward.42} parent=0 // pred_region
    _
  $region17: #{forward.42} parent=0 // pred_fallthru
    _
  %v18 = vld [vmem:[%s0] sm:$0xff]
  %v19 = vld [vmem:[%s0 + $0x8] sm:$0xff]
  %v20 = vld [vmem:[%s0 + $0x10] sm:$0xff]
  %v21 = vld [vmem:[%s0 + $0x18] sm:$0xff]
  %v22 = vld [vmem:[%s1] sm:$0x1]
  %v24 = vlaneseq
  %v25 = vshrl.u32 %v24, 7
  %v26 = vsub.s32 0, %v25
  %v27 = vrot.slane %v22, %v26
  %v29 = vmul.f32 %v18, %v27
  %v30 = vmul.f32 %v19, %v27
  %v31 = vmul.f32 %v20, %v27
  %v32 = vmul.f32 %v21, %v27
  %v33 = vld [vmem:[%s2] sm:$0x1]
  %v35 = vlaneseq
  %v36 = vshrl.u32 %v35, 7
  %v37 = vsub.s32 0, %v36
  %v38 = vrot.slane %v33, %v37
  %v40 = vadd.f32 %v29, %v38
  %v41 = vadd.f32 %v30, %v38
  %v42 = vadd.f32 %v31, %v38
  %v43 = vadd.f32 %v32, %v38
  %v44 = vmax.f32 %v40, 0.0
  %v45 = vmax.f32 %v41, 0.0
  %v46 = vmax.f32 %v42, 0.0
  %v47 = vmax.f32 %v43, 0.0
  %v48 = vpack.c.bf16 %v45, %v44
  %v49 = vpack.c.bf16 %v47, %v46
  %v50 = vld [vmem:[%s3] sm:$0xff]
  %v51 = vld [vmem:[%s3 + $0x8] sm:$0xff]
  %v52 = vpack.c.bf16 %v51, %v50
  %vm53 = vcmask 130048
  %v55 = vsel %vm53, %v48, 0
  %v58 = vsel %vm53, %v49, 0
  %60 = vmatprep.subr.bf16.mxu0 0
  %61 = vmatpush1.bf16.msra.mxu0 %v52
  %62 = vmatprep.subr.bf16.mxu0 0
  %63 = vmatpush1.bf16.msra.mxu0 0
  %64 = vmatprep.subr.bf16.mxu0 0
  %65 = vmatpush1.bf16.msra.mxu0 0
  %66 = vmatprep.subr.bf16.mxu0 0
  %67 = vmatpush1.bf16.msra.mxu0 0
  %68 = vmatprep.subr.bf16.mxu0 0
  %69 = vmatpush1.bf16.msra.mxu0 0
  %70 = vmatprep.subr.bf16.mxu0 0
  %71 = vmatpush1.bf16.msra.mxu0 0
  %72 = vmatprep.subr.bf16.mxu0 0
  %73 = vmatpush1.bf16.msra.mxu0 0
  %74 = vmatprep.subr.bf16.mxu0 0
  %75 = vmatpush1.bf16.msra.mxu0 0
  %76 = vmatprep.subr.bf16.mxu0 0
  %77 = vmatpush1.bf16.msra.mxu0 0
  %78 = vmatprep.subr.bf16.mxu0 0
  %79 = vmatpush1.bf16.msra.mxu0 0
  %80 = vmatprep.subr.bf16.mxu0 0
  %81 = vmatpush1.bf16.msra.mxu0 0
  %82 = vmatprep.subr.bf16.mxu0 0
  %83 = vmatpush1.bf16.msra.mxu0 0
  %84 = vmatprep.subr.bf16.mxu0 0
  %85 = vmatpush1.bf16.msra.mxu0 0
  %86 = vmatprep.subr.bf16.mxu0 0
  %87 = vmatpush1.bf16.msra.mxu0 0
  %88 = vmatprep.subr.bf16.mxu0 0
  %89 = vmatpush1.bf16.msra.mxu0 0
  %90 = vmatprep.subr.bf16.mxu0 0
  %91 = vmatpush1.bf16.msra.mxu0 0
  %92 = vmatprep.mubr.bf16.mxu0 0
  %93 = vmatmul.mubr.bf16.gmra.mrb[0].mxu0 %v55
  %v94 = vpop.f32.mrb[0].mxu0
  %v95 = vadd.f32 0.0, %v94
  %v96 = vpop.f32.mrb[0].mxu0
  %v97 = vpop.f32.mrb[0].mxu0
  %v98 = vadd.f32 0.0, %v97
  %v99 = vpop.f32.mrb[0].mxu0
  %100 = vmatprep.mubr.bf16.mxu0 0
  %101 = vmatmul.mubr.bf16.gmra.mrb[0].mxu0 %v58
  %v102 = vpop.f32.mrb[0].mxu0
  %v103 = vadd.f32 0.0, %v102
  %v104 = vpop.f32.mrb[0].mxu0
  %v105 = vpop.f32.mrb[0].mxu0
  %v106 = vadd.f32 0.0, %v105
  %v107 = vpop.f32.mrb[0].mxu0
  %108 = vdwg.mxu0
  %vm109 = vcmask 64512
  %110 = vst.msk [vmem:[%s4] sm:$0xff] %vm109, %v95
  %111 = vst.msk [vmem:[%s4 + $0x8] sm:$0xff] %vm109, %v98
  %112 = vst.msk [vmem:[%s4 + $0x10] sm:$0xff] %vm109, %v103
  %113 = vst.msk [vmem:[%s4 + $0x18] sm:$0xff] %vm109, %v106
  // Predicated region
  $region18: #{forward.42} parent=0 // pred_check
    _
  $region19: #{forward.42} parent=0 // pred_check_branch
    %115 = sbr.rel (0) target = $region21
  $region20: #{forward.42} parent=0 // pred_region
    _
  $region21: #{forward.42} parent=0 // pred_fallthru
    _
  // Predicated region
  $region22: #{forward.42} parent=0 // pred_check
    _
  $region23: #{forward.42} parent=0 // pred_check_branch
    %117 = sbr.rel (0) target = $region25
  $region24: #{forward.42} parent=0 // pred_region
    _
  $region25: #{forward.42} parent=0 // pred_fallthru
    _

// kernel: forward.40
$region0: #{forward.40}
  #allocation0 [shape = 'u32[]', space=smem, size = 0x4, offset = 0x4, fixed_abs, tag = 'smem constant byte address 0x4 - core index']
  #allocation1 [shape = 'u32[144,128]{1,0:T(1,128)}', space=vmem, size = 0x12000, scoped, tag = 'internal scratch']
  %s0 = inlined_call_operand.vmem [shape: f32[32,12], index: 0, kind: input, shape index: {}]
  %s1 = inlined_call_operand.vmem [shape: f32[1,12], index: 1, kind: input, shape index: {}]
  %s2 = inlined_call_operand.vmem [shape: f32[1,12], index: 2, kind: input, shape index: {}]
  %s3 = inlined_call_operand.vmem [shape: f32[12,8], index: 3, kind: input, shape index: {}]
  %s4 = inlined_call_operand.vmem [shape: f32[1,8], index: 4, kind: input, shape index: {}]
  %s5 = inlined_call_operand.vmem [shape: f32[1,8], index: 5, kind: input, shape index: {}]
  %s6 = inlined_call_operand.vmem [shape: f32[32,8], index: 6, kind: output, shape index: {}]
  %s7 = sld [smem:[#allocation0]]
  $region34: #{forward.40} parent=0
    _
  %s9 = ssub.s32 1, %s7
  %s10 = scalar_select 0, %s9, %s7
  // Predicated region
  $region2: #{forward.40} parent=0 // pred_check
    _
  $region3: #{forward.40} parent=0 // pred_check_branch
    %12 = sbr.rel (0) target = $region5
  $region4: #{forward.40} parent=0 // pred_region
    _
  $region5: #{forward.40} parent=0 // pred_fallthru
    _
  // Predicated region
  $region6: #{forward.40} parent=0 // pred_check
    _
  $region7: #{forward.40} parent=0 // pred_check_branch
    %14 = sbr.rel (0) target = $region9
  $region8: #{forward.40} parent=0 // pred_region
    _
  $region9: #{forward.40} parent=0 // pred_fallthru
    _
  // Predicated region
  $region10: #{forward.40} parent=0 // pred_check
    _
  $region11: #{forward.40} parent=0 // pred_check_branch
    %16 = sbr.rel (0) target = $region13
  $region12: #{forward.40} parent=0 // pred_region
    _
  $region13: #{forward.40} parent=0 // pred_fallthru
    _
  // Predicated region
  $region14: #{forward.40} parent=0 // pred_check
    _
  $region15: #{forward.40} parent=0 // pred_check_branch
    %18 = sbr.rel (0) target = $region17
  $region16: #{forward.40} parent=0 // pred_region
    _
  $region17: #{forward.40} parent=0 // pred_fallthru
    _
  // Predicated region
  $region18: #{forward.40} parent=0 // pred_check
    _
  $region19: #{forward.40} parent=0 // pred_check_branch
    %20 = sbr.rel (0) target = $region21
  $region20: #{forward.40} parent=0 // pred_region
    _
  $region21: #{forward.40} parent=0 // pred_fallthru
    _
  // Predicated region
  $region22: #{forward.40} parent=0 // pred_check
    _
  $region23: #{forward.40} parent=0 // pred_check_branch
    %22 = sbr.rel (0) target = $region25
  $region24: #{forward.40} parent=0 // pred_region
    _
  $region25: #{forward.40} parent=0 // pred_fallthru
    _
  %v24 = vld [vmem:[%s0] sm:$0xff]
  %v25 = vld [vmem:[%s0 + $0x8] sm:$0xff]
  %v26 = vld [vmem:[%s0 + $0x10] sm:$0xff]
  %v27 = vld [vmem:[%s0 + $0x18] sm:$0xff]
  %v28 = vld [vmem:[%s1] sm:$0x1]
  %v30 = vlaneseq
  %v31 = vshrl.u32 %v30, 7
  %v32 = vsub.s32 0, %v31
  %v33 = vrot.slane %v28, %v32
  %v35 = vmul.f32 %v24, %v33
  %v36 = vmul.f32 %v25, %v33
  %v37 = vmul.f32 %v26, %v33
  %v38 = vmul.f32 %v27, %v33
  %v39 = vld [vmem:[%s2] sm:$0x1]
  %v41 = vlaneseq
  %v42 = vshrl.u32 %v41, 7
  %v43 = vsub.s32 0, %v42
  %v44 = vrot.slane %v39, %v43
  %v46 = vadd.f32 %v35, %v44
  %v47 = vadd.f32 %v36, %v44
  %v48 = vadd.f32 %v37, %v44
  %v49 = vadd.f32 %v38, %v44
  %v50 = vmax.f32 %v46, 0.0
  %v51 = vmax.f32 %v47, 0.0
  %v52 = vmax.f32 %v48, 0.0
  %v53 = vmax.f32 %v49, 0.0
  %v54 = vpack.c.bf16 %v51, %v50
  %v55 = vpack.c.bf16 %v53, %v52
  %v56 = vld [vmem:[%s3] sm:$0xff]
  %v57 = vld [vmem:[%s3 + $0x8] sm:$0xf]
  %v58 = vpack.c.bf16 %v57, %v56
  %vm59 = vcmask 97280
  %v61 = vsel %vm59, %v54, 0
  %v64 = vsel %vm59, %v55, 0
  %vm66 = vcmask 1045504
  %v68 = vsel %vm66, %v58, 0
  %70 = vmatprep.subr.bf16.mxu0 0
  %71 = vmatpush1.bf16.msra.mxu0 %v68
  %72 = vmatprep.subr.bf16.mxu0 0
  %73 = vmatpush1.bf16.msra.mxu0 0
  %74 = vmatprep.subr.bf16.mxu0 0
  %75 = vmatpush1.bf16.msra.mxu0 0
  %76 = vmatprep.subr.bf16.mxu0 0
  %77 = vmatpush1.bf16.msra.mxu0 0
  %78 = vmatprep.subr.bf16.mxu0 0
  %79 = vmatpush1.bf16.msra.mxu0 0
  %80 = vmatprep.subr.bf16.mxu0 0
  %81 = vmatpush1.bf16.msra.mxu0 0
  %82 = vmatprep.subr.bf16.mxu0 0
  %83 = vmatpush1.bf16.msra.mxu0 0
  %84 = vmatprep.subr.bf16.mxu0 0
  %85 = vmatpush1.bf16.msra.mxu0 0
  %86 = vmatprep.subr.bf16.mxu0 0
  %87 = vmatpush1.bf16.msra.mxu0 0
  %88 = vmatprep.subr.bf16.mxu0 0
  %89 = vmatpush1.bf16.msra.mxu0 0
  %90 = vmatprep.subr.bf16.mxu0 0
  %91 = vmatpush1.bf16.msra.mxu0 0
  %92 = vmatprep.subr.bf16.mxu0 0
  %93 = vmatpush1.bf16.msra.mxu0 0
  %94 = vmatprep.subr.bf16.mxu0 0
  %95 = vmatpush1.bf16.msra.mxu0 0
  %96 = vmatprep.subr.bf16.mxu0 0
  %97 = vmatpush1.bf16.msra.mxu0 0
  %98 = vmatprep.subr.bf16.mxu0 0
  %99 = vmatpush1.bf16.msra.mxu0 0
  %100 = vmatprep.subr.bf16.mxu0 0
  %101 = vmatpush1.bf16.msra.mxu0 0
  %102 = vmatprep.mubr.bf16.mxu0 0
  %103 = vmatmul.mubr.bf16.gmra.mrb[0].mxu0 %v61
  %v104 = vpop.f32.mrb[0].mxu0
  %v105 = vadd.f32 0.0, %v104
  %v106 = vpop.f32.mrb[0].mxu0
  %v107 = vpop.f32.mrb[0].mxu0
  %v108 = vadd.f32 0.0, %v107
  %v109 = vpop.f32.mrb[0].mxu0
  %110 = vmatprep.mubr.bf16.mxu0 0
  %111 = vmatmul.mubr.bf16.gmra.mrb[0].mxu0 %v64
  %v112 = vpop.f32.mrb[0].mxu0
  %v113 = vadd.f32 0.0, %v112
  %v114 = vpop.f32.mrb[0].mxu0
  %v115 = vpop.f32.mrb[0].mxu0
  %v116 = vadd.f32 0.0, %v115
  %v117 = vpop.f32.mrb[0].mxu0
  %118 = vdwg.mxu0
  %v119 = vld [vmem:[%s4] sm:$0x1]
  %v121 = vlaneseq
  %v122 = vshrl.u32 %v121, 7
  %v123 = vsub.s32 0, %v122
  %v124 = vrot.slane %v119, %v123
  %v126 = vmul.f32 %v105, %v124
  %v127 = vmul.f32 %v108, %v124
  %v128 = vmul.f32 %v113, %v124
  %v129 = vmul.f32 %v116, %v124
  %v130 = vld [vmem:[%s5] sm:$0x1]
  %v132 = vlaneseq
  %v133 = vshrl.u32 %v132, 7
  %v134 = vsub.s32 0, %v133
  %v135 = vrot.slane %v130, %v134
  %v137 = vadd.f32 %v126, %v135
  %v138 = vadd.f32 %v127, %v135
  %v139 = vadd.f32 %v128, %v135
  %v140 = vadd.f32 %v129, %v135
  %v141 = vmax.f32 %v137, 0.0
  %v142 = vmax.f32 %v138, 0.0
  %v143 = vmax.f32 %v139, 0.0
  %v144 = vmax.f32 %v140, 0.0
  %vm145 = vcmask 64512
  %146 = vst.msk [vmem:[%s6] sm:$0xff] %vm145, %v141
  %147 = vst.msk [vmem:[%s6 + $0x8] sm:$0xff] %vm145, %v142
  %148 = vst.msk [vmem:[%s6 + $0x10] sm:$0xff] %vm145, %v143
  %149 = vst.msk [vmem:[%s6 + $0x18] sm:$0xff] %vm145, %v144
  // Predicated region
  $region26: #{forward.40} parent=0 // pred_check
    _
  $region27: #{forward.40} parent=0 // pred_check_branch
    %151 = sbr.rel (0) target = $region29
  $region28: #{forward.40} parent=0 // pred_region
    _
  $region29: #{forward.40} parent=0 // pred_fallthru
    _
  // Predicated region
  $region30: #{forward.40} parent=0 // pred_check
    _
  $region31: #{forward.40} parent=0 // pred_check_branch
    %153 = sbr.rel (0) target = $region33
  $region32: #{forward.40} parent=0 // pred_region
    _
  $region33: #{forward.40} parent=0 // pred_fallthru
    _

// kernel: forward.49
$region0: #{forward.49}
  #allocation0 [shape = 'u32[]', space=smem, size = 0x4, offset = 0x4, fixed_abs, tag = 'smem constant byte address 0x4 - core index']
  #allocation1 [shape = 'u32[144,128]{1,0:T(1,128)}', space=vmem, size = 0x12000, scoped, tag = 'internal scratch']
  %s0 = inlined_call_operand.vmem [shape: f32[32,8], index: 0, kind: input, shape index: {}]
  %s1 = inlined_call_operand.vmem [shape: f32[8,4], index: 1, kind: input, shape index: {}]
  %s2 = inlined_call_operand.vmem [shape: f32[32,4], index: 2, kind: output, shape index: {}]
  %s3 = sld [smem:[#allocation0]]
  $region18: #{forward.49} parent=0
    _
  %s5 = ssub.s32 1, %s3
  %s6 = scalar_select 0, %s5, %s3
  // Predicated region
  $region2: #{forward.49} parent=0 // pred_check
    _
  $region3: #{forward.49} parent=0 // pred_check_branch
    %8 = sbr.rel (0) target = $region5
  $region4: #{forward.49} parent=0 // pred_region
    _
  $region5: #{forward.49} parent=0 // pred_fallthru
    _
  // Predicated region
  $region6: #{forward.49} parent=0 // pred_check
    _
  $region7: #{forward.49} parent=0 // pred_check_branch
    %10 = sbr.rel (0) target = $region9
  $region8: #{forward.49} parent=0 // pred_region
    _
  $region9: #{forward.49} parent=0 // pred_fallthru
    _
  %v12 = vld [vmem:[%s0] sm:$0xff]
  %v13 = vld [vmem:[%s0 + $0x8] sm:$0xff]
  %v14 = vld [vmem:[%s0 + $0x10] sm:$0xff]
  %v15 = vld [vmem:[%s0 + $0x18] sm:$0xff]
  %v16 = vpack.c.bf16 %v13, %v12
  %v17 = vpack.c.bf16 %v15, %v14
  %v18 = vld [vmem:[%s1] sm:$0xff]
  %v19 = vpack.c.bf16 %v18, %v18
  %vm20 = vcmask 64512
  %v22 = vsel %vm20, %v16, 0
  %v25 = vsel %vm20, %v17, 0
  %vm27 = vcmask 1043456
  %v29 = vsel %vm27, %v19, 0
  %31 = vmatprep.subr.bf16.mxu0 0
  %32 = vmatpush1.bf16.msra.mxu0 %v29
  %33 = vmatprep.subr.bf16.mxu0 0
  %34 = vmatpush1.bf16.msra.mxu0 0
  %35 = vmatprep.subr.bf16.mxu0 0
  %36 = vmatpush1.bf16.msra.mxu0 0
  %37 = vmatprep.subr.bf16.mxu0 0
  %38 = vmatpush1.bf16.msra.mxu0 0
  %39 = vmatprep.subr.bf16.mxu0 0
  %40 = vmatpush1.bf16.msra.mxu0 0
  %41 = vmatprep.subr.bf16.mxu0 0
  %42 = vmatpush1.bf16.msra.mxu0 0
  %43 = vmatprep.subr.bf16.mxu0 0
  %44 = vmatpush1.bf16.msra.mxu0 0
  %45 = vmatprep.subr.bf16.mxu0 0
  %46 = vmatpush1.bf16.msra.mxu0 0
  %47 = vmatprep.subr.bf16.mxu0 0
  %48 = vmatpush1.bf16.msra.mxu0 0
  %49 = vmatprep.subr.bf16.mxu0 0
  %50 = vmatpush1.bf16.msra.mxu0 0
  %51 = vmatprep.subr.bf16.mxu0 0
  %52 = vmatpush1.bf16.msra.mxu0 0
  %53 = vmatprep.subr.bf16.mxu0 0
  %54 = vmatpush1.bf16.msra.mxu0 0
  %55 = vmatprep.subr.bf16.mxu0 0
  %56 = vmatpush1.bf16.msra.mxu0 0
  %57 = vmatprep.subr.bf16.mxu0 0
  %58 = vmatpush1.bf16.msra.mxu0 0
  %59 = vmatprep.subr.bf16.mxu0 0
  %60 = vmatpush1.bf16.msra.mxu0 0
  %61 = vmatprep.subr.bf16.mxu0 0
  %62 = vmatpush1.bf16.msra.mxu0 0
  %63 = vmatprep.mubr.bf16.mxu0 0
  %64 = vmatmul.mubr.bf16.gmra.mrb[0].mxu0 %v22
  %v65 = vpop.f32.mrb[0].mxu0
  %v66 = vadd.f32 0.0, %v65
  %v67 = vpop.f32.mrb[0].mxu0
  %v68 = vpop.f32.mrb[0].mxu0
  %v69 = vadd.f32 0.0, %v68
  %v70 = vpop.f32.mrb[0].mxu0
  %71 = vmatprep.mubr.bf16.mxu0 0
  %72 = vmatmul.mubr.bf16.gmra.mrb[0].mxu0 %v25
  %v73 = vpop.f32.mrb[0].mxu0
  %v74 = vadd.f32 0.0, %v73
  %v75 = vpop.f32.mrb[0].mxu0
  %v76 = vpop.f32.mrb[0].mxu0
  %v77 = vadd.f32 0.0, %v76
  %v78 = vpop.f32.mrb[0].mxu0
  %79 = vdwg.mxu0
  %vm80 = vcmask 31744
  %81 = vst.msk [vmem:[%s2] sm:$0xff] %vm80, %v66
  %82 = vst.msk [vmem:[%s2 + $0x8] sm:$0xff] %vm80, %v69
  %83 = vst.msk [vmem:[%s2 + $0x10] sm:$0xff] %vm80, %v74
  %84 = vst.msk [vmem:[%s2 + $0x18] sm:$0xff] %vm80, %v77
  // Predicated region
  $region10: #{forward.49} parent=0 // pred_check
    _
  $region11: #{forward.49} parent=0 // pred_check_branch
    %86 = sbr.rel (0) target = $region13
  $region12: #{forward.49} parent=0 // pred_region
    _
  $region13: #{forward.49} parent=0 // pred_fallthru
    _
  // Predicated region
  $region14: #{forward.49} parent=0 // pred_check
    _
  $region15: #{forward.49} parent=0 // pred_check_branch
    %88 = sbr.rel (0) target = $region17
  $region16: #{forward.49} parent=0 // pred_region
    _
  $region17: #{forward.49} parent=0 // pred_fallthru
    _

// kernel: forward.52
$region0: #{forward.52}
  #allocation0 [shape = 'u32[]', space=smem, size = 0x4, offset = 0x4, fixed_abs, tag = 'smem constant byte address 0x4 - core index']
  #allocation1 [shape = 'u32[144,128]{1,0:T(1,128)}', space=vmem, size = 0x12000, scoped, tag = 'internal scratch']
  %s0 = inlined_call_operand.vmem [shape: f32[32,16], index: 0, kind: input, shape index: {}]
  %s1 = inlined_call_operand.vmem [shape: f32[1,16], index: 1, kind: input, shape index: {}]
  %s2 = inlined_call_operand.vmem [shape: f32[1,16], index: 2, kind: input, shape index: {}]
  %s3 = inlined_call_operand.vmem [shape: f32[16,8], index: 3, kind: input, shape index: {}]
  %s4 = inlined_call_operand.vmem [shape: f32[1,8], index: 4, kind: input, shape index: {}]
  %s5 = inlined_call_operand.vmem [shape: f32[1,8], index: 5, kind: input, shape index: {}]
  %s6 = inlined_call_operand.vmem [shape: f32[32,8], index: 6, kind: output, shape index: {}]
  %s7 = sld [smem:[#allocation0]]
  $region34: #{forward.52} parent=0
    _
  %s9 = ssub.s32 1, %s7
  %s10 = scalar_select 0, %s9, %s7
  // Predicated region
  $region2: #{forward.52} parent=0 // pred_check
    _
  $region3: #{forward.52} parent=0 // pred_check_branch
    %12 = sbr.rel (0) target = $region5
  $region4: #{forward.52} parent=0 // pred_region
    _
  $region5: #{forward.52} parent=0 // pred_fallthru
    _
  // Predicated region
  $region6: #{forward.52} parent=0 // pred_check
    _
  $region7: #{forward.52} parent=0 // pred_check_branch
    %14 = sbr.rel (0) target = $region9
  $region8: #{forward.52} parent=0 // pred_region
    _
  $region9: #{forward.52} parent=0 // pred_fallthru
    _
  // Predicated region
  $region10: #{forward.52} parent=0 // pred_check
    _
  $region11: #{forward.52} parent=0 // pred_check_branch
    %16 = sbr.rel (0) target = $region13
  $region12: #{forward.52} parent=0 // pred_region
    _
  $region13: #{forward.52} parent=0 // pred_fallthru
    _
  // Predicated region
  $region14: #{forward.52} parent=0 // pred_check
    _
  $region15: #{forward.52} parent=0 // pred_check_branch
    %18 = sbr.rel (0) target = $region17
  $region16: #{forward.52} parent=0 // pred_region
    _
  $region17: #{forward.52} parent=0 // pred_fallthru
    _
  // Predicated region
  $region18: #{forward.52} parent=0 // pred_check
    _
  $region19: #{forward.52} parent=0 // pred_check_branch
    %20 = sbr.rel (0) target = $region21
  $region20: #{forward.52} parent=0 // pred_region
    _
  $region21: #{forward.52} parent=0 // pred_fallthru
    _
  // Predicated region
  $region22: #{forward.52} parent=0 // pred_check
    _
  $region23: #{forward.52} parent=0 // pred_check_branch
    %22 = sbr.rel (0) target = $region25
  $region24: #{forward.52} parent=0 // pred_region
    _
  $region25: #{forward.52} parent=0 // pred_fallthru
    _
  %v24 = vld [vmem:[%s0] sm:$0xff]
  %v25 = vld [vmem:[%s0 + $0x8] sm:$0xff]
  %v26 = vld [vmem:[%s0 + $0x10] sm:$0xff]
  %v27 = vld [vmem:[%s0 + $0x18] sm:$0xff]
  %v28 = vld [vmem:[%s1] sm:$0x1]
  %v30 = vlaneseq
  %v31 = vshrl.u32 %v30, 7
  %v32 = vsub.s32 0, %v31
  %v33 = vrot.slane %v28, %v32
  %v35 = vmul.f32 %v24, %v33
  %v36 = vmul.f32 %v25, %v33
  %v37 = vmul.f32 %v26, %v33
  %v38 = vmul.f32 %v27, %v33
  %v39 = vld [vmem:[%s2] sm:$0x1]
  %v41 = vlaneseq
  %v42 = vshrl.u32 %v41, 7
  %v43 = vsub.s32 0, %v42
  %v44 = vrot.slane %v39, %v43
  %v46 = vadd.f32 %v35, %v44
  %v47 = vadd.f32 %v36, %v44
  %v48 = vadd.f32 %v37, %v44
  %v49 = vadd.f32 %v38, %v44
  %v50 = vmax.f32 %v46, 0.0
  %v51 = vmax.f32 %v47, 0.0
  %v52 = vmax.f32 %v48, 0.0
  %v53 = vmax.f32 %v49, 0.0
  %v54 = vpack.c.bf16 %v51, %v50
  %v55 = vpack.c.bf16 %v53, %v52
  %v56 = vld [vmem:[%s3] sm:$0xff]
  %v57 = vld [vmem:[%s3 + $0x8] sm:$0xff]
  %v58 = vpack.c.bf16 %v57, %v56
  %vm59 = vcmask 130048
  %v61 = vsel %vm59, %v54, 0
  %v64 = vsel %vm59, %v55, 0
  %66 = vmatprep.subr.bf16.mxu0 0
  %67 = vmatpush1.bf16.msra.mxu0 %v58
  %68 = vmatprep.subr.bf16.mxu0 0
  %69 = vmatpush1.bf16.msra.mxu0 0
  %70 = vmatprep.subr.bf16.mxu0 0
  %71 = vmatpush1.bf16.msra.mxu0 0
  %72 = vmatprep.subr.bf16.mxu0 0
  %73 = vmatpush1.bf16.msra.mxu0 0
  %74 = vmatprep.subr.bf16.mxu0 0
  %75 = vmatpush1.bf16.msra.mxu0 0
  %76 = vmatprep.subr.bf16.mxu0 0
  %77 = vmatpush1.bf16.msra.mxu0 0
  %78 = vmatprep.subr.bf16.mxu0 0
  %79 = vmatpush1.bf16.msra.mxu0 0
  %80 = vmatprep.subr.bf16.mxu0 0
  %81 = vmatpush1.bf16.msra.mxu0 0
  %82 = vmatprep.subr.bf16.mxu0 0
  %83 = vmatpush1.bf16.msra.mxu0 0
  %84 = vmatprep.subr.bf16.mxu0 0
  %85 = vmatpush1.bf16.msra.mxu0 0
  %86 = vmatprep.subr.bf16.mxu0 0
  %87 = vmatpush1.bf16.msra.mxu0 0
  %88 = vmatprep.subr.bf16.mxu0 0
  %89 = vmatpush1.bf16.msra.mxu0 0
  %90 = vmatprep.subr.bf16.mxu0 0
  %91 = vmatpush1.bf16.msra.mxu0 0
  %92 = vmatprep.subr.bf16.mxu0 0
  %93 = vmatpush1.bf16.msra.mxu0 0
  %94 = vmatprep.subr.bf16.mxu0 0
  %95 = vmatpush1.bf16.msra.mxu0 0
  %96 = vmatprep.subr.bf16.mxu0 0
  %97 = vmatpush1.bf16.msra.mxu0 0
  %98 = vmatprep.mubr.bf16.mxu0 0
  %99 = vmatmul.mubr.bf16.gmra.mrb[0].mxu0 %v61
  %v100 = vpop.f32.mrb[0].mxu0
  %v101 = vadd.f32 0.0, %v100
  %v102 = vpop.f32.mrb[0].mxu0
  %v103 = vpop.f32.mrb[0].mxu0
  %v104 = vadd.f32 0.0, %v103
  %v105 = vpop.f32.mrb[0].mxu0
  %106 = vmatprep.mubr.bf16.mxu0 0
  %107 = vmatmul.mubr.bf16.gmra.mrb[0].mxu0 %v64
  %v108 = vpop.f32.mrb[0].mxu0
  %v109 = vadd.f32 0.0, %v108
  %v110 = vpop.f32.mrb[0].mxu0
  %v111 = vpop.f32.mrb[0].mxu0
  %v112 = vadd.f32 0.0, %v111
  %v113 = vpop.f32.mrb[0].mxu0
  %114 = vdwg.mxu0
  %v115 = vld [vmem:[%s4] sm:$0x1]
  %v117 = vlaneseq
  %v118 = vshrl.u32 %v117, 7
  %v119 = vsub.s32 0, %v118
  %v120 = vrot.slane %v115, %v119
  %v122 = vmul.f32 %v101, %v120
  %v123 = vmul.f32 %v104, %v120
  %v124 = vmul.f32 %v109, %v120
  %v125 = vmul.f32 %v112, %v120
  %v126 = vld [vmem:[%s5] sm:$0x1]
  %v128 = vlaneseq
  %v129 = vshrl.u32 %v128, 7
  %v130 = vsub.s32 0, %v129
  %v131 = vrot.slane %v126, %v130
  %v133 = vadd.f32 %v122, %v131
  %v134 = vadd.f32 %v123, %v131
  %v135 = vadd.f32 %v124, %v131
  %v136 = vadd.f32 %v125, %v131
  %vm137 = vcmask 64512
  %138 = vst.msk [vmem:[%s6] sm:$0xff] %vm137, %v133
  %139 = vst.msk [vmem:[%s6 + $0x8] sm:$0xff] %vm137, %v134
  %140 = vst.msk [vmem:[%s6 + $0x10] sm:$0xff] %vm137, %v135
  %141 = vst.msk [vmem:[%s6 + $0x18] sm:$0xff] %vm137, %v136
  // Predicated region
  $region26: #{forward.52} parent=0 // pred_check
    _
  $region27: #{forward.52} parent=0 // pred_check_branch
    %143 = sbr.rel (0) target = $region29
  $region28: #{forward.52} parent=0 // pred_region
    _
  $region29: #{forward.52} parent=0 // pred_fallthru
    _
  // Predicated region
  $region30: #{forward.52} parent=0 // pred_check
    _
  $region31: #{forward.52} parent=0 // pred_check_branch
    %145 = sbr.rel (0) target = $region33
  $region32: #{forward.52} parent=0 // pred_region
    _
  $region33: #{forward.52} parent=0 // pred_fallthru
    _

// kernel: forward.53
$region0: #{forward.53}
  #allocation0 [shape = 'u32[]', space=smem, size = 0x4, offset = 0x4, fixed_abs, tag = 'smem constant byte address 0x4 - core index']
  #allocation1 [shape = 'u32[144,128]{1,0:T(1,128)}', space=vmem, size = 0x12000, scoped, tag = 'internal scratch']
  %s0 = inlined_call_operand.vmem [shape: f32[32,8], index: 0, kind: input, shape index: {}]
  %s1 = inlined_call_operand.vmem [shape: f32[8,16], index: 1, kind: input, shape index: {}]
  %s2 = inlined_call_operand.vmem [shape: f32[1,16], index: 2, kind: input, shape index: {}]
  %s3 = inlined_call_operand.vmem [shape: f32[1,16], index: 3, kind: input, shape index: {}]
  %s4 = inlined_call_operand.vmem [shape: f32[1,16], index: 4, kind: input, shape index: {}]
  %s5 = inlined_call_operand.vmem [shape: f32[32,16], index: 5, kind: output, shape index: {}]
  %s6 = sld [smem:[#allocation0]]
  $region30: #{forward.53} parent=0
    _
  %s8 = ssub.s32 1, %s6
  %s9 = scalar_select 0, %s8, %s6
  // Predicated region
  $region2: #{forward.53} parent=0 // pred_check
    _
  $region3: #{forward.53} parent=0 // pred_check_branch
    %11 = sbr.rel (0) target = $region5
  $region4: #{forward.53} parent=0 // pred_region
    _
  $region5: #{forward.53} parent=0 // pred_fallthru
    _
  // Predicated region
  $region6: #{forward.53} parent=0 // pred_check
    _
  $region7: #{forward.53} parent=0 // pred_check_branch
    %13 = sbr.rel (0) target = $region9
  $region8: #{forward.53} parent=0 // pred_region
    _
  $region9: #{forward.53} parent=0 // pred_fallthru
    _
  // Predicated region
  $region10: #{forward.53} parent=0 // pred_check
    _
  $region11: #{forward.53} parent=0 // pred_check_branch
    %15 = sbr.rel (0) target = $region13
  $region12: #{forward.53} parent=0 // pred_region
    _
  $region13: #{forward.53} parent=0 // pred_fallthru
    _
  // Predicated region
  $region14: #{forward.53} parent=0 // pred_check
    _
  $region15: #{forward.53} parent=0 // pred_check_branch
    %17 = sbr.rel (0) target = $region17
  $region16: #{forward.53} parent=0 // pred_region
    _
  $region17: #{forward.53} parent=0 // pred_fallthru
    _
  // Predicated region
  $region18: #{forward.53} parent=0 // pred_check
    _
  $region19: #{forward.53} parent=0 // pred_check_branch
    %19 = sbr.rel (0) target = $region21
  $region20: #{forward.53} parent=0 // pred_region
    _
  $region21: #{forward.53} parent=0 // pred_fallthru
    _
  %v21 = vld [vmem:[%s0] sm:$0xff]
  %v22 = vld [vmem:[%s0 + $0x8] sm:$0xff]
  %v23 = vld [vmem:[%s0 + $0x10] sm:$0xff]
  %v24 = vld [vmem:[%s0 + $0x18] sm:$0xff]
  %v25 = vmax.f32 %v21, 0.0
  %v26 = vmax.f32 %v22, 0.0
  %v27 = vmax.f32 %v23, 0.0
  %v28 = vmax.f32 %v24, 0.0
  %v29 = vpack.c.bf16 %v26, %v25
  %v30 = vpack.c.bf16 %v28, %v27
  %v31 = vld [vmem:[%s1] sm:$0xff]
  %v32 = vpack.c.bf16 %v31, %v31
  %v33 = vld [vmem:[%s2] sm:$0x1]
  %v35 = vlaneseq
  %v36 = vshrl.u32 %v35, 7
  %v37 = vsub.s32 0, %v36
  %v38 = vrot.slane %v33, %v37
  %vm40 = vcmask 64512
  %v42 = vsel %vm40, %v29, 0
  %v45 = vsel %vm40, %v30, 0
  %vm47 = vcmask 1043456
  %v49 = vsel %vm47, %v32, 0
  %51 = vmatprep.subr.bf16.mxu0 0
  %52 = vmatpush1.bf16.msra.mxu0 %v49
  %53 = vmatprep.subr.bf16.mxu0 0
  %54 = vmatpush1.bf16.msra.mxu0 0
  %55 = vmatprep.subr.bf16.mxu0 0
  %56 = vmatpush1.bf16.msra.mxu0 0
  %57 = vmatprep.subr.bf16.mxu0 0
  %58 = vmatpush1.bf16.msra.mxu0 0
  %59 = vmatprep.subr.bf16.mxu0 0
  %60 = vmatpush1.bf16.msra.mxu0 0
  %61 = vmatprep.subr.bf16.mxu0 0
  %62 = vmatpush1.bf16.msra.mxu0 0
  %63 = vmatprep.subr.bf16.mxu0 0
  %64 = vmatpush1.bf16.msra.mxu0 0
  %65 = vmatprep.subr.bf16.mxu0 0
  %66 = vmatpush1.bf16.msra.mxu0 0
  %67 = vmatprep.subr.bf16.mxu0 0
  %68 = vmatpush1.bf16.msra.mxu0 0
  %69 = vmatprep.subr.bf16.mxu0 0
  %70 = vmatpush1.bf16.msra.mxu0 0
  %71 = vmatprep.subr.bf16.mxu0 0
  %72 = vmatpush1.bf16.msra.mxu0 0
  %73 = vmatprep.subr.bf16.mxu0 0
  %74 = vmatpush1.bf16.msra.mxu0 0
  %75 = vmatprep.subr.bf16.mxu0 0
  %76 = vmatpush1.bf16.msra.mxu0 0
  %77 = vmatprep.subr.bf16.mxu0 0
  %78 = vmatpush1.bf16.msra.mxu0 0
  %79 = vmatprep.subr.bf16.mxu0 0
  %80 = vmatpush1.bf16.msra.mxu0 0
  %81 = vmatprep.subr.bf16.mxu0 0
  %82 = vmatpush1.bf16.msra.mxu0 0
  %83 = vmatprep.mubr.bf16.mxu0 0
  %84 = vmatmul.mubr.bf16.gmra.mrb[0].mxu0 %v42
  %v85 = vpop.f32.mrb[0].mxu0
  %v86 = vadd.f32 %v38, %v85
  %v87 = vpop.f32.mrb[0].mxu0
  %v88 = vpop.f32.mrb[0].mxu0
  %v89 = vadd.f32 %v38, %v88
  %v90 = vpop.f32.mrb[0].mxu0
  %91 = vmatprep.mubr.bf16.mxu0 0
  %92 = vmatmul.mubr.bf16.gmra.mrb[0].mxu0 %v45
  %v93 = vpop.f32.mrb[0].mxu0
  %v94 = vadd.f32 %v38, %v93
  %v95 = vpop.f32.mrb[0].mxu0
  %v96 = vpop.f32.mrb[0].mxu0
  %v97 = vadd.f32 %v38, %v96
  %v98 = vpop.f32.mrb[0].mxu0
  %99 = vdwg.mxu0
  %v100 = vld [vmem:[%s3] sm:$0x1]
  %v102 = vlaneseq
  %v103 = vshrl.u32 %v102, 7
  %v104 = vsub.s32 0, %v103
  %v105 = vrot.slane %v100, %v104
  %v107 = vmul.f32 %v86, %v105
  %v108 = vmul.f32 %v89, %v105
  %v109 = vmul.f32 %v94, %v105
  %v110 = vmul.f32 %v97, %v105
  %v111 = vld [vmem:[%s4] sm:$0x1]
  %v113 = vlaneseq
  %v114 = vshrl.u32 %v113, 7
  %v115 = vsub.s32 0, %v114
  %v116 = vrot.slane %v111, %v115
  %v118 = vadd.f32 %v107, %v116
  %v119 = vadd.f32 %v108, %v116
  %v120 = vadd.f32 %v109, %v116
  %v121 = vadd.f32 %v110, %v116
  %v122 = vmax.f32 %v118, 0.0
  %v123 = vmax.f32 %v119, 0.0
  %v124 = vmax.f32 %v120, 0.0
  %v125 = vmax.f32 %v121, 0.0
  %vm126 = vcmask 130048
  %127 = vst.msk [vmem:[%s5] sm:$0xff] %vm126, %v122
  %128 = vst.msk [vmem:[%s5 + $0x8] sm:$0xff] %vm126, %v123
  %129 = vst.msk [vmem:[%s5 + $0x10] sm:$0xff] %vm126, %v124
  %130 = vst.msk [vmem:[%s5 + $0x18] sm:$0xff] %vm126, %v125
  // Predicated region
  $region22: #{forward.53} parent=0 // pred_check
    _
  $region23: #{forward.53} parent=0 // pred_check_branch
    %132 = sbr.rel (0) target = $region25
  $region24: #{forward.53} parent=0 // pred_region
    _
  $region25: #{forward.53} parent=0 // pred_fallthru
    _
  // Predicated region
  $region26: #{forward.53} parent=0 // pred_check
    _
  $region27: #{forward.53} parent=0 // pred_check_branch
    %134 = sbr.rel (0) target = $region29
  $region28: #{forward.53} parent=0 // pred_region
    _
  $region29: #{forward.53} parent=0 // pred_fallthru
    _

// kernel: forward.54
$region0: #{forward.54}
  #allocation0 [shape = 'u32[]', space=smem, size = 0x4, offset = 0x4, fixed_abs, tag = 'smem constant byte address 0x4 - core index']
  #allocation1 [shape = 'u32[144,128]{1,0:T(1,128)}', space=vmem, size = 0x12000, scoped, tag = 'internal scratch']
  %s0 = inlined_call_operand.vmem [shape: f32[32,144], index: 0, kind: input, shape index: {}]
  %s1 = inlined_call_operand.vmem [shape: f32[144,8], index: 1, kind: input, shape index: {}]
  %s2 = inlined_call_operand.vmem [shape: f32[1,8], index: 2, kind: input, shape index: {}]
  %s3 = inlined_call_operand.vmem [shape: f32[32,8], index: 3, kind: output, shape index: {}]
  %s4 = sld [smem:[#allocation0]]
  $region22: #{forward.54} parent=0
    _
  %s6 = ssub.s32 1, %s4
  %s7 = scalar_select 0, %s6, %s4
  // Predicated region
  $region2: #{forward.54} parent=0 // pred_check
    _
  $region3: #{forward.54} parent=0 // pred_check_branch
    %9 = sbr.rel (0) target = $region5
  $region4: #{forward.54} parent=0 // pred_region
    _
  $region5: #{forward.54} parent=0 // pred_fallthru
    _
  // Predicated region
  $region6: #{forward.54} parent=0 // pred_check
    _
  $region7: #{forward.54} parent=0 // pred_check_branch
    %11 = sbr.rel (0) target = $region9
  $region8: #{forward.54} parent=0 // pred_region
    _
  $region9: #{forward.54} parent=0 // pred_fallthru
    _
  // Predicated region
  $region10: #{forward.54} parent=0 // pred_check
    _
  $region11: #{forward.54} parent=0 // pred_check_branch
    %13 = sbr.rel (0) target = $region13
  $region12: #{forward.54} parent=0 // pred_region
    _
  $region13: #{forward.54} parent=0 // pred_fallthru
    _
  %v15 = vld [vmem:[%s0] sm:$0xff]
  %v16 = vld [vmem:[%s0 + $0x8] sm:$0xff]
  %v17 = vld [vmem:[%s0 + $0x10] sm:$0xff]
  %v18 = vld [vmem:[%s0 + $0x18] sm:$0xff]
  %v19 = vld [vmem:[%s0 + $0x20] sm:$0xff]
  %v20 = vld [vmem:[%s0 + $0x28] sm:$0xff]
  %v21 = vld [vmem:[%s0 + $0x30] sm:$0xff]
  %v22 = vld [vmem:[%s0 + $0x38] sm:$0xff]
  %v23 = vpack.c.bf16 %v17, %v15
  %v24 = vpack.c.bf16 %v18, %v16
  %v25 = vpack.c.bf16 %v21, %v19
  %v26 = vpack.c.bf16 %v22, %v20
  %v27 = vld [vmem:[%s1] sm:$0xff]
  %v28 = vld [vmem:[%s1 + $0x8] sm:$0xff]
  %v29 = vld [vmem:[%s1 + $0x10] sm:$0xff]
  %v30 = vld [vmem:[%s1 + $0x18] sm:$0xff]
  %v31 = vld [vmem:[%s1 + $0x20] sm:$0xff]
  %v32 = vld [vmem:[%s1 + $0x28] sm:$0xff]
  %v33 = vld [vmem:[%s1 + $0x30] sm:$0xff]
  %v34 = vld [vmem:[%s1 + $0x38] sm:$0xff]
  %v35 = vld [vmem:[%s1 + $0x40] sm:$0xff]
  %v36 = vld [vmem:[%s1 + $0x48] sm:$0xff]
  %v37 = vld [vmem:[%s1 + $0x50] sm:$0xff]
  %v38 = vld [vmem:[%s1 + $0x58] sm:$0xff]
  %v39 = vld [vmem:[%s1 + $0x60] sm:$0xff]
  %v40 = vld [vmem:[%s1 + $0x68] sm:$0xff]
  %v41 = vld [vmem:[%s1 + $0x70] sm:$0xff]
  %v42 = vld [vmem:[%s1 + $0x78] sm:$0xff]
  %v43 = vld [vmem:[%s1 + $0x80] sm:$0xff]
  %v44 = vld [vmem:[%s1 + $0x88] sm:$0xff]
  %v45 = vpack.c.bf16 %v28, %v27
  %v46 = vpack.c.bf16 %v30, %v29
  %v47 = vpack.c.bf16 %v32, %v31
  %v48 = vpack.c.bf16 %v34, %v33
  %v49 = vpack.c.bf16 %v36, %v35
  %v50 = vpack.c.bf16 %v38, %v37
  %v51 = vpack.c.bf16 %v40, %v39
  %v52 = vpack.c.bf16 %v42, %v41
  %v53 = vpack.c.bf16 %v44, %v43
  %v54 = vld [vmem:[%s2] sm:$0x1]
  %v56 = vlaneseq
  %v57 = vshrl.u32 %v56, 7
  %v58 = vsub.s32 0, %v57
  %v59 = vrot.slane %v54, %v58
  %vm61 = vcmask 130048
  %v63 = vsel %vm61, %v24, 0
  %v66 = vsel %vm61, %v26, 0
  %68 = vmatprep.subr.bf16.mxu0 0
  %69 = vmatpush1.bf16.msra.mxu0 %v45
  %70 = vmatprep.subr.bf16.mxu0 0
  %71 = vmatpush1.bf16.msra.mxu0 %v46
  %72 = vmatprep.subr.bf16.mxu0 0
  %73 = vmatpush1.bf16.msra.mxu0 %v47
  %74 = vmatprep.subr.bf16.mxu0 0
  %75 = vmatpush1.bf16.msra.mxu0 %v48
  %76 = vmatprep.subr.bf16.mxu0 0
  %77 = vmatpush1.bf16.msra.mxu0 %v49
  %78 = vmatprep.subr.bf16.mxu0 0
  %79 = vmatpush1.bf16.msra.mxu0 %v50
  %80 = vmatprep.subr.bf16.mxu0 0
  %81 = vmatpush1.bf16.msra.mxu0 %v51
  %82 = vmatprep.subr.bf16.mxu0 0
  %83 = vmatpush1.bf16.msra.mxu0 %v52
  %84 = vmatprep.subr.bf16.mxu0 0
  %85 = vmatpush1.bf16.msra.mxu0 %v53
  %86 = vmatprep.subr.bf16.mxu0 0
  %87 = vmatpush1.bf16.msra.mxu0 0
  %88 = vmatprep.subr.bf16.mxu0 0
  %89 = vmatpush1.bf16.msra.mxu0 0
  %90 = vmatprep.subr.bf16.mxu0 0
  %91 = vmatpush1.bf16.msra.mxu0 0
  %92 = vmatprep.subr.bf16.mxu0 0
  %93 = vmatpush1.bf16.msra.mxu0 0
  %94 = vmatprep.subr.bf16.mxu0 0
  %95 = vmatpush1.bf16.msra.mxu0 0
  %96 = vmatprep.subr.bf16.mxu0 0
  %97 = vmatpush1.bf16.msra.mxu0 0
  %98 = vmatprep.subr.bf16.mxu0 0
  %99 = vmatpush1.bf16.msra.mxu0 0
  %100 = vmatprep.mubr.bf16.mxu0 %v63
  %101 = vmatmul.mubr.bf16.gmra.mrb[0].mxu0 %v23
  %v102 = vpop.f32.mrb[0].mxu0
  %v103 = vadd.f32 %v59, %v102
  %v104 = vpop.f32.mrb[0].mxu0
  %v105 = vpop.f32.mrb[0].mxu0
  %v106 = vadd.f32 %v59, %v105
  %v107 = vpop.f32.mrb[0].mxu0
  %108 = vmatprep.mubr.bf16.mxu0 %v66
  %109 = vmatmul.mubr.bf16.gmra.mrb[0].mxu0 %v25
  %v110 = vpop.f32.mrb[0].mxu0
  %v111 = vadd.f32 %v59, %v110
  %v112 = vpop.f32.mrb[0].mxu0
  %v113 = vpop.f32.mrb[0].mxu0
  %v114 = vadd.f32 %v59, %v113
  %v115 = vpop.f32.mrb[0].mxu0
  %116 = vdwg.mxu0
  %vm117 = vcmask 64512
  %118 = vst.msk [vmem:[%s3] sm:$0xff] %vm117, %v103
  %119 = vst.msk [vmem:[%s3 + $0x8] sm:$0xff] %vm117, %v106
  %120 = vst.msk [vmem:[%s3 + $0x10] sm:$0xff] %vm117, %v111
  %121 = vst.msk [vmem:[%s3 + $0x18] sm:$0xff] %vm117, %v114
  // Predicated region
  $region14: #{forward.54} parent=0 // pred_check
    _
  $region15: #{forward.54} parent=0 // pred_check_branch
    %123 = sbr.rel (0) target = $region17
  $region16: #{forward.54} parent=0 // pred_region
    _
  $region17: #{forward.54} parent=0 // pred_fallthru
    _
  // Predicated region
  $region18: #{forward.54} parent=0 // pred_check
    _
  $region19: #{forward.54} parent=0 // pred_check_branch
    %125 = sbr.rel (0) target = $region21
  $region20: #{forward.54} parent=0 // pred_region
    _
  $region21: #{forward.54} parent=0 // pred_fallthru
    _

// kernel: forward.55
$region0: #{forward.55}
  #allocation0 [shape = 'u32[]', space=smem, size = 0x4, offset = 0x4, fixed_abs, tag = 'smem constant byte address 0x4 - core index']
  #allocation1 [shape = 'u32[144,128]{1,0:T(1,128)}', space=vmem, size = 0x12000, scoped, tag = 'internal scratch']
  %s0 = inlined_call_operand.vmem [shape: f32[32,16], index: 0, kind: input, shape index: {}]
  %s1 = inlined_call_operand.vmem [shape: f32[1,16], index: 1, kind: input, shape index: {}]
  %s2 = inlined_call_operand.vmem [shape: f32[1,16], index: 2, kind: input, shape index: {}]
  %s3 = inlined_call_operand.vmem [shape: f32[16,16], index: 3, kind: input, shape index: {}]
  %s4 = inlined_call_operand.vmem [shape: f32[1,16], index: 4, kind: input, shape index: {}]
  %s5 = inlined_call_operand.vmem [shape: f32[1,16], index: 5, kind: input, shape index: {}]
  %s6 = inlined_call_operand.vmem [shape: f32[1,16], index: 6, kind: input, shape index: {}]
  %s7 = inlined_call_operand.vmem [shape: f32[32,16], index: 7, kind: output, shape index: {}]
  %s8 = sld [smem:[#allocation0]]
  $region38: #{forward.55} parent=0
    _
  %s10 = ssub.s32 1, %s8
  %s11 = scalar_select 0, %s10, %s8
  // Predicated region
  $region2: #{forward.55} parent=0 // pred_check
    _
  $region3: #{forward.55} parent=0 // pred_check_branch
    %13 = sbr.rel (0) target = $region5
  $region4: #{forward.55} parent=0 // pred_region
    _
  $region5: #{forward.55} parent=0 // pred_fallthru
    _
  // Predicated region
  $region6: #{forward.55} parent=0 // pred_check
    _
  $region7: #{forward.55} parent=0 // pred_check_branch
    %15 = sbr.rel (0) target = $region9
  $region8: #{forward.55} parent=0 // pred_region
    _
  $region9: #{forward.55} parent=0 // pred_fallthru
    _
  // Predicated region
  $region10: #{forward.55} parent=0 // pred_check
    _
  $region11: #{forward.55} parent=0 // pred_check_branch
    %17 = sbr.rel (0) target = $region13
  $region12: #{forward.55} parent=0 // pred_region
    _
  $region13: #{forward.55} parent=0 // pred_fallthru
    _
  // Predicated region
  $region14: #{forward.55} parent=0 // pred_check
    _
  $region15: #{forward.55} parent=0 // pred_check_branch
    %19 = sbr.rel (0) target = $region17
  $region16: #{forward.55} parent=0 // pred_region
    _
  $region17: #{forward.55} parent=0 // pred_fallthru
    _
  // Predicated region
  $region18: #{forward.55} parent=0 // pred_check
    _
  $region19: #{forward.55} parent=0 // pred_check_branch
    %21 = sbr.rel (0) target = $region21
  $region20: #{forward.55} parent=0 // pred_region
    _
  $region21: #{forward.55} parent=0 // pred_fallthru
    _
  // Predicated region
  $region22: #{forward.55} parent=0 // pred_check
    _
  $region23: #{forward.55} parent=0 // pred_check_branch
    %23 = sbr.rel (0) target = $region25
  $region24: #{forward.55} parent=0 // pred_region
    _
  $region25: #{forward.55} parent=0 // pred_fallthru
    _
  // Predicated region
  $region26: #{forward.55} parent=0 // pred_check
    _
  $region27: #{forward.55} parent=0 // pred_check_branch
    %25 = sbr.rel (0) target = $region29
  $region28: #{forward.55} parent=0 // pred_region
    _
  $region29: #{forward.55} parent=0 // pred_fallthru
    _
  %v27 = vld [vmem:[%s0] sm:$0xff]
  %v28 = vld [vmem:[%s0 + $0x8] sm:$0xff]
  %v29 = vld [vmem:[%s0 + $0x10] sm:$0xff]
  %v30 = vld [vmem:[%s0 + $0x18] sm:$0xff]
  %v31 = vld [vmem:[%s1] sm:$0x1]
  %v33 = vlaneseq
  %v34 = vshrl.u32 %v33, 7
  %v35 = vsub.s32 0, %v34
  %v36 = vrot.slane %v31, %v35
  %v38 = vmul.f32 %v27, %v36
  %v39 = vmul.f32 %v28, %v36
  %v40 = vmul.f32 %v29, %v36
  %v41 = vmul.f32 %v30, %v36
  %v42 = vld [vmem:[%s2] sm:$0x1]
  %v44 = vlaneseq
  %v45 = vshrl.u32 %v44, 7
  %v46 = vsub.s32 0, %v45
  %v47 = vrot.slane %v42, %v46
  %v49 = vadd.f32 %v38, %v47
  %v50 = vadd.f32 %v39, %v47
  %v51 = vadd.f32 %v40, %v47
  %v52 = vadd.f32 %v41, %v47
  %v53 = vmax.f32 %v49, 0.0
  %v54 = vmax.f32 %v50, 0.0
  %v55 = vmax.f32 %v51, 0.0
  %v56 = vmax.f32 %v52, 0.0
  %v57 = vpack.c.bf16 %v54, %v53
  %v58 = vpack.c.bf16 %v56, %v55
  %v59 = vld [vmem:[%s3] sm:$0xff]
  %v60 = vld [vmem:[%s3 + $0x8] sm:$0xff]
  %v61 = vpack.c.bf16 %v60, %v59
  %v62 = vld [vmem:[%s4] sm:$0x1]
  %v64 = vlaneseq
  %v65 = vshrl.u32 %v64, 7
  %v66 = vsub.s32 0, %v65
  %v67 = vrot.slane %v62, %v66
  %vm69 = vcmask 130048
  %v71 = vsel %vm69, %v57, 0
  %v74 = vsel %vm69, %v58, 0
  %76 = vmatprep.subr.bf16.mxu0 0
  %77 = vmatpush1.bf16.msra.mxu0 %v61
  %78 = vmatprep.subr.bf16.mxu0 0
  %79 = vmatpush1.bf16.msra.mxu0 0
  %80 = vmatprep.subr.bf16.mxu0 0
  %81 = vmatpush1.bf16.msra.mxu0 0
  %82 = vmatprep.subr.bf16.mxu0 0
  %83 = vmatpush1.bf16.msra.mxu0 0
  %84 = vmatprep.subr.bf16.mxu0 0
  %85 = vmatpush1.bf16.msra.mxu0 0
  %86 = vmatprep.subr.bf16.mxu0 0
  %87 = vmatpush1.bf16.msra.mxu0 0
  %88 = vmatprep.subr.bf16.mxu0 0
  %89 = vmatpush1.bf16.msra.mxu0 0
  %90 = vmatprep.subr.bf16.mxu0 0
  %91 = vmatpush1.bf16.msra.mxu0 0
  %92 = vmatprep.subr.bf16.mxu0 0
  %93 = vmatpush1.bf16.msra.mxu0 0
  %94 = vmatprep.subr.bf16.mxu0 0
  %95 = vmatpush1.bf16.msra.mxu0 0
  %96 = vmatprep.subr.bf16.mxu0 0
  %97 = vmatpush1.bf16.msra.mxu0 0
  %98 = vmatprep.subr.bf16.mxu0 0
  %99 = vmatpush1.bf16.msra.mxu0 0
  %100 = vmatprep.subr.bf16.mxu0 0
  %101 = vmatpush1.bf16.msra.mxu0 0
  %102 = vmatprep.subr.bf16.mxu0 0
  %103 = vmatpush1.bf16.msra.mxu0 0
  %104 = vmatprep.subr.bf16.mxu0 0
  %105 = vmatpush1.bf16.msra.mxu0 0
  %106 = vmatprep.subr.bf16.mxu0 0
  %107 = vmatpush1.bf16.msra.mxu0 0
  %108 = vmatprep.mubr.bf16.mxu0 0
  %109 = vmatmul.mubr.bf16.gmra.mrb[0].mxu0 %v71
  %v110 = vpop.f32.mrb[0].mxu0
  %v111 = vadd.f32 %v67, %v110
  %v112 = vpop.f32.mrb[0].mxu0
  %v113 = vpop.f32.mrb[0].mxu0
  %v114 = vadd.f32 %v67, %v113
  %v115 = vpop.f32.mrb[0].mxu0
  %116 = vmatprep.mubr.bf16.mxu0 0
  %117 = vmatmul.mubr.bf16.gmra.mrb[0].mxu0 %v74
  %v118 = vpop.f32.mrb[0].mxu0
  %v119 = vadd.f32 %v67, %v118
  %v120 = vpop.f32.mrb[0].mxu0
  %v121 = vpop.f32.mrb[0].mxu0
  %v122 = vadd.f32 %v67, %v121
  %v123 = vpop.f32.mrb[0].mxu0
  %124 = vdwg.mxu0
  %v125 = vld [vmem:[%s5] sm:$0x1]
  %v127 = vlaneseq
  %v128 = vshrl.u32 %v127, 7
  %v129 = vsub.s32 0, %v128
  %v130 = vrot.slane %v125, %v129
  %v132 = vmul.f32 %v111, %v130
  %v133 = vmul.f32 %v114, %v130
  %v134 = vmul.f32 %v119, %v130
  %v135 = vmul.f32 %v122, %v130
  %v136 = vld [vmem:[%s6] sm:$0x1]
  %v138 = vlaneseq
  %v139 = vshrl.u32 %v138, 7
  %v140 = vsub.s32 0, %v139
  %v141 = vrot.slane %v136, %v140
  %v143 = vadd.f32 %v132, %v141
  %v144 = vadd.f32 %v133, %v141
  %v145 = vadd.f32 %v134, %v141
  %v146 = vadd.f32 %v135, %v141
  %v147 = vmax.f32 %v143, 0.0
  %v148 = vmax.f32 %v144, 0.0
  %v149 = vmax.f32 %v145, 0.0
  %v150 = vmax.f32 %v146, 0.0
  %151 = vst.msk [vmem:[%s7] sm:$0xff] %vm69, %v147
  %152 = vst.msk [vmem:[%s7 + $0x8] sm:$0xff] %vm69, %v148
  %153 = vst.msk [vmem:[%s7 + $0x10] sm:$0xff] %vm69, %v149
  %154 = vst.msk [vmem:[%s7 + $0x18] sm:$0xff] %vm69, %v150
  // Predicated region
  $region30: #{forward.55} parent=0 // pred_check
    _
  $region31: #{forward.55} parent=0 // pred_check_branch
    %156 = sbr.rel (0) target = $region33
  $region32: #{forward.55} parent=0 // pred_region
    _
  $region33: #{forward.55} parent=0 // pred_fallthru
    _
  // Predicated region
  $region34: #{forward.55} parent=0 // pred_check
    _
  $region35: #{forward.55} parent=0 // pred_check_branch
    %158 = sbr.rel (0) target = $region37
  $region36: #{forward.55} parent=0 // pred_region
    _
  $region37: #{forward.55} parent=0 // pred_fallthru
    _

// kernel: forward.56
$region0: #{forward.56}
  #allocation0 [shape = 'u32[]', space=smem, size = 0x4, offset = 0x4, fixed_abs, tag = 'smem constant byte address 0x4 - core index']
  #allocation1 [shape = 'u32[144,128]{1,0:T(1,128)}', space=vmem, size = 0x12000, scoped, tag = 'internal scratch']
  %s0 = inlined_call_operand.vmem [shape: f32[32,16], index: 0, kind: input, shape index: {}]
  %s1 = inlined_call_operand.vmem [shape: f32[16,8], index: 1, kind: input, shape index: {}]
  %s2 = inlined_call_operand.vmem [shape: f32[1,8], index: 2, kind: input, shape index: {}]
  %s3 = inlined_call_operand.vmem [shape: f32[32,8], index: 3, kind: output, shape index: {}]
  %s4 = sld [smem:[#allocation0]]
  $region22: #{forward.56} parent=0
    _
  %s6 = ssub.s32 1, %s4
  %s7 = scalar_select 0, %s6, %s4
  // Predicated region
  $region2: #{forward.56} parent=0 // pred_check
    _
  $region3: #{forward.56} parent=0 // pred_check_branch
    %9 = sbr.rel (0) target = $region5
  $region4: #{forward.56} parent=0 // pred_region
    _
  $region5: #{forward.56} parent=0 // pred_fallthru
    _
  // Predicated region
  $region6: #{forward.56} parent=0 // pred_check
    _
  $region7: #{forward.56} parent=0 // pred_check_branch
    %11 = sbr.rel (0) target = $region9
  $region8: #{forward.56} parent=0 // pred_region
    _
  $region9: #{forward.56} parent=0 // pred_fallthru
    _
  // Predicated region
  $region10: #{forward.56} parent=0 // pred_check
    _
  $region11: #{forward.56} parent=0 // pred_check_branch
    %13 = sbr.rel (0) target = $region13
  $region12: #{forward.56} parent=0 // pred_region
    _
  $region13: #{forward.56} parent=0 // pred_fallthru
    _
  %v15 = vld [vmem:[%s0] sm:$0xff]
  %v16 = vld [vmem:[%s0 + $0x8] sm:$0xff]
  %v17 = vld [vmem:[%s0 + $0x10] sm:$0xff]
  %v18 = vld [vmem:[%s0 + $0x18] sm:$0xff]
  %v19 = vpack.c.bf16 %v16, %v15
  %v20 = vpack.c.bf16 %v18, %v17
  %v21 = vld [vmem:[%s1] sm:$0xff]
  %v22 = vld [vmem:[%s1 + $0x8] sm:$0xff]
  %v23 = vpack.c.bf16 %v22, %v21
  %v24 = vld [vmem:[%s2] sm:$0x1]
  %v26 = vlaneseq
  %v27 = vshrl.u32 %v26, 7
  %v28 = vsub.s32 0, %v27
  %v29 = vrot.slane %v24, %v28
  %vm31 = vcmask 130048
  %v33 = vsel %vm31, %v19, 0
  %v36 = vsel %vm31, %v20, 0
  %38 = vmatprep.subr.bf16.mxu0 0
  %39 = vmatpush1.bf16.msra.mxu0 %v23
  %40 = vmatprep.subr.bf16.mxu0 0
  %41 = vmatpush1.bf16.msra.mxu0 0
  %42 = vmatprep.subr.bf16.mxu0 0
  %43 = vmatpush1.bf16.msra.mxu0 0
  %44 = vmatprep.subr.bf16.mxu0 0
  %45 = vmatpush1.bf16.msra.mxu0 0
  %46 = vmatprep.subr.bf16.mxu0 0
  %47 = vmatpush1.bf16.msra.mxu0 0
  %48 = vmatprep.subr.bf16.mxu0 0
  %49 = vmatpush1.bf16.msra.mxu0 0
  %50 = vmatprep.subr.bf16.mxu0 0
  %51 = vmatpush1.bf16.msra.mxu0 0
  %52 = vmatprep.subr.bf16.mxu0 0
  %53 = vmatpush1.bf16.msra.mxu0 0
  %54 = vmatprep.subr.bf16.mxu0 0
  %55 = vmatpush1.bf16.msra.mxu0 0
  %56 = vmatprep.subr.bf16.mxu0 0
  %57 = vmatpush1.bf16.msra.mxu0 0
  %58 = vmatprep.subr.bf16.mxu0 0
  %59 = vmatpush1.bf16.msra.mxu0 0
  %60 = vmatprep.subr.bf16.mxu0 0
  %61 = vmatpush1.bf16.msra.mxu0 0
  %62 = vmatprep.subr.bf16.mxu0 0
  %63 = vmatpush1.bf16.msra.mxu0 0
  %64 = vmatprep.subr.bf16.mxu0 0
  %65 = vmatpush1.bf16.msra.mxu0 0
  %66 = vmatprep.subr.bf16.mxu0 0
  %67 = vmatpush1.bf16.msra.mxu0 0
  %68 = vmatprep.subr.bf16.mxu0 0
  %69 = vmatpush1.bf16.msra.mxu0 0
  %70 = vmatprep.mubr.bf16.mxu0 0
  %71 = vmatmul.mubr.bf16.gmra.mrb[0].mxu0 %v33
  %v72 = vpop.f32.mrb[0].mxu0
  %v73 = vadd.f32 %v29, %v72
  %v74 = vpop.f32.mrb[0].mxu0
  %v75 = vpop.f32.mrb[0].mxu0
  %v76 = vadd.f32 %v29, %v75
  %v77 = vpop.f32.mrb[0].mxu0
  %78 = vmatprep.mubr.bf16.mxu0 0
  %79 = vmatmul.mubr.bf16.gmra.mrb[0].mxu0 %v36
  %v80 = vpop.f32.mrb[0].mxu0
  %v81 = vadd.f32 %v29, %v80
  %v82 = vpop.f32.mrb[0].mxu0
  %v83 = vpop.f32.mrb[0].mxu0
  %v84 = vadd.f32 %v29, %v83
  %v85 = vpop.f32.mrb[0].mxu0
  %86 = vdwg.mxu0
  %vm87 = vcmask 64512
  %88 = vst.msk [vmem:[%s3] sm:$0xff] %vm87, %v73
  %89 = vst.msk [vmem:[%s3 + $0x8] sm:$0xff] %vm87, %v76
  %90 = vst.msk [vmem:[%s3 + $0x10] sm:$0xff] %vm87, %v81
  %91 = vst.msk [vmem:[%s3 + $0x18] sm:$0xff] %vm87, %v84
  // Predicated region
  $region14: #{forward.56} parent=0 // pred_check
    _
  $region15: #{forward.56} parent=0 // pred_check_branch
    %93 = sbr.rel (0) target = $region17
  $region16: #{forward.56} parent=0 // pred_region
    _
  $region17: #{forward.56} parent=0 // pred_fallthru
    _
  // Predicated region
  $region18: #{forward.56} parent=0 // pred_check
    _
  $region19: #{forward.56} parent=0 // pred_check_branch
    %95 = sbr.rel (0) target = $region21
  $region20: #{forward.56} parent=0 // pred_region
    _
  $region21: #{forward.56} parent=0 // pred_fallthru
    _

// kernel: forward.57
$region0: #{forward.57}
  #allocation0 [shape = 'u32[]', space=smem, size = 0x4, offset = 0x4, fixed_abs, tag = 'smem constant byte address 0x4 - core index']
  #allocation1 [shape = 'u32[144,128]{1,0:T(1,128)}', space=vmem, size = 0x12000, scoped, tag = 'internal scratch']
  %s0 = inlined_call_operand.vmem [shape: f32[32,24], index: 0, kind: input, shape index: {}]
  %s1 = inlined_call_operand.vmem [shape: f32[1,24], index: 1, kind: input, shape index: {}]
  %s2 = inlined_call_operand.vmem [shape: f32[1,24], index: 2, kind: input, shape index: {}]
  %s3 = inlined_call_operand.vmem [shape: f32[24,16], index: 3, kind: input, shape index: {}]
  %s4 = inlined_call_operand.vmem [shape: f32[1,16], index: 4, kind: input, shape index: {}]
  %s5 = inlined_call_operand.vmem [shape: f32[1,16], index: 5, kind: input, shape index: {}]
  %s6 = inlined_call_operand.vmem [shape: f32[1,16], index: 6, kind: input, shape index: {}]
  %s7 = inlined_call_operand.vmem [shape: f32[32,16], index: 7, kind: output, shape index: {}]
  %s8 = sld [smem:[#allocation0]]
  $region38: #{forward.57} parent=0
    _
  %s10 = ssub.s32 1, %s8
  %s11 = scalar_select 0, %s10, %s8
  // Predicated region
  $region2: #{forward.57} parent=0 // pred_check
    _
  $region3: #{forward.57} parent=0 // pred_check_branch
    %13 = sbr.rel (0) target = $region5
  $region4: #{forward.57} parent=0 // pred_region
    _
  $region5: #{forward.57} parent=0 // pred_fallthru
    _
  // Predicated region
  $region6: #{forward.57} parent=0 // pred_check
    _
  $region7: #{forward.57} parent=0 // pred_check_branch
    %15 = sbr.rel (0) target = $region9
  $region8: #{forward.57} parent=0 // pred_region
    _
  $region9: #{forward.57} parent=0 // pred_fallthru
    _
  // Predicated region
  $region10: #{forward.57} parent=0 // pred_check
    _
  $region11: #{forward.57} parent=0 // pred_check_branch
    %17 = sbr.rel (0) target = $region13
  $region12: #{forward.57} parent=0 // pred_region
    _
  $region13: #{forward.57} parent=0 // pred_fallthru
    _
  // Predicated region
  $region14: #{forward.57} parent=0 // pred_check
    _
  $region15: #{forward.57} parent=0 // pred_check_branch
    %19 = sbr.rel (0) target = $region17
  $region16: #{forward.57} parent=0 // pred_region
    _
  $region17: #{forward.57} parent=0 // pred_fallthru
    _
  // Predicated region
  $region18: #{forward.57} parent=0 // pred_check
    _
  $region19: #{forward.57} parent=0 // pred_check_branch
    %21 = sbr.rel (0) target = $region21
  $region20: #{forward.57} parent=0 // pred_region
    _
  $region21: #{forward.57} parent=0 // pred_fallthru
    _
  // Predicated region
  $region22: #{forward.57} parent=0 // pred_check
    _
  $region23: #{forward.57} parent=0 // pred_check_branch
    %23 = sbr.rel (0) target = $region25
  $region24: #{forward.57} parent=0 // pred_region
    _
  $region25: #{forward.57} parent=0 // pred_fallthru
    _
  // Predicated region
  $region26: #{forward.57} parent=0 // pred_check
    _
  $region27: #{forward.57} parent=0 // pred_check_branch
    %25 = sbr.rel (0) target = $region29
  $region28: #{forward.57} parent=0 // pred_region
    _
  $region29: #{forward.57} parent=0 // pred_fallthru
    _
  %v27 = vld [vmem:[%s0] sm:$0xff]
  %v28 = vld [vmem:[%s0 + $0x8] sm:$0xff]
  %v29 = vld [vmem:[%s0 + $0x10] sm:$0xff]
  %v30 = vld [vmem:[%s0 + $0x18] sm:$0xff]
  %v31 = vld [vmem:[%s1] sm:$0x1]
  %v33 = vlaneseq
  %v34 = vshrl.u32 %v33, 7
  %v35 = vsub.s32 0, %v34
  %v36 = vrot.slane %v31, %v35
  %v38 = vmul.f32 %v27, %v36
  %v39 = vmul.f32 %v28, %v36
  %v40 = vmul.f32 %v29, %v36
  %v41 = vmul.f32 %v30, %v36
  %v42 = vld [vmem:[%s2] sm:$0x1]
  %v44 = vlaneseq
  %v45 = vshrl.u32 %v44, 7
  %v46 = vsub.s32 0, %v45
  %v47 = vrot.slane %v42, %v46
  %v49 = vadd.f32 %v38, %v47
  %v50 = vadd.f32 %v39, %v47
  %v51 = vadd.f32 %v40, %v47
  %v52 = vadd.f32 %v41, %v47
  %v53 = vmax.f32 %v49, 0.0
  %v54 = vmax.f32 %v50, 0.0
  %v55 = vmax.f32 %v51, 0.0
  %v56 = vmax.f32 %v52, 0.0
  %v57 = vpack.c.bf16 %v54, %v53
  %v58 = vpack.c.bf16 %v56, %v55
  %v59 = vld [vmem:[%s3] sm:$0xff]
  %v60 = vld [vmem:[%s3 + $0x8] sm:$0xff]
  %v61 = vld [vmem:[%s3 + $0x10] sm:$0xff]
  %v62 = vpack.c.bf16 %v60, %v59
  %v63 = vpack.c.bf16 %v61, %v61
  %v64 = vld [vmem:[%s4] sm:$0x1]
  %v66 = vlaneseq
  %v67 = vshrl.u32 %v66, 7
  %v68 = vsub.s32 0, %v67
  %v69 = vrot.slane %v64, %v68
  %vm71 = vcmask 195584
  %v73 = vsel %vm71, %v57, 0
  %v76 = vsel %vm71, %v58, 0
  %vm78 = vcmask 1043456
  %v80 = vsel %vm78, %v63, 0
  %82 = vmatprep.subr.bf16.mxu0 0
  %83 = vmatpush1.bf16.msra.mxu0 %v62
  %84 = vmatprep.subr.bf16.mxu0 0
  %85 = vmatpush1.bf16.msra.mxu0 %v80
  %86 = vmatprep.subr.bf16.mxu0 0
  %87 = vmatpush1.bf16.msra.mxu0 0
  %88 = vmatprep.subr.bf16.mxu0 0
  %89 = vmatpush1.bf16.msra.mxu0 0
  %90 = vmatprep.subr.bf16.mxu0 0
  %91 = vmatpush1.bf16.msra.mxu0 0
  %92 = vmatprep.subr.bf16.mxu0 0
  %93 = vmatpush1.bf16.msra.mxu0 0
  %94 = vmatprep.subr.bf16.mxu0 0
  %95 = vmatpush1.bf16.msra.mxu0 0
  %96 = vmatprep.subr.bf16.mxu0 0
  %97 = vmatpush1.bf16.msra.mxu0 0
  %98 = vmatprep.subr.bf16.mxu0 0
  %99 = vmatpush1.bf16.msra.mxu0 0
  %100 = vmatprep.subr.bf16.mxu0 0
  %101 = vmatpush1.bf16.msra.mxu0 0
  %102 = vmatprep.subr.bf16.mxu0 0
  %103 = vmatpush1.bf16.msra.mxu0 0
  %104 = vmatprep.subr.bf16.mxu0 0
  %105 = vmatpush1.bf16.msra.mxu0 0
  %106 = vmatprep.subr.bf16.mxu0 0
  %107 = vmatpush1.bf16.msra.mxu0 0
  %108 = vmatprep.subr.bf16.mxu0 0
  %109 = vmatpush1.bf16.msra.mxu0 0
  %110 = vmatprep.subr.bf16.mxu0 0
  %111 = vmatpush1.bf16.msra.mxu0 0
  %112 = vmatprep.subr.bf16.mxu0 0
  %113 = vmatpush1.bf16.msra.mxu0 0
  %114 = vmatprep.mubr.bf16.mxu0 0
  %115 = vmatmul.mubr.bf16.gmra.mrb[0].mxu0 %v73
  %v116 = vpop.f32.mrb[0].mxu0
  %v117 = vadd.f32 %v69, %v116
  %v118 = vpop.f32.mrb[0].mxu0
  %v119 = vpop.f32.mrb[0].mxu0
  %v120 = vadd.f32 %v69, %v119
  %v121 = vpop.f32.mrb[0].mxu0
  %122 = vmatprep.mubr.bf16.mxu0 0
  %123 = vmatmul.mubr.bf16.gmra.mrb[0].mxu0 %v76
  %v124 = vpop.f32.mrb[0].mxu0
  %v125 = vadd.f32 %v69, %v124
  %v126 = vpop.f32.mrb[0].mxu0
  %v127 = vpop.f32.mrb[0].mxu0
  %v128 = vadd.f32 %v69, %v127
  %v129 = vpop.f32.mrb[0].mxu0
  %130 = vdwg.mxu0
  %v131 = vld [vmem:[%s5] sm:$0x1]
  %v133 = vlaneseq
  %v134 = vshrl.u32 %v133, 7
  %v135 = vsub.s32 0, %v134
  %v136 = vrot.slane %v131, %v135
  %v138 = vmul.f32 %v117, %v136
  %v139 = vmul.f32 %v120, %v136
  %v140 = vmul.f32 %v125, %v136
  %v141 = vmul.f32 %v128, %v136
  %v142 = vld [vmem:[%s6] sm:$0x1]
  %v144 = vlaneseq
  %v145 = vshrl.u32 %v144, 7
  %v146 = vsub.s32 0, %v145
  %v147 = vrot.slane %v142, %v146
  %v149 = vadd.f32 %v138, %v147
  %v150 = vadd.f32 %v139, %v147
  %v151 = vadd.f32 %v140, %v147
  %v152 = vadd.f32 %v141, %v147
  %v153 = vmax.f32 %v149, 0.0
  %v154 = vmax.f32 %v150, 0.0
  %v155 = vmax.f32 %v151, 0.0
  %v156 = vmax.f32 %v152, 0.0
  %vm157 = vcmask 130048
  %158 = vst.msk [vmem:[%s7] sm:$0xff] %vm157, %v153
  %159 = vst.msk [vmem:[%s7 + $0x8] sm:$0xff] %vm157, %v154
  %160 = vst.msk [vmem:[%s7 + $0x10] sm:$0xff] %vm157, %v155
  %161 = vst.msk [vmem:[%s7 + $0x18] sm:$0xff] %vm157, %v156
  // Predicated region
  $region30: #{forward.57} parent=0 // pred_check
    _
  $region31: #{forward.57} parent=0 // pred_check_branch
    %163 = sbr.rel (0) target = $region33
  $region32: #{forward.57} parent=0 // pred_region
    _
  $region33: #{forward.57} parent=0 // pred_fallthru
    _
  // Predicated region
  $region34: #{forward.57} parent=0 // pred_check
    _
  $region35: #{forward.57} parent=0 // pred_check_branch
    %165 = sbr.rel (0) target = $region37
  $region36: #{forward.57} parent=0 // pred_region
    _
  $region37: #{forward.57} parent=0 // pred_fallthru
    _

// kernel: forward.59
$region0: #{forward.59}
  #allocation0 [shape = 'u32[]', space=smem, size = 0x4, offset = 0x4, fixed_abs, tag = 'smem constant byte address 0x4 - core index']
  #allocation1 [shape = 'u32[144,128]{1,0:T(1,128)}', space=vmem, size = 0x12000, scoped, tag = 'internal scratch']
  %s0 = inlined_call_operand.vmem [shape: f32[32,32], index: 0, kind: input, shape index: {}]
  %s1 = inlined_call_operand.vmem [shape: f32[1,32], index: 1, kind: input, shape index: {}]
  %s2 = inlined_call_operand.vmem [shape: f32[1,32], index: 2, kind: input, shape index: {}]
  %s3 = inlined_call_operand.vmem [shape: f32[32,16], index: 3, kind: input, shape index: {}]
  %s4 = inlined_call_operand.vmem [shape: f32[1,16], index: 4, kind: input, shape index: {}]
  %s5 = inlined_call_operand.vmem [shape: f32[1,16], index: 5, kind: input, shape index: {}]
  %s6 = inlined_call_operand.vmem [shape: f32[1,16], index: 6, kind: input, shape index: {}]
  %s7 = inlined_call_operand.vmem [shape: f32[32,16], index: 7, kind: output, shape index: {}]
  %s8 = sld [smem:[#allocation0]]
  $region38: #{forward.59} parent=0
    _
  %s10 = ssub.s32 1, %s8
  %s11 = scalar_select 0, %s10, %s8
  // Predicated region
  $region2: #{forward.59} parent=0 // pred_check
    _
  $region3: #{forward.59} parent=0 // pred_check_branch
    %13 = sbr.rel (0) target = $region5
  $region4: #{forward.59} parent=0 // pred_region
    _
  $region5: #{forward.59} parent=0 // pred_fallthru
    _
  // Predicated region
  $region6: #{forward.59} parent=0 // pred_check
    _
  $region7: #{forward.59} parent=0 // pred_check_branch
    %15 = sbr.rel (0) target = $region9
  $region8: #{forward.59} parent=0 // pred_region
    _
  $region9: #{forward.59} parent=0 // pred_fallthru
    _
  // Predicated region
  $region10: #{forward.59} parent=0 // pred_check
    _
  $region11: #{forward.59} parent=0 // pred_check_branch
    %17 = sbr.rel (0) target = $region13
  $region12: #{forward.59} parent=0 // pred_region
    _
  $region13: #{forward.59} parent=0 // pred_fallthru
    _
  // Predicated region
  $region14: #{forward.59} parent=0 // pred_check
    _
  $region15: #{forward.59} parent=0 // pred_check_branch
    %19 = sbr.rel (0) target = $region17
  $region16: #{forward.59} parent=0 // pred_region
    _
  $region17: #{forward.59} parent=0 // pred_fallthru
    _
  // Predicated region
  $region18: #{forward.59} parent=0 // pred_check
    _
  $region19: #{forward.59} parent=0 // pred_check_branch
    %21 = sbr.rel (0) target = $region21
  $region20: #{forward.59} parent=0 // pred_region
    _
  $region21: #{forward.59} parent=0 // pred_fallthru
    _
  // Predicated region
  $region22: #{forward.59} parent=0 // pred_check
    _
  $region23: #{forward.59} parent=0 // pred_check_branch
    %23 = sbr.rel (0) target = $region25
  $region24: #{forward.59} parent=0 // pred_region
    _
  $region25: #{forward.59} parent=0 // pred_fallthru
    _
  // Predicated region
  $region26: #{forward.59} parent=0 // pred_check
    _
  $region27: #{forward.59} parent=0 // pred_check_branch
    %25 = sbr.rel (0) target = $region29
  $region28: #{forward.59} parent=0 // pred_region
    _
  $region29: #{forward.59} parent=0 // pred_fallthru
    _
  %v27 = vld [vmem:[%s0] sm:$0xff]
  %v28 = vld [vmem:[%s0 + $0x8] sm:$0xff]
  %v29 = vld [vmem:[%s0 + $0x10] sm:$0xff]
  %v30 = vld [vmem:[%s0 + $0x18] sm:$0xff]
  %v31 = vld [vmem:[%s1] sm:$0x1]
  %v33 = vlaneseq
  %v34 = vshrl.u32 %v33, 7
  %v35 = vsub.s32 0, %v34
  %v36 = vrot.slane %v31, %v35
  %v38 = vmul.f32 %v27, %v36
  %v39 = vmul.f32 %v28, %v36
  %v40 = vmul.f32 %v29, %v36
  %v41 = vmul.f32 %v30, %v36
  %v42 = vld [vmem:[%s2] sm:$0x1]
  %v44 = vlaneseq
  %v45 = vshrl.u32 %v44, 7
  %v46 = vsub.s32 0, %v45
  %v47 = vrot.slane %v42, %v46
  %v49 = vadd.f32 %v38, %v47
  %v50 = vadd.f32 %v39, %v47
  %v51 = vadd.f32 %v40, %v47
  %v52 = vadd.f32 %v41, %v47
  %v53 = vmax.f32 %v49, 0.0
  %v54 = vmax.f32 %v50, 0.0
  %v55 = vmax.f32 %v51, 0.0
  %v56 = vmax.f32 %v52, 0.0
  %v57 = vpack.c.bf16 %v54, %v53
  %v58 = vpack.c.bf16 %v56, %v55
  %v59 = vld [vmem:[%s3] sm:$0xff]
  %v60 = vld [vmem:[%s3 + $0x8] sm:$0xff]
  %v61 = vld [vmem:[%s3 + $0x10] sm:$0xff]
  %v62 = vld [vmem:[%s3 + $0x18] sm:$0xff]
  %v63 = vpack.c.bf16 %v60, %v59
  %v64 = vpack.c.bf16 %v62, %v61
  %v65 = vld [vmem:[%s4] sm:$0x1]
  %v67 = vlaneseq
  %v68 = vshrl.u32 %v67, 7
  %v69 = vsub.s32 0, %v68
  %v70 = vrot.slane %v65, %v69
  %vm72 = vcmask 261120
  %v74 = vsel %vm72, %v57, 0
  %v77 = vsel %vm72, %v58, 0
  %79 = vmatprep.subr.bf16.mxu0 0
  %80 = vmatpush1.bf16.msra.mxu0 %v63
  %81 = vmatprep.subr.bf16.mxu0 0
  %82 = vmatpush1.bf16.msra.mxu0 %v64
  %83 = vmatprep.subr.bf16.mxu0 0
  %84 = vmatpush1.bf16.msra.mxu0 0
  %85 = vmatprep.subr.bf16.mxu0 0
  %86 = vmatpush1.bf16.msra.mxu0 0
  %87 = vmatprep.subr.bf16.mxu0 0
  %88 = vmatpush1.bf16.msra.mxu0 0
  %89 = vmatprep.subr.bf16.mxu0 0
  %90 = vmatpush1.bf16.msra.mxu0 0
  %91 = vmatprep.subr.bf16.mxu0 0
  %92 = vmatpush1.bf16.msra.mxu0 0
  %93 = vmatprep.subr.bf16.mxu0 0
  %94 = vmatpush1.bf16.msra.mxu0 0
  %95 = vmatprep.subr.bf16.mxu0 0
  %96 = vmatpush1.bf16.msra.mxu0 0
  %97 = vmatprep.subr.bf16.mxu0 0
  %98 = vmatpush1.bf16.msra.mxu0 0
  %99 = vmatprep.subr.bf16.mxu0 0
  %100 = vmatpush1.bf16.msra.mxu0 0
  %101 = vmatprep.subr.bf16.mxu0 0
  %102 = vmatpush1.bf16.msra.mxu0 0
  %103 = vmatprep.subr.bf16.mxu0 0
  %104 = vmatpush1.bf16.msra.mxu0 0
  %105 = vmatprep.subr.bf16.mxu0 0
  %106 = vmatpush1.bf16.msra.mxu0 0
  %107 = vmatprep.subr.bf16.mxu0 0
  %108 = vmatpush1.bf16.msra.mxu0 0
  %109 = vmatprep.subr.bf16.mxu0 0
  %110 = vmatpush1.bf16.msra.mxu0 0
  %111 = vmatprep.mubr.bf16.mxu0 0
  %112 = vmatmul.mubr.bf16.gmra.mrb[0].mxu0 %v74
  %v113 = vpop.f32.mrb[0].mxu0
  %v114 = vadd.f32 %v70, %v113
  %v115 = vpop.f32.mrb[0].mxu0
  %v116 = vpop.f32.mrb[0].mxu0
  %v117 = vadd.f32 %v70, %v116
  %v118 = vpop.f32.mrb[0].mxu0
  %119 = vmatprep.mubr.bf16.mxu0 0
  %120 = vmatmul.mubr.bf16.gmra.mrb[0].mxu0 %v77
  %v121 = vpop.f32.mrb[0].mxu0
  %v122 = vadd.f32 %v70, %v121
  %v123 = vpop.f32.mrb[0].mxu0
  %v124 = vpop.f32.mrb[0].mxu0
  %v125 = vadd.f32 %v70, %v124
  %v126 = vpop.f32.mrb[0].mxu0
  %127 = vdwg.mxu0
  %v128 = vld [vmem:[%s5] sm:$0x1]
  %v130 = vlaneseq
  %v131 = vshrl.u32 %v130, 7
  %v132 = vsub.s32 0, %v131
  %v133 = vrot.slane %v128, %v132
  %v135 = vmul.f32 %v114, %v133
  %v136 = vmul.f32 %v117, %v133
  %v137 = vmul.f32 %v122, %v133
  %v138 = vmul.f32 %v125, %v133
  %v139 = vld [vmem:[%s6] sm:$0x1]
  %v141 = vlaneseq
  %v142 = vshrl.u32 %v141, 7
  %v143 = vsub.s32 0, %v142
  %v144 = vrot.slane %v139, %v143
  %v146 = vadd.f32 %v135, %v144
  %v147 = vadd.f32 %v136, %v144
  %v148 = vadd.f32 %v137, %v144
  %v149 = vadd.f32 %v138, %v144
  %v150 = vmax.f32 %v146, 0.0
  %v151 = vmax.f32 %v147, 0.0
  %v152 = vmax.f32 %v148, 0.0
  %v153 = vmax.f32 %v149, 0.0
  %vm154 = vcmask 130048
  %155 = vst.msk [vmem:[%s7] sm:$0xff] %vm154, %v150
  %156 = vst.msk [vmem:[%s7 + $0x8] sm:$0xff] %vm154, %v151
  %157 = vst.msk [vmem:[%s7 + $0x10] sm:$0xff] %vm154, %v152
  %158 = vst.msk [vmem:[%s7 + $0x18] sm:$0xff] %vm154, %v153
  // Predicated region
  $region30: #{forward.59} parent=0 // pred_check
    _
  $region31: #{forward.59} parent=0 // pred_check_branch
    %160 = sbr.rel (0) target = $region33
  $region32: #{forward.59} parent=0 // pred_region
    _
  $region33: #{forward.59} parent=0 // pred_fallthru
    _
  // Predicated region
  $region34: #{forward.59} parent=0 // pred_check
    _
  $region35: #{forward.59} parent=0 // pred_check_branch
    %162 = sbr.rel (0) target = $region37
  $region36: #{forward.59} parent=0 // pred_region
    _
  $region37: #{forward.59} parent=0 // pred_fallthru
    _

// kernel: forward.63
$region0: #{forward.63}
  #allocation0 [shape = 'u32[]', space=smem, size = 0x4, offset = 0x4, fixed_abs, tag = 'smem constant byte address 0x4 - core index']
  #allocation1 [shape = 'u32[144,128]{1,0:T(1,128)}', space=vmem, size = 0x12000, scoped, tag = 'internal scratch']
  %s0 = inlined_call_operand.vmem [shape: f32[32,48], index: 0, kind: input, shape index: {}]
  %s1 = inlined_call_operand.vmem [shape: f32[48,8], index: 1, kind: input, shape index: {}]
  %s2 = inlined_call_operand.vmem [shape: f32[1,8], index: 2, kind: input, shape index: {}]
  %s3 = inlined_call_operand.vmem [shape: f32[32,8], index: 3, kind: output, shape index: {}]
  %s4 = sld [smem:[#allocation0]]
  $region22: #{forward.63} parent=0
    _
  %s6 = ssub.s32 1, %s4
  %s7 = scalar_select 0, %s6, %s4
  // Predicated region
  $region2: #{forward.63} parent=0 // pred_check
    _
  $region3: #{forward.63} parent=0 // pred_check_branch
    %9 = sbr.rel (0) target = $region5
  $region4: #{forward.63} parent=0 // pred_region
    _
  $region5: #{forward.63} parent=0 // pred_fallthru
    _
  // Predicated region
  $region6: #{forward.63} parent=0 // pred_check
    _
  $region7: #{forward.63} parent=0 // pred_check_branch
    %11 = sbr.rel (0) target = $region9
  $region8: #{forward.63} parent=0 // pred_region
    _
  $region9: #{forward.63} parent=0 // pred_fallthru
    _
  // Predicated region
  $region10: #{forward.63} parent=0 // pred_check
    _
  $region11: #{forward.63} parent=0 // pred_check_branch
    %13 = sbr.rel (0) target = $region13
  $region12: #{forward.63} parent=0 // pred_region
    _
  $region13: #{forward.63} parent=0 // pred_fallthru
    _
  %v15 = vld [vmem:[%s0] sm:$0xff]
  %v16 = vld [vmem:[%s0 + $0x8] sm:$0xff]
  %v17 = vld [vmem:[%s0 + $0x10] sm:$0xff]
  %v18 = vld [vmem:[%s0 + $0x18] sm:$0xff]
  %v19 = vpack.c.bf16 %v16, %v15
  %v20 = vpack.c.bf16 %v18, %v17
  %v21 = vld [vmem:[%s1] sm:$0xff]
  %v22 = vld [vmem:[%s1 + $0x8] sm:$0xff]
  %v23 = vld [vmem:[%s1 + $0x10] sm:$0xff]
  %v24 = vld [vmem:[%s1 + $0x18] sm:$0xff]
  %v25 = vld [vmem:[%s1 + $0x20] sm:$0xff]
  %v26 = vld [vmem:[%s1 + $0x28] sm:$0xff]
  %v27 = vpack.c.bf16 %v22, %v21
  %v28 = vpack.c.bf16 %v24, %v23
  %v29 = vpack.c.bf16 %v26, %v25
  %v30 = vld [vmem:[%s2] sm:$0x1]
  %v32 = vlaneseq
  %v33 = vshrl.u32 %v32, 7
  %v34 = vsub.s32 0, %v33
  %v35 = vrot.slane %v30, %v34
  %vm37 = vcmask 392192
  %v39 = vsel %vm37, %v19, 0
  %v42 = vsel %vm37, %v20, 0
  %44 = vmatprep.subr.bf16.mxu0 0
  %45 = vmatpush1.bf16.msra.mxu0 %v27
  %46 = vmatprep.subr.bf16.mxu0 0
  %47 = vmatpush1.bf16.msra.mxu0 %v28
  %48 = vmatprep.subr.bf16.mxu0 0
  %49 = vmatpush1.bf16.msra.mxu0 %v29
  %50 = vmatprep.subr.bf16.mxu0 0
  %51 = vmatpush1.bf16.msra.mxu0 0
  %52 = vmatprep.subr.bf16.mxu0 0
  %53 = vmatpush1.bf16.msra.mxu0 0
  %54 = vmatprep.subr.bf16.mxu0 0
  %55 = vmatpush1.bf16.msra.mxu0 0
  %56 = vmatprep.subr.bf16.mxu0 0
  %57 = vmatpush1.bf16.msra.mxu0 0
  %58 = vmatprep.subr.bf16.mxu0 0
  %59 = vmatpush1.bf16.msra.mxu0 0
  %60 = vmatprep.subr.bf16.mxu0 0
  %61 = vmatpush1.bf16.msra.mxu0 0
  %62 = vmatprep.subr.bf16.mxu0 0
  %63 = vmatpush1.bf16.msra.mxu0 0
  %64 = vmatprep.subr.bf16.mxu0 0
  %65 = vmatpush1.bf16.msra.mxu0 0
  %66 = vmatprep.subr.bf16.mxu0 0
  %67 = vmatpush1.bf16.msra.mxu0 0
  %68 = vmatprep.subr.bf16.mxu0 0
  %69 = vmatpush1.bf16.msra.mxu0 0
  %70 = vmatprep.subr.bf16.mxu0 0
  %71 = vmatpush1.bf16.msra.mxu0 0
  %72 = vmatprep.subr.bf16.mxu0 0
  %73 = vmatpush1.bf16.msra.mxu0 0
  %74 = vmatprep.subr.bf16.mxu0 0
  %75 = vmatpush1.bf16.msra.mxu0 0
  %76 = vmatprep.mubr.bf16.mxu0 0
  %77 = vmatmul.mubr.bf16.gmra.mrb[0].mxu0 %v39
  %v78 = vpop.f32.mrb[0].mxu0
  %v79 = vadd.f32 %v35, %v78
  %v80 = vpop.f32.mrb[0].mxu0
  %v81 = vpop.f32.mrb[0].mxu0
  %v82 = vadd.f32 %v35, %v81
  %v83 = vpop.f32.mrb[0].mxu0
  %84 = vmatprep.mubr.bf16.mxu0 0
  %85 = vmatmul.mubr.bf16.gmra.mrb[0].mxu0 %v42
  %v86 = vpop.f32.mrb[0].mxu0
  %v87 = vadd.f32 %v35, %v86
  %v88 = vpop.f32.mrb[0].mxu0
  %v89 = vpop.f32.mrb[0].mxu0
  %v90 = vadd.f32 %v35, %v89
  %v91 = vpop.f32.mrb[0].mxu0
  %92 = vdwg.mxu0
  %vm93 = vcmask 64512
  %94 = vst.msk [vmem:[%s3] sm:$0xff] %vm93, %v79
  %95 = vst.msk [vmem:[%s3 + $0x8] sm:$0xff] %vm93, %v82
  %96 = vst.msk [vmem:[%s3 + $0x10] sm:$0xff] %vm93, %v87
  %97 = vst.msk [vmem:[%s3 + $0x18] sm:$0xff] %vm93, %v90
  // Predicated region
  $region14: #{forward.63} parent=0 // pred_check
    _
  $region15: #{forward.63} parent=0 // pred_check_branch
    %99 = sbr.rel (0) target = $region17
  $region16: #{forward.63} parent=0 // pred_region
    _
  $region17: #{forward.63} parent=0 // pred_fallthru
    _
  // Predicated region
  $region18: #{forward.63} parent=0 // pred_check
    _
  $region19: #{forward.63} parent=0 // pred_check_branch
    %101 = sbr.rel (0) target = $region21
  $region20: #{forward.63} parent=0 // pred_region
    _
  $region21: #{forward.63} parent=0 // pred_fallthru
    _

// kernel: forward.61
$region0: #{forward.61}
  #allocation0 [shape = 'u32[]', space=smem, size = 0x4, offset = 0x4, fixed_abs, tag = 'smem constant byte address 0x4 - core index']
  #allocation1 [shape = 'u32[144,128]{1,0:T(1,128)}', space=vmem, size = 0x12000, scoped, tag = 'internal scratch']
  %s0 = inlined_call_operand.vmem [shape: f32[32,40], index: 0, kind: input, shape index: {}]
  %s1 = inlined_call_operand.vmem [shape: f32[1,40], index: 1, kind: input, shape index: {}]
  %s2 = inlined_call_operand.vmem [shape: f32[1,40], index: 2, kind: input, shape index: {}]
  %s3 = inlined_call_operand.vmem [shape: f32[40,16], index: 3, kind: input, shape index: {}]
  %s4 = inlined_call_operand.vmem [shape: f32[1,16], index: 4, kind: input, shape index: {}]
  %s5 = inlined_call_operand.vmem [shape: f32[1,16], index: 5, kind: input, shape index: {}]
  %s6 = inlined_call_operand.vmem [shape: f32[1,16], index: 6, kind: input, shape index: {}]
  %s7 = inlined_call_operand.vmem [shape: f32[32,16], index: 7, kind: output, shape index: {}]
  %s8 = sld [smem:[#allocation0]]
  $region38: #{forward.61} parent=0
    _
  %s10 = ssub.s32 1, %s8
  %s11 = scalar_select 0, %s10, %s8
  // Predicated region
  $region2: #{forward.61} parent=0 // pred_check
    _
  $region3: #{forward.61} parent=0 // pred_check_branch
    %13 = sbr.rel (0) target = $region5
  $region4: #{forward.61} parent=0 // pred_region
    _
  $region5: #{forward.61} parent=0 // pred_fallthru
    _
  // Predicated region
  $region6: #{forward.61} parent=0 // pred_check
    _
  $region7: #{forward.61} parent=0 // pred_check_branch
    %15 = sbr.rel (0) target = $region9
  $region8: #{forward.61} parent=0 // pred_region
    _
  $region9: #{forward.61} parent=0 // pred_fallthru
    _
  // Predicated region
  $region10: #{forward.61} parent=0 // pred_check
    _
  $region11: #{forward.61} parent=0 // pred_check_branch
    %17 = sbr.rel (0) target = $region13
  $region12: #{forward.61} parent=0 // pred_region
    _
  $region13: #{forward.61} parent=0 // pred_fallthru
    _
  // Predicated region
  $region14: #{forward.61} parent=0 // pred_check
    _
  $region15: #{forward.61} parent=0 // pred_check_branch
    %19 = sbr.rel (0) target = $region17
  $region16: #{forward.61} parent=0 // pred_region
    _
  $region17: #{forward.61} parent=0 // pred_fallthru
    _
  // Predicated region
  $region18: #{forward.61} parent=0 // pred_check
    _
  $region19: #{forward.61} parent=0 // pred_check_branch
    %21 = sbr.rel (0) target = $region21
  $region20: #{forward.61} parent=0 // pred_region
    _
  $region21: #{forward.61} parent=0 // pred_fallthru
    _
  // Predicated region
  $region22: #{forward.61} parent=0 // pred_check
    _
  $region23: #{forward.61} parent=0 // pred_check_branch
    %23 = sbr.rel (0) target = $region25
  $region24: #{forward.61} parent=0 // pred_region
    _
  $region25: #{forward.61} parent=0 // pred_fallthru
    _
  // Predicated region
  $region26: #{forward.61} parent=0 // pred_check
    _
  $region27: #{forward.61} parent=0 // pred_check_branch
    %25 = sbr.rel (0) target = $region29
  $region28: #{forward.61} parent=0 // pred_region
    _
  $region29: #{forward.61} parent=0 // pred_fallthru
    _
  %v27 = vld [vmem:[%s0] sm:$0xff]
  %v28 = vld [vmem:[%s0 + $0x8] sm:$0xff]
  %v29 = vld [vmem:[%s0 + $0x10] sm:$0xff]
  %v30 = vld [vmem:[%s0 + $0x18] sm:$0xff]
  %v31 = vld [vmem:[%s1] sm:$0x1]
  %v33 = vlaneseq
  %v34 = vshrl.u32 %v33, 7
  %v35 = vsub.s32 0, %v34
  %v36 = vrot.slane %v31, %v35
  %v38 = vmul.f32 %v27, %v36
  %v39 = vmul.f32 %v28, %v36
  %v40 = vmul.f32 %v29, %v36
  %v41 = vmul.f32 %v30, %v36
  %v42 = vld [vmem:[%s2] sm:$0x1]
  %v44 = vlaneseq
  %v45 = vshrl.u32 %v44, 7
  %v46 = vsub.s32 0, %v45
  %v47 = vrot.slane %v42, %v46
  %v49 = vadd.f32 %v38, %v47
  %v50 = vadd.f32 %v39, %v47
  %v51 = vadd.f32 %v40, %v47
  %v52 = vadd.f32 %v41, %v47
  %v53 = vmax.f32 %v49, 0.0
  %v54 = vmax.f32 %v50, 0.0
  %v55 = vmax.f32 %v51, 0.0
  %v56 = vmax.f32 %v52, 0.0
  %v57 = vpack.c.bf16 %v54, %v53
  %v58 = vpack.c.bf16 %v56, %v55
  %v59 = vld [vmem:[%s3] sm:$0xff]
  %v60 = vld [vmem:[%s3 + $0x8] sm:$0xff]
  %v61 = vld [vmem:[%s3 + $0x10] sm:$0xff]
  %v62 = vld [vmem:[%s3 + $0x18] sm:$0xff]
  %v63 = vld [vmem:[%s3 + $0x20] sm:$0xff]
  %v64 = vpack.c.bf16 %v60, %v59
  %v65 = vpack.c.bf16 %v62, %v61
  %v66 = vpack.c.bf16 %v63, %v63
  %v67 = vld [vmem:[%s4] sm:$0x1]
  %v69 = vlaneseq
  %v70 = vshrl.u32 %v69, 7
  %v71 = vsub.s32 0, %v70
  %v72 = vrot.slane %v67, %v71
  %vm74 = vcmask 326656
  %v76 = vsel %vm74, %v57, 0
  %v79 = vsel %vm74, %v58, 0
  %vm81 = vcmask 1043456
  %v83 = vsel %vm81, %v66, 0
  %85 = vmatprep.subr.bf16.mxu0 0
  %86 = vmatpush1.bf16.msra.mxu0 %v64
  %87 = vmatprep.subr.bf16.mxu0 0
  %88 = vmatpush1.bf16.msra.mxu0 %v65
  %89 = vmatprep.subr.bf16.mxu0 0
  %90 = vmatpush1.bf16.msra.mxu0 %v83
  %91 = vmatprep.subr.bf16.mxu0 0
  %92 = vmatpush1.bf16.msra.mxu0 0
  %93 = vmatprep.subr.bf16.mxu0 0
  %94 = vmatpush1.bf16.msra.mxu0 0
  %95 = vmatprep.subr.bf16.mxu0 0
  %96 = vmatpush1.bf16.msra.mxu0 0
  %97 = vmatprep.subr.bf16.mxu0 0
  %98 = vmatpush1.bf16.msra.mxu0 0
  %99 = vmatprep.subr.bf16.mxu0 0
  %100 = vmatpush1.bf16.msra.mxu0 0
  %101 = vmatprep.subr.bf16.mxu0 0
  %102 = vmatpush1.bf16.msra.mxu0 0
  %103 = vmatprep.subr.bf16.mxu0 0
  %104 = vmatpush1.bf16.msra.mxu0 0
  %105 = vmatprep.subr.bf16.mxu0 0
  %106 = vmatpush1.bf16.msra.mxu0 0
  %107 = vmatprep.subr.bf16.mxu0 0
  %108 = vmatpush1.bf16.msra.mxu0 0
  %109 = vmatprep.subr.bf16.mxu0 0
  %110 = vmatpush1.bf16.msra.mxu0 0
  %111 = vmatprep.subr.bf16.mxu0 0
  %112 = vmatpush1.bf16.msra.mxu0 0
  %113 = vmatprep.subr.bf16.mxu0 0
  %114 = vmatpush1.bf16.msra.mxu0 0
  %115 = vmatprep.subr.bf16.mxu0 0
  %116 = vmatpush1.bf16.msra.mxu0 0
  %117 = vmatprep.mubr.bf16.mxu0 0
  %118 = vmatmul.mubr.bf16.gmra.mrb[0].mxu0 %v76
  %v119 = vpop.f32.mrb[0].mxu0
  %v120 = vadd.f32 %v72, %v119
  %v121 = vpop.f32.mrb[0].mxu0
  %v122 = vpop.f32.mrb[0].mxu0
  %v123 = vadd.f32 %v72, %v122
  %v124 = vpop.f32.mrb[0].mxu0
  %125 = vmatprep.mubr.bf16.mxu0 0
  %126 = vmatmul.mubr.bf16.gmra.mrb[0].mxu0 %v79
  %v127 = vpop.f32.mrb[0].mxu0
  %v128 = vadd.f32 %v72, %v127
  %v129 = vpop.f32.mrb[0].mxu0
  %v130 = vpop.f32.mrb[0].mxu0
  %v131 = vadd.f32 %v72, %v130
  %v132 = vpop.f32.mrb[0].mxu0
  %133 = vdwg.mxu0
  %v134 = vld [vmem:[%s5] sm:$0x1]
  %v136 = vlaneseq
  %v137 = vshrl.u32 %v136, 7
  %v138 = vsub.s32 0, %v137
  %v139 = vrot.slane %v134, %v138
  %v141 = vmul.f32 %v120, %v139
  %v142 = vmul.f32 %v123, %v139
  %v143 = vmul.f32 %v128, %v139
  %v144 = vmul.f32 %v131, %v139
  %v145 = vld [vmem:[%s6] sm:$0x1]
  %v147 = vlaneseq
  %v148 = vshrl.u32 %v147, 7
  %v149 = vsub.s32 0, %v148
  %v150 = vrot.slane %v145, %v149
  %v152 = vadd.f32 %v141, %v150
  %v153 = vadd.f32 %v142, %v150
  %v154 = vadd.f32 %v143, %v150
  %v155 = vadd.f32 %v144, %v150
  %v156 = vmax.f32 %v152, 0.0
  %v157 = vmax.f32 %v153, 0.0
  %v158 = vmax.f32 %v154, 0.0
  %v159 = vmax.f32 %v155, 0.0
  %vm160 = vcmask 130048
  %161 = vst.msk [vmem:[%s7] sm:$0xff] %vm160, %v156
  %162 = vst.msk [vmem:[%s7 + $0x8] sm:$0xff] %vm160, %v157
  %163 = vst.msk [vmem:[%s7 + $0x10] sm:$0xff] %vm160, %v158
  %164 = vst.msk [vmem:[%s7 + $0x18] sm:$0xff] %vm160, %v159
  // Predicated region
  $region30: #{forward.61} parent=0 // pred_check
    _
  $region31: #{forward.61} parent=0 // pred_check_branch
    %166 = sbr.rel (0) target = $region33
  $region32: #{forward.61} parent=0 // pred_region
    _
  $region33: #{forward.61} parent=0 // pred_fallthru
    _
  // Predicated region
  $region34: #{forward.61} parent=0 // pred_check
    _
  $region35: #{forward.61} parent=0 // pred_check_branch
    %168 = sbr.rel (0) target = $region37
  $region36: #{forward.61} parent=0 // pred_region
    _
  $region37: #{forward.61} parent=0 // pred_fallthru
    _

</llo_original>
